<compile_context>
chip_gen: v7x
topology: tpu7x:2x2x1
jax: 0.10.0
libtpu: 0.0.40
codegen_flags: <defaults>
</compile_context>

<pallas_src>
import functools

import jax
import jax.numpy as jnp
from jax import lax
from jax.experimental import pallas as pl
from jax.experimental.pallas import tpu as pltpu

BN_EPS = 1e-5


def _round_up(a, b):
    return (a + b - 1) // b * b


def _conv_stats_kernel(x_ref, w_ref, mask_ref, y_ref, sum_ref, sumsq_ref,
                       lhs_ref, *, kh, kw, wp, cin_p, c_out, taps_per_chunk):
    """Conv as packed deep-K MXU matmul(s) + masked per-image BN partial sums.

    x_ref    : (HWP_PAD, CIN_P)        one image, spatially padded, row-flattened
    w_ref    : (KH*KW*CIN_P, CPAD)     resident weights, tap-major contraction axis
    mask_ref : (RV_PAD, 1)             1.0 at rows that are real conv outputs
    y_ref    : (RV_PAD, C_OUT)         un-normalized conv output ("virtual" width Wp)
    sum_ref, sumsq_ref : (1, 1, CPAD)  per-image partial BN statistics (f32)
    lhs_ref  : (RV_PAD, LHS_K)         VMEM scratch holding one packed-K chunk
    """
    rv = y_ref.shape[0]
    taps = kh * kw
    acc = None
    for t0 in range(0, taps, taps_per_chunk):
        t1 = min(t0 + taps_per_chunk, taps)
        # Pack this chunk's taps side-by-side along the contraction axis.
        for t in range(t0, t1):
            ki, kj = divmod(t, kw)
            off = ki * wp + kj
            lhs_ref[:, (t - t0) * cin_p:(t - t0 + 1) * cin_p] = \
                x_ref[off:off + rv, :]
        kk = (t1 - t0) * cin_p
        contrib = jnp.dot(lhs_ref[:, :kk], w_ref[t0 * cin_p:t1 * cin_p, :],
                          preferred_element_type=jnp.float32)
        acc = contrib if acc is None else acc + contrib

    # BN partial statistics from the f32 accumulator (before any downcast).
    m = mask_ref[...]                       # (RV_PAD, 1)
    am = acc * m
    sum_ref[0] = jnp.sum(am, axis=0, keepdims=True)
    sumsq_ref[0] = jnp.sum(acc * am, axis=0, keepdims=True)

    # Single store of the conv output, real channels only.
    y_ref[...] = acc[:, :c_out].astype(y_ref.dtype)


@functools.partial(jax.jit, static_argnames=("stride", "padding", "compute_dtype"))
def conv_block_forward(x, weight, gamma, beta, *, stride=1, padding=0,
                       compute_dtype=jnp.bfloat16):
    """x: (N, C_in, H, W) NCHW; weight: (C_out, C_in, KH, KW) OIHW.
    Returns (N, C_out, Ho, Wo) NCHW matching the PyTorch ConvBlock forward
    (BatchNorm2d in training mode, i.e. batch statistics)."""
    n, c_in, h, w = x.shape
    c_out, c_in_w, kh, kw = weight.shape
    assert c_in == c_in_w

    hp, wp = h + 2 * padding, w + 2 * padding
    ho1, wo1 = hp - kh + 1, wp - kw + 1            # stride-1 output extents
    assert ho1 >= 1 and wo1 >= 1
    ho = (hp - kh) // stride + 1
    wo = (wp - kw) // stride + 1

    cin_p = _round_up(c_in, 8)                     # sublane-aligned contraction slice
    cpad = _round_up(c_out, 128)                   # lane width inside the kernel only
    rv = ho1 * wp                                  # "virtual" output rows per image
    rv_pad = _round_up(rv, 16)
    max_off = (kh - 1) * wp + (kw - 1)
    hwp_pad = _round_up(max(hp * wp, max_off + rv_pad), 16)
    taps = kh * kw
    taps_per_chunk = max(1, min(taps, 256 // cin_p))   # keep K per matmul <= 256
    lhs_k = taps_per_chunk * cin_p

    # ---- host-side layout prep (cheap pads/reshapes; no HBM im2col) ----------
    x_nhwc = jnp.transpose(x, (0, 2, 3, 1))                              # (N,H,W,Cin)
    x_sp = jnp.pad(x_nhwc, ((0, 0), (padding, padding), (padding, padding),
                            (0, cin_p - c_in)))
    x_flat = x_sp.reshape(n, hp * wp, cin_p)
    x_flat = jnp.pad(x_flat, ((0, 0), (0, hwp_pad - hp * wp), (0, 0)))
    x2d = x_flat.reshape(n * hwp_pad, cin_p).astype(compute_dtype)

    w4 = jnp.transpose(weight, (2, 3, 1, 0))                             # (KH,KW,Cin,Cout)
    w4 = jnp.pad(w4, ((0, 0), (0, 0), (0, cin_p - c_in), (0, cpad - c_out)))
    w2 = w4.reshape(taps * cin_p, cpad).astype(compute_dtype)

    oh_ok = (jnp.arange(ho1) % stride == 0) & (jnp.arange(ho1) <= (ho - 1) * stride)
    ow_ok = (jnp.arange(wp) % stride == 0) & (jnp.arange(wp) <= (wo - 1) * stride)
    mask = (oh_ok[:, None] & ow_ok[None, :]).astype(jnp.float32).reshape(rv, 1)
    mask = jnp.pad(mask, ((0, rv_pad - rv), (0, 0)))

    # ---- single Pallas pass: conv (packed deep-K matmul) + BN partial stats --
    cdt = jnp.dtype(compute_dtype)
    flops1 = 2 * n * rv_pad * (taps * cin_p) * cpad
    bytes1 = (x2d.size * cdt.itemsize + w2.size * cdt.itemsize + mask.size * 4
              + n * rv_pad * c_out * cdt.itemsize + 2 * n * cpad * 4)
    y2d, psum, psq = pl.pallas_call(
        functools.partial(_conv_stats_kernel, kh=kh, kw=kw, wp=wp, cin_p=cin_p,
                          c_out=c_out, taps_per_chunk=taps_per_chunk),
        out_shape=(
            jax.ShapeDtypeStruct((n * rv_pad, c_out), compute_dtype),
            jax.ShapeDtypeStruct((n, 1, cpad), jnp.float32),
            jax.ShapeDtypeStruct((n, 1, cpad), jnp.float32),
        ),
        grid=(n,),
        in_specs=[
            pl.BlockSpec((hwp_pad, cin_p), lambda i: (i, 0)),
            pl.BlockSpec((taps * cin_p, cpad), lambda i: (0, 0)),    # resident
            pl.BlockSpec((rv_pad, 1), lambda i: (0, 0)),             # resident
        ],
        out_specs=(
            pl.BlockSpec((rv_pad, c_out), lambda i: (i, 0)),
            pl.BlockSpec((1, 1, cpad), lambda i: (i, 0, 0)),
            pl.BlockSpec((1, 1, cpad), lambda i: (i, 0, 0)),
        ),
        scratch_shapes=[pltpu.VMEM((rv_pad, lhs_k), compute_dtype)],
        compiler_params=pltpu.CompilerParams(
            dimension_semantics=("parallel",),
            # Tiny working set; 32 MiB also stays under v7x's 64 MiB physical VMEM.
            vmem_limit_bytes=32 * 1024 * 1024),
        cost_estimate=pl.CostEstimate(flops=flops1, transcendentals=0,
                                      bytes_accessed=bytes1),
    )(x2d, w2, mask)

    # ---- tiny per-channel BN finalize in XLA (folds gamma/beta once) ---------
    count = n * ho * wo
    psum_c = jnp.sum(psum, axis=0)[0, :c_out]
    psq_c = jnp.sum(psq, axis=0)[0, :c_out]
    mean = psum_c / count
    var = jnp.maximum(psq_c / count - mean * mean, 0.0)     # guard cancellation
    inv_std = lax.rsqrt(var + BN_EPS)
    scale = gamma.astype(jnp.float32) * inv_std             # (C_out,)
    shift = beta.astype(jnp.float32) - mean * scale

    # ---- fused XLA epilogue: slice valid rows/cols, BN affine, ReLU, NCHW ----
    y = y2d.reshape(n, rv_pad, c_out)[:, :rv, :].reshape(n, ho1, wp, c_out)
    y = y[:, 0:(ho - 1) * stride + 1:stride,
          0:(wo - 1) * stride + 1:stride, :]
    out = jnp.maximum(y.astype(jnp.float32) * scale + shift, 0.0)
    out = jnp.transpose(out, (0, 3, 1, 2))
    return out.astype(x.dtype)


def _reference(x, weight, gamma, beta, stride, padding):
    y = lax.conv_general_dilated(
        x.astype(jnp.float32), weight.astype(jnp.float32),
        window_strides=(stride, stride),
        padding=[(padding, padding), (padding, padding)],
        dimension_numbers=("NCHW", "OIHW", "NCHW"),
        precision=lax.Precision.HIGHEST)
    mean = jnp.mean(y, axis=(0, 2, 3), keepdims=True)
    var = jnp.mean((y - mean) ** 2, axis=(0, 2, 3), keepdims=True)
    y = (y - mean) * lax.rsqrt(var + BN_EPS)
    y = y * gamma.reshape(1, -1, 1, 1) + beta.reshape(1, -1, 1, 1)
    return jnp.maximum(y, 0.0)


if __name__ == "__main__":
    # ConvBlock(in_dim=4, out_dim=8, kernel_size=3, stride=1, padding=1) on
    # x of shape (2, 4, 16, 16).
    key = jax.random.PRNGKey(0)
    kx, kw_ = jax.random.split(key)

    N, C_IN, H, W = 2, 4, 16, 16
    C_OUT, K, STRIDE, PAD = 8, 3, 1, 1

    x = jax.random.normal(kx, (N, C_IN, H, W), dtype=jnp.float32)
    weight = 0.1 * jax.random.normal(kw_, (C_OUT, C_IN, K, K), dtype=jnp.float32)
    gamma = jnp.linspace(0.5, 1.5, C_OUT, dtype=jnp.float32)
    beta = jnp.linspace(-0.2, 0.2, C_OUT, dtype=jnp.float32)

    ref = _reference(x, weight, gamma, beta, STRIDE, PAD)

    # Default path: bf16 operands / bf16 intermediate, f32 MXU accumulation.
    out_bf16 = conv_block_forward(x, weight, gamma, beta, stride=STRIDE, padding=PAD)
    out_bf16 = jax.block_until_ready(out_bf16)
    assert out_bf16.shape == (N, C_OUT, H, W)
    assert jnp.allclose(out_bf16, ref, atol=5e-2, rtol=5e-2)   # bf16 path, loose check

    # f32 path for a tight numerical check against the f32 reference.
    out_f32 = conv_block_forward(x, weight, gamma, beta, stride=STRIDE, padding=PAD,
                                 compute_dtype=jnp.float32)
    out_f32 = jax.block_until_ready(out_f32)
    assert out_f32.shape == (N, C_OUT, H, W)
    assert jnp.allclose(out_f32, ref, atol=1e-3, rtol=1e-3)

    print("KERNEL_OK")
</pallas_src>

<mosaic_0001>
module attributes {stable_mosaic.version = 11 : i64} {
  func.func @_conv_stats_kernel(%arg0: i32, %arg1: memref<336x8xbf16, #tpu.memory_space<vmem>>, %arg2: memref<72x128xbf16, #tpu.memory_space<vmem>>, %arg3: memref<288x1xf32, #tpu.memory_space<vmem>>, %arg4: memref<288x8xbf16, #tpu.memory_space<vmem>>, %arg5: memref<1x1x128xf32, #tpu.memory_space<vmem>>, %arg6: memref<1x1x128xf32, #tpu.memory_space<vmem>>, %arg7: memref<288x72xbf16, #tpu.memory_space<vmem>>) attributes {dimension_semantics = [#tpu.dimension_semantics<parallel>], iteration_bounds = array<i64: 2>, scalar_prefetch = 0 : i64, scratch_operands = 1 : i64, tpu.core_type = #tpu.core_type<tc>, window_params = [{transform_indices = @transform_0, window_bounds = array<i64: 336, 8>}, {pipeline_mode = #tpu.pipeline_mode<synchronous>, transform_indices = @transform_1, window_bounds = array<i64: 72, 128>}, {pipeline_mode = #tpu.pipeline_mode<synchronous>, transform_indices = @transform_2, window_bounds = array<i64: 288, 1>}, {transform_indices = @transform_3, window_bounds = array<i64: 288, 8>}, {transform_indices = @transform_4, window_bounds = array<i64: 1, 1, 128>}, {transform_indices = @transform_5, window_bounds = array<i64: 1, 1, 128>}]} {
    %c0 = arith.constant 0 : index
    %c0_0 = arith.constant 0 : index
    %0 = vector.load %arg1[%c0, %c0_0] : memref<336x8xbf16, #tpu.memory_space<vmem>>, vector<288x8xbf16>
    %c0_1 = arith.constant 0 : index
    %c0_2 = arith.constant 0 : index
    %1 = vector.load %arg7[%c0_1, %c0_2] : memref<288x72xbf16, #tpu.memory_space<vmem>>, vector<288x8xbf16>
    tpu.vector_store %arg7[%c0_1, %c0_2], %0 {strides = array<i32>} : memref<288x72xbf16, #tpu.memory_space<vmem>>, vector<288x8xbf16>,
    %c1 = arith.constant 1 : index
    %c0_3 = arith.constant 0 : index
    %2 = vector.load %arg1[%c1, %c0_3] : memref<336x8xbf16, #tpu.memory_space<vmem>>, vector<288x8xbf16>
    %c0_4 = arith.constant 0 : index
    %c8 = arith.constant 8 : index
    %3 = vector.load %arg7[%c0_4, %c8] : memref<288x72xbf16, #tpu.memory_space<vmem>>, vector<288x8xbf16>
    tpu.vector_store %arg7[%c0_4, %c8], %2 {strides = array<i32>} : memref<288x72xbf16, #tpu.memory_space<vmem>>, vector<288x8xbf16>,
    %c2 = arith.constant 2 : index
    %c0_5 = arith.constant 0 : index
    %4 = vector.load %arg1[%c2, %c0_5] : memref<336x8xbf16, #tpu.memory_space<vmem>>, vector<288x8xbf16>
    %c0_6 = arith.constant 0 : index
    %c16 = arith.constant 16 : index
    %5 = vector.load %arg7[%c0_6, %c16] : memref<288x72xbf16, #tpu.memory_space<vmem>>, vector<288x8xbf16>
    tpu.vector_store %arg7[%c0_6, %c16], %4 {strides = array<i32>} : memref<288x72xbf16, #tpu.memory_space<vmem>>, vector<288x8xbf16>,
    %c18 = arith.constant 18 : index
    %c0_7 = arith.constant 0 : index
    %6 = vector.load %arg1[%c18, %c0_7] : memref<336x8xbf16, #tpu.memory_space<vmem>>, vector<288x8xbf16>
    %c0_8 = arith.constant 0 : index
    %c24 = arith.constant 24 : index
    %7 = vector.load %arg7[%c0_8, %c24] : memref<288x72xbf16, #tpu.memory_space<vmem>>, vector<288x8xbf16>
    tpu.vector_store %arg7[%c0_8, %c24], %6 {strides = array<i32>} : memref<288x72xbf16, #tpu.memory_space<vmem>>, vector<288x8xbf16>,
    %c19 = arith.constant 19 : index
    %c0_9 = arith.constant 0 : index
    %8 = vector.load %arg1[%c19, %c0_9] : memref<336x8xbf16, #tpu.memory_space<vmem>>, vector<288x8xbf16>
    %c0_10 = arith.constant 0 : index
    %c32 = arith.constant 32 : index
    %9 = vector.load %arg7[%c0_10, %c32] : memref<288x72xbf16, #tpu.memory_space<vmem>>, vector<288x8xbf16>
    tpu.vector_store %arg7[%c0_10, %c32], %8 {strides = array<i32>} : memref<288x72xbf16, #tpu.memory_space<vmem>>, vector<288x8xbf16>,
    %c20 = arith.constant 20 : index
    %c0_11 = arith.constant 0 : index
    %10 = vector.load %arg1[%c20, %c0_11] : memref<336x8xbf16, #tpu.memory_space<vmem>>, vector<288x8xbf16>
    %c0_12 = arith.constant 0 : index
    %c40 = arith.constant 40 : index
    %11 = vector.load %arg7[%c0_12, %c40] : memref<288x72xbf16, #tpu.memory_space<vmem>>, vector<288x8xbf16>
    tpu.vector_store %arg7[%c0_12, %c40], %10 {strides = array<i32>} : memref<288x72xbf16, #tpu.memory_space<vmem>>, vector<288x8xbf16>,
    %c36 = arith.constant 36 : index
    %c0_13 = arith.constant 0 : index
    %12 = vector.load %arg1[%c36, %c0_13] : memref<336x8xbf16, #tpu.memory_space<vmem>>, vector<288x8xbf16>
    %c0_14 = arith.constant 0 : index
    %c48 = arith.constant 48 : index
    %13 = vector.load %arg7[%c0_14, %c48] : memref<288x72xbf16, #tpu.memory_space<vmem>>, vector<288x8xbf16>
    tpu.vector_store %arg7[%c0_14, %c48], %12 {strides = array<i32>} : memref<288x72xbf16, #tpu.memory_space<vmem>>, vector<288x8xbf16>,
    %c37 = arith.constant 37 : index
    %c0_15 = arith.constant 0 : index
    %14 = vector.load %arg1[%c37, %c0_15] : memref<336x8xbf16, #tpu.memory_space<vmem>>, vector<288x8xbf16>
    %c0_16 = arith.constant 0 : index
    %c56 = arith.constant 56 : index
    %15 = vector.load %arg7[%c0_16, %c56] : memref<288x72xbf16, #tpu.memory_space<vmem>>, vector<288x8xbf16>
    tpu.vector_store %arg7[%c0_16, %c56], %14 {strides = array<i32>} : memref<288x72xbf16, #tpu.memory_space<vmem>>, vector<288x8xbf16>,
    %c38 = arith.constant 38 : index
    %c0_17 = arith.constant 0 : index
    %16 = vector.load %arg1[%c38, %c0_17] : memref<336x8xbf16, #tpu.memory_space<vmem>>, vector<288x8xbf16>
    %c0_18 = arith.constant 0 : index
    %c64 = arith.constant 64 : index
    %17 = vector.load %arg7[%c0_18, %c64] : memref<288x72xbf16, #tpu.memory_space<vmem>>, vector<288x8xbf16>
    tpu.vector_store %arg7[%c0_18, %c64], %16 {strides = array<i32>} : memref<288x72xbf16, #tpu.memory_space<vmem>>, vector<288x8xbf16>,
    %c0_19 = arith.constant 0 : index
    %c0_20 = arith.constant 0 : index
    %18 = vector.load %arg7[%c0_19, %c0_20] : memref<288x72xbf16, #tpu.memory_space<vmem>>, vector<288x72xbf16>
    %c0_21 = arith.constant 0 : index
    %c0_22 = arith.constant 0 : index
    %19 = vector.load %arg2[%c0_21, %c0_22] : memref<72x128xbf16, #tpu.memory_space<vmem>>, vector<72x128xbf16>
    %cst = arith.constant dense<0.000000e+00> : vector<288x128xf32>
    %20 = tpu.matmul %18, %19, %cst {dimension_numbers = #tpu.dot_dimension_numbers<[1], [0], [0], [1], [0, 0, 1, 1], [], []>} : vector<288x72xbf16>, vector<72x128xbf16>, vector<288x128xf32> -> vector<288x128xf32>
    %c0_23 = arith.constant 0 : index
    %c0_24 = arith.constant 0 : index
    %21 = vector.load %arg3[%c0_23, %c0_24] : memref<288x1xf32, #tpu.memory_space<vmem>>, vector<288x1xf32>
    %22 = vector.broadcast %21 : vector<288x1xf32> to vector<288x128xf32>
    %23 = arith.mulf %20, %22 : vector<288x128xf32>
    %cst_25 = arith.constant dense<0.000000e+00> : vector<128xf32>
    %24 = vector.multi_reduction <add>, %23, %cst_25 [0] : vector<288x128xf32> to vector<128xf32>
    %25 = vector.shape_cast %24 : vector<128xf32> to vector<1x128xf32>
    %c0_26 = arith.constant 0 : index
    %c0_27 = arith.constant 0 : index
    %c0_28 = arith.constant 0 : index
    %26 = vector.load %arg5[%c0_26, %c0_27, %c0_28] : memref<1x1x128xf32, #tpu.memory_space<vmem>>, vector<1x1x128xf32>
    %27 = vector.shape_cast %26 : vector<1x1x128xf32> to vector<1x128xf32>
    %28 = vector.shape_cast %25 : vector<1x128xf32> to vector<1x1x128xf32>
    tpu.vector_store %arg5[%c0_26, %c0_27, %c0_28], %28 {strides = array<i32>} : memref<1x1x128xf32, #tpu.memory_space<vmem>>, vector<1x1x128xf32>,
    %29 = arith.mulf %20, %23 : vector<288x128xf32>
    %cst_29 = arith.constant dense<0.000000e+00> : vector<128xf32>
    %30 = vector.multi_reduction <add>, %29, %cst_29 [0] : vector<288x128xf32> to vector<128xf32>
    %31 = vector.shape_cast %30 : vector<128xf32> to vector<1x128xf32>
    %c0_30 = arith.constant 0 : index
    %c0_31 = arith.constant 0 : index
    %c0_32 = arith.constant 0 : index
    %32 = vector.load %arg6[%c0_30, %c0_31, %c0_32] : memref<1x1x128xf32, #tpu.memory_space<vmem>>, vector<1x1x128xf32>
    %33 = vector.shape_cast %32 : vector<1x1x128xf32> to vector<1x128xf32>
    %34 = vector.shape_cast %31 : vector<1x128xf32> to vector<1x1x128xf32>
    tpu.vector_store %arg6[%c0_30, %c0_31, %c0_32], %34 {strides = array<i32>} : memref<1x1x128xf32, #tpu.memory_space<vmem>>, vector<1x1x128xf32>,
    %35 = vector.extract_strided_slice %20 {offsets = [0, 0], sizes = [288, 8], strides = [1, 1]} : vector<288x128xf32> to vector<288x8xf32>
    %36 = arith.truncf %35 : vector<288x8xf32> to vector<288x8xbf16>
    %c0_33 = arith.constant 0 : index
    %c0_34 = arith.constant 0 : index
    %37 = vector.load %arg4[%c0_33, %c0_34] : memref<288x8xbf16, #tpu.memory_space<vmem>>, vector<288x8xbf16>
    tpu.vector_store %arg4[%c0_33, %c0_34], %36 {strides = array<i32>} : memref<288x8xbf16, #tpu.memory_space<vmem>>, vector<288x8xbf16>,
    return
  }
  func.func @transform_0(%arg0: i32) -> (i32, i32) {
    %c0_i32 = arith.constant 0 : i32
    %c0_i32_0 = arith.constant 0 : i32
    return %arg0, %c0_i32 : i32, i32
  }
  func.func @transform_1(%arg0: i32) -> (i32, i32) {
    %c0_i32 = arith.constant 0 : i32
    %c0_i32_0 = arith.constant 0 : i32
    %c0_i32_1 = arith.constant 0 : i32
    return %c0_i32, %c0_i32_0 : i32, i32
  }
  func.func @transform_2(%arg0: i32) -> (i32, i32) {
    %c0_i32 = arith.constant 0 : i32
    %c0_i32_0 = arith.constant 0 : i32
    %c0_i32_1 = arith.constant 0 : i32
    return %c0_i32, %c0_i32_0 : i32, i32
  }
  func.func @transform_3(%arg0: i32) -> (i32, i32) {
    %c0_i32 = arith.constant 0 : i32
    %c0_i32_0 = arith.constant 0 : i32
    return %arg0, %c0_i32 : i32, i32
  }
  func.func @transform_4(%arg0: i32) -> (i32, i32, i32) {
    %c0_i32 = arith.constant 0 : i32
    %c0_i32_0 = arith.constant 0 : i32
    %c0_i32_1 = arith.constant 0 : i32
    return %arg0, %c0_i32, %c0_i32_0 : i32, i32, i32
  }
  func.func @transform_5(%arg0: i32) -> (i32, i32, i32) {
    %c0_i32 = arith.constant 0 : i32
    %c0_i32_0 = arith.constant 0 : i32
    %c0_i32_1 = arith.constant 0 : i32
    return %arg0, %c0_i32, %c0_i32_0 : i32, i32, i32
  }
}

</mosaic_0001>

<llo_original>
// kernel: conv_block_forward.1
$region0: #{conv_block_forward.1}
  #allocation0 [shape = 'u32[]', space=smem, size = 0x4, offset = 0x4, fixed_abs, tag = 'smem constant byte address 0x4 - core index']
  #allocation1 [shape = 'u32[144,128]{1,0:T(1,128)}', space=vmem, size = 0x12000, scoped, tag = 'internal scratch']
  #allocation2 [shape = 'bf16[288,72]{1,0:T(16,128)(2,1)}', space=vmem, size = 0x12000, scoped, tag = 'scratch operand']
  %s0 = inlined_call_operand.vmem [shape: bf16[672,8], index: 0, kind: input, shape index: {}]
  %s1 = inlined_call_operand.vmem [shape: bf16[72,128], index: 1, kind: input, shape index: {}]
  %s2 = inlined_call_operand.vmem [shape: f32[288,1], index: 2, kind: input, shape index: {}]
  %s3 = inlined_call_operand.vmem [shape: bf16[576,8], index: 3, kind: output, shape index: {0}]
  %s4 = inlined_call_operand.vmem [shape: f32[2,1,128], index: 4, kind: output, shape index: {1}]
  %s5 = inlined_call_operand.vmem [shape: f32[2,1,128], index: 5, kind: output, shape index: {2}]
  %6 = xla_tuple %s3, %s4, %s5
  %s7 = sld [smem:[#allocation0]]
  $region61: #{conv_block_forward.1} parent=0
    _
  %s9 = ssub.s32 1, %s7
  %s10 = scalar_select 0, %s9, %s7
  loop: start=0, step=1, limit=4
  $region2: #{conv_block_forward.1} parent=0 // loop_pre_header
    _
  $region3: #{conv_block_forward.1} parent=0 // loop_header
    %s12 = sphi 0, %s16
    %p13 = scmp.ge.s32.totalorder %s12, 4
    %s22 = sphi 0, %s24
    %s25 = sphi 0, %s22
    %s26 = sphi 0, %s25
    %s42 = sphi 0, %s26
    %s46 = sphi 0, %s46
    %s48 = sphi 0, %s46
    %s49 = sphi 0, %s48
    %s63 = sphi 0, %s49
    %s67 = sphi 0, %s67
    %s69 = sphi 0, %s67
    %s70 = sphi 0, %s69
    %s84 = sphi 0, %s70
    %s90 = sphi 0, %s92
    %s93 = sphi 0, %s90
    %s94 = sphi 0, %s93
    %s110 = sphi 0, %s94
    %s116 = sphi 0, %s118
    %s119 = sphi 0, %s116
    %s120 = sphi 0, %s119
    %s136 = sphi 0, %s120
    %s142 = sphi 0, %s144
    %s145 = sphi 0, %s142
    %s146 = sphi 0, %s145
    %s162 = sphi 0, %s146
  $region4: #{conv_block_forward.1} parent=0 // loop_header_branch
    %15 = sbr.rel (%p13) target = $region8
  $region5: #{conv_block_forward.1} parent=0 // loop_body
    %s17 = ssub.s32 %s12, 1
    %s18 = ssub.s32 %s12, 2
    %s19 = sadd.s32 %s12, 1
    %s20 = ssub.s32 %s12, %s19
    %p21 = scmp.eq.s32.totalorder %s20, 0
    %s23 = sadd.s32 %s22, 1
    %s24 = scalar_select %p21, %s22, %s23
    %p27 = pneg %p21
    %p28 = scmp.eq.s32.totalorder %s12, 1
    %p29 = por %p27, %p28
    %p30 = scmp.ne.s32.totalorder %s22, %s25
    %p31 = scmp.eq.s32.totalorder %s12, 0
    %p32 = por %p30, %p31
    %p33 = scmp.ne.s32.totalorder %s22, %s25
    %p34 = scmp.eq.s32.totalorder %s17, 1
    %p35 = por %p33, %p34
    %p36 = scmp.ne.s32.totalorder %s25, %s26
    %p37 = scmp.eq.s32.totalorder %s17, 0
    %p38 = por %p36, %p37
    %p39 = scmp.ne.s32.totalorder %s25, %s26
    %p40 = scmp.eq.s32.totalorder %s18, 1
    %p41 = por %p39, %p40
    %p43 = scmp.ne.s32.totalorder %s26, %s42
    %p44 = scmp.eq.s32.totalorder %s18, 0
    %p45 = por %p43, %p44
    %s47 = sadd.s32 %s46, 1
    %p50 = scmp.eq.s32.totalorder %s12, 1
    %p51 = scmp.ne.s32.totalorder %s46, %s48
    %p52 = scmp.eq.s32.totalorder %s12, 0
    %p53 = por %p51, %p52
    %p54 = scmp.ne.s32.totalorder %s46, %s48
    %p55 = scmp.eq.s32.totalorder %s17, 1
    %p56 = por %p54, %p55
    %p57 = scmp.ne.s32.totalorder %s48, %s49
    %p58 = scmp.eq.s32.totalorder %s17, 0
    %p59 = por %p57, %p58
    %p60 = scmp.ne.s32.totalorder %s48, %s49
    %p61 = scmp.eq.s32.totalorder %s18, 1
    %p62 = por %p60, %p61
    %p64 = scmp.ne.s32.totalorder %s49, %s63
    %p65 = scmp.eq.s32.totalorder %s18, 0
    %p66 = por %p64, %p65
    %s68 = sadd.s32 %s67, 1
    %p71 = scmp.eq.s32.totalorder %s12, 1
    %p72 = scmp.ne.s32.totalorder %s67, %s69
    %p73 = scmp.eq.s32.totalorder %s12, 0
    %p74 = por %p72, %p73
    %p75 = scmp.ne.s32.totalorder %s67, %s69
    %p76 = scmp.eq.s32.totalorder %s17, 1
    %p77 = por %p75, %p76
    %p78 = scmp.ne.s32.totalorder %s69, %s70
    %p79 = scmp.eq.s32.totalorder %s17, 0
    %p80 = por %p78, %p79
    %p81 = scmp.ne.s32.totalorder %s69, %s70
    %p82 = scmp.eq.s32.totalorder %s18, 1
    %p83 = por %p81, %p82
    %p85 = scmp.ne.s32.totalorder %s70, %s84
    %p86 = scmp.eq.s32.totalorder %s18, 0
    %p87 = por %p85, %p86
    %s88 = ssub.s32 %s12, %s19
    %p89 = scmp.eq.s32.totalorder %s88, 0
    %s91 = sadd.s32 %s90, 1
    %s92 = scalar_select %p89, %s90, %s91
    %p95 = pneg %p89
    %p96 = scmp.eq.s32.totalorder %s12, 1
    %p97 = por %p95, %p96
    %p98 = scmp.ne.s32.totalorder %s90, %s93
    %p99 = scmp.eq.s32.totalorder %s12, 0
    %p100 = por %p98, %p99
    %p101 = scmp.ne.s32.totalorder %s90, %s93
    %p102 = scmp.eq.s32.totalorder %s17, 1
    %p103 = por %p101, %p102
    %p104 = scmp.ne.s32.totalorder %s93, %s94
    %p105 = scmp.eq.s32.totalorder %s17, 0
    %p106 = por %p104, %p105
    %p107 = scmp.ne.s32.totalorder %s93, %s94
    %p108 = scmp.eq.s32.totalorder %s18, 1
    %p109 = por %p107, %p108
    %p111 = scmp.ne.s32.totalorder %s94, %s110
    %p112 = scmp.eq.s32.totalorder %s18, 0
    %p113 = por %p111, %p112
    %s114 = ssub.s32 %s12, %s19
    %p115 = scmp.eq.s32.totalorder %s114, 0
    %s117 = sadd.s32 %s116, 1
    %s118 = scalar_select %p115, %s116, %s117
    %p121 = pneg %p115
    %p122 = scmp.eq.s32.totalorder %s12, 1
    %p123 = por %p121, %p122
    %p124 = scmp.ne.s32.totalorder %s116, %s119
    %p125 = scmp.eq.s32.totalorder %s12, 0
    %p126 = por %p124, %p125
    %p127 = scmp.ne.s32.totalorder %s116, %s119
    %p128 = scmp.eq.s32.totalorder %s17, 1
    %p129 = por %p127, %p128
    %p130 = scmp.ne.s32.totalorder %s119, %s120
    %p131 = scmp.eq.s32.totalorder %s17, 0
    %p132 = por %p130, %p131
    %p133 = scmp.ne.s32.totalorder %s119, %s120
    %p134 = scmp.eq.s32.totalorder %s18, 1
    %p135 = por %p133, %p134
    %p137 = scmp.ne.s32.totalorder %s120, %s136
    %p138 = scmp.eq.s32.totalorder %s18, 0
    %p139 = por %p137, %p138
    %s140 = ssub.s32 %s12, %s19
    %p141 = scmp.eq.s32.totalorder %s140, 0
    %s143 = sadd.s32 %s142, 1
    %s144 = scalar_select %p141, %s142, %s143
    %p147 = pneg %p141
    %p148 = scmp.eq.s32.totalorder %s12, 1
    %p149 = por %p147, %p148
    %p150 = scmp.ne.s32.totalorder %s142, %s145
    %p151 = scmp.eq.s32.totalorder %s12, 0
    %p152 = por %p150, %p151
    %p153 = scmp.ne.s32.totalorder %s142, %s145
    %p154 = scmp.eq.s32.totalorder %s17, 1
    %p155 = por %p153, %p154
    %p156 = scmp.ne.s32.totalorder %s145, %s146
    %p157 = scmp.eq.s32.totalorder %s17, 0
    %p158 = por %p156, %p157
    %p159 = scmp.ne.s32.totalorder %s145, %s146
    %p160 = scmp.eq.s32.totalorder %s18, 1
    %p161 = por %p159, %p160
    %p163 = scmp.ne.s32.totalorder %s146, %s162
    %p164 = scmp.eq.s32.totalorder %s18, 0
    %p165 = por %p163, %p164
    %p166 = scmp.le.s32.totalorder 1, %s12
    %p167 = scmp.lt.s32.totalorder %s12, 3
    %p168 = pnand %p166, %p167
    %p169 = pneg %p168
    // Predicated region
    $region9: #{conv_block_forward.1} parent=5 // pred_check
      _
    $region10: #{conv_block_forward.1} parent=5 // pred_check_branch
      %171 = sbr.rel (%p168) target = $region12
    $region11: #{conv_block_forward.1} parent=5 // pred_region
      %s172 = ssub.s32 %s12, 1
      // Predicated region
      $region13: #{conv_block_forward.1} parent=11 // pred_check
        %p173 = pneg %p59
      $region14: #{conv_block_forward.1} parent=11 // pred_check_branch
        %175 = sbr.rel (%p173) target = $region16
      $region15: #{conv_block_forward.1} parent=11 // pred_region
        _
      $region16: #{conv_block_forward.1} parent=11 // pred_fallthru
        _
      // Predicated region
      $region17: #{conv_block_forward.1} parent=11 // pred_check
        %p176 = pneg %p80
      $region18: #{conv_block_forward.1} parent=11 // pred_check_branch
        %178 = sbr.rel (%p176) target = $region20
      $region19: #{conv_block_forward.1} parent=11 // pred_region
        _
      $region20: #{conv_block_forward.1} parent=11 // pred_fallthru
        _
    $region12: #{conv_block_forward.1} parent=5 // pred_fallthru
      _
    %p179 = scmp.lt.s32.totalorder %s12, 2
    // Predicated region
    $region21: #{conv_block_forward.1} parent=5 // pred_check
      %p180 = pneg %p179
    $region22: #{conv_block_forward.1} parent=5 // pred_check_branch
      %182 = sbr.rel (%p180) target = $region24
    $region23: #{conv_block_forward.1} parent=5 // pred_region
      // Predicated region
      $region25: #{conv_block_forward.1} parent=23 // pred_check
        %p183 = pneg %p32
      $region26: #{conv_block_forward.1} parent=23 // pred_check_branch
        %185 = sbr.rel (%p183) target = $region28
      $region27: #{conv_block_forward.1} parent=23 // pred_region
        %s186 = smul.u32 42, %s12
        %p187 = scmp.lt.s32.totalorder %s186, 83
        %s188 = scalar_select %p187, %s186, 83
        %s189 = smul.addr %s188, 4
        %s190 = scalar_lea.vmem %s0, %s189
        %s191 = smul.u32 42, %s12
      $region28: #{conv_block_forward.1} parent=23 // pred_fallthru
        _
    $region24: #{conv_block_forward.1} parent=5 // pred_fallthru
      _
    %p192 = scmp.le.s32.totalorder 1, %s12
    %p193 = scmp.lt.s32.totalorder %s12, 3
    %p194 = pnand %p192, %p193
    %p195 = pneg %p194
    // Predicated region
    $region29: #{conv_block_forward.1} parent=5 // pred_check
      _
    $region30: #{conv_block_forward.1} parent=5 // pred_check_branch
      %197 = sbr.rel (%p194) target = $region32
    $region31: #{conv_block_forward.1} parent=5 // pred_region
      %s198 = ssub.s32 %s12, 1
      %s199 = smul.u32 42, %s17
      %p200 = scmp.lt.s32.totalorder %s199, 83
      %s201 = scalar_select %p200, %s199, 83
      %s202 = smul.addr %s201, 4
      %s203 = scalar_lea.vmem %s0, %s202
      %p204 = pneg %p38
      %p205 = pneg %p35
      %p206 = pneg %p59
      %p207 = pneg %p56
      %p208 = pneg %p80
      %p209 = pneg %p77
      %p210 = pneg %p106
      %p211 = pneg %p103
      %s212 = smul.u32 36, %s17
      %p213 = scmp.lt.s32.totalorder %s212, 71
      %s214 = scalar_select %p213, %s212, 71
      %s215 = smul.addr %s214, 4
      %s216 = scalar_lea.vmem %s3, %s215
      %p217 = pneg %p132
      %p218 = pneg %p129
      %p219 = scmp.lt.s32.totalorder %s17, 1
      %s220 = scalar_select %p219, %s17, 1
      %s221 = scalar_lea.vmem %s4, %s220
      %p222 = pneg %p158
      %p223 = pneg %p155
      %p224 = scmp.lt.s32.totalorder %s17, 1
      %s225 = scalar_select %p224, %s17, 1
      %s226 = scalar_lea.vmem %s5, %s225
      %s227 = smul.u32 42, %s17
      %p228 = scmp.lt.s32.totalorder %s227, 83
      %s229 = scalar_select %p228, %s227, 83
      %s230 = smul.addr %s229, 4
      %s231 = scalar_lea.vmem %s0, %s230
      %s232 = smul.u32 42, %s17
      %s233 = smul.u32 36, %s17
      %p234 = scmp.lt.s32.totalorder %s233, 71
      %s235 = scalar_select %p234, %s233, 71
      %s236 = smul.addr %s235, 4
      %s237 = scalar_lea.vmem %s3, %s236
      %s238 = smul.u32 36, %s17
      %p239 = scmp.lt.s32.totalorder %s17, 1
      %s240 = scalar_select %p239, %s17, 1
      %s241 = scalar_lea.vmem %s4, %s240
      %p242 = scmp.lt.s32.totalorder %s17, 1
      %s243 = scalar_select %p242, %s17, 1
      %s244 = scalar_lea.vmem %s5, %s243
      %v246 = vld [vmem:[%s231] sm:$0xf]
      %v247 = vld [vmem:[%s231 + $0x4] sm:$0xf]
      %v248 = vld [vmem:[%s231 + $0x8] sm:$0xf]
      %v249 = vld [vmem:[%s231 + $0xc] sm:$0xf]
      %v250 = vld [vmem:[%s231 + $0x10] sm:$0xf]
      %v251 = vld [vmem:[%s231 + $0x14] sm:$0xf]
      %v252 = vld [vmem:[%s231 + $0x18] sm:$0xf]
      %v253 = vld [vmem:[%s231 + $0x1c] sm:$0xf]
      %v254 = vld [vmem:[%s231 + $0x20] sm:$0xf]
      %v255 = vld [vmem:[%s231 + $0x24] sm:$0xf]
      %v256 = vld [vmem:[%s231 + $0x28] sm:$0xf]
      %v257 = vld [vmem:[%s231 + $0x2c] sm:$0xf]
      %v258 = vld [vmem:[%s231 + $0x30] sm:$0xf]
      %v259 = vld [vmem:[%s231 + $0x34] sm:$0xf]
      %v260 = vld [vmem:[%s231 + $0x38] sm:$0xf]
      %v261 = vld [vmem:[%s231 + $0x3c] sm:$0xf]
      %v262 = vld [vmem:[%s231 + $0x40] sm:$0xf]
      %v263 = vld [vmem:[%s231 + $0x44] sm:$0xf]
      %v264 = vld [vmem:[%s231 + $0x48] sm:$0xf]
      %v265 = vld [vmem:[%s231 + $0x4c] sm:$0xf]
      %v266 = vld [vmem:[%s231 + $0x50] sm:$0xf]
      %v267 = vld [vmem:[%s231 + $0x54] sm:$0xf]
      %v268 = vld [vmem:[%s231 + $0x58] sm:$0xf]
      %v269 = vld [vmem:[%s231 + $0x5c] sm:$0xf]
      %v270 = vld [vmem:[%s231 + $0x60] sm:$0xf]
      %v271 = vld [vmem:[%s231 + $0x64] sm:$0xf]
      %v272 = vld [vmem:[%s231 + $0x68] sm:$0xf]
      %v273 = vld [vmem:[%s231 + $0x6c] sm:$0xf]
      %v274 = vld [vmem:[%s231 + $0x70] sm:$0xf]
      %v275 = vld [vmem:[%s231 + $0x74] sm:$0xf]
      %v276 = vld [vmem:[%s231 + $0x78] sm:$0xf]
      %v277 = vld [vmem:[%s231 + $0x7c] sm:$0xf]
      %v278 = vld [vmem:[%s231 + $0x80] sm:$0xf]
      %v279 = vld [vmem:[%s231 + $0x84] sm:$0xf]
      %v280 = vld [vmem:[%s231 + $0x88] sm:$0xf]
      %v281 = vld [vmem:[%s231 + $0x8c] sm:$0xf]
      %v318 = vunpack.c.l.b16 %v246
      %v319 = vunpack.c.l.b16 %v247
      %v320 = vunpack.c.l.b16 %v248
      %v321 = vunpack.c.l.b16 %v249
      %v322 = vunpack.c.l.b16 %v250
      %v323 = vunpack.c.l.b16 %v251
      %v324 = vunpack.c.l.b16 %v252
      %v325 = vunpack.c.l.b16 %v253
      %v326 = vunpack.c.l.b16 %v254
      %v327 = vunpack.c.l.b16 %v255
      %v328 = vunpack.c.l.b16 %v256
      %v329 = vunpack.c.l.b16 %v257
      %v330 = vunpack.c.l.b16 %v258
      %v331 = vunpack.c.l.b16 %v259
      %v332 = vunpack.c.l.b16 %v260
      %v333 = vunpack.c.l.b16 %v261
      %v334 = vunpack.c.l.b16 %v262
      %v335 = vunpack.c.l.b16 %v263
      %v336 = vunpack.c.l.b16 %v264
      %v337 = vunpack.c.l.b16 %v265
      %v338 = vunpack.c.l.b16 %v266
      %v339 = vunpack.c.l.b16 %v267
      %v340 = vunpack.c.l.b16 %v268
      %v341 = vunpack.c.l.b16 %v269
      %v342 = vunpack.c.l.b16 %v270
      %v343 = vunpack.c.l.b16 %v271
      %v344 = vunpack.c.l.b16 %v272
      %v345 = vunpack.c.l.b16 %v273
      %v346 = vunpack.c.l.b16 %v274
      %v347 = vunpack.c.l.b16 %v275
      %v348 = vunpack.c.l.b16 %v276
      %v349 = vunpack.c.l.b16 %v277
      %v350 = vunpack.c.l.b16 %v278
      %v351 = vunpack.c.l.b16 %v279
      %v352 = vunpack.c.l.b16 %v280
      %v353 = vunpack.c.l.b16 %v281
      %v354 = vpack.c.b16 %v319, %v318
      %v355 = vpack.c.b16 %v321, %v320
      %v356 = vpack.c.b16 %v323, %v322
      %v357 = vpack.c.b16 %v325, %v324
      %v358 = vpack.c.b16 %v327, %v326
      %v359 = vpack.c.b16 %v329, %v328
      %v360 = vpack.c.b16 %v331, %v330
      %v361 = vpack.c.b16 %v333, %v332
      %v362 = vpack.c.b16 %v335, %v334
      %v363 = vpack.c.b16 %v337, %v336
      %v364 = vpack.c.b16 %v339, %v338
      %v365 = vpack.c.b16 %v341, %v340
      %v366 = vpack.c.b16 %v343, %v342
      %v367 = vpack.c.b16 %v345, %v344
      %v368 = vpack.c.b16 %v347, %v346
      %v369 = vpack.c.b16 %v349, %v348
      %v370 = vpack.c.b16 %v351, %v350
      %v371 = vpack.c.b16 %v353, %v352
      %vm390 = vcmask 64512
      %391 = vst.msk [vmem:[#allocation2] sm:$0xff] %vm390, %v354
      %392 = vst.msk [vmem:[#allocation2 + $0x8] sm:$0xff] %vm390, %v355
      %393 = vst.msk [vmem:[#allocation2 + $0x10] sm:$0xff] %vm390, %v356
      %394 = vst.msk [vmem:[#allocation2 + $0x18] sm:$0xff] %vm390, %v357
      %395 = vst.msk [vmem:[#allocation2 + $0x20] sm:$0xff] %vm390, %v358
      %396 = vst.msk [vmem:[#allocation2 + $0x28] sm:$0xff] %vm390, %v359
      %397 = vst.msk [vmem:[#allocation2 + $0x30] sm:$0xff] %vm390, %v360
      %398 = vst.msk [vmem:[#allocation2 + $0x38] sm:$0xff] %vm390, %v361
      %399 = vst.msk [vmem:[#allocation2 + $0x40] sm:$0xff] %vm390, %v362
      %400 = vst.msk [vmem:[#allocation2 + $0x48] sm:$0xff] %vm390, %v363
      %401 = vst.msk [vmem:[#allocation2 + $0x50] sm:$0xff] %vm390, %v364
      %402 = vst.msk [vmem:[#allocation2 + $0x58] sm:$0xff] %vm390, %v365
      %403 = vst.msk [vmem:[#allocation2 + $0x60] sm:$0xff] %vm390, %v366
      %404 = vst.msk [vmem:[#allocation2 + $0x68] sm:$0xff] %vm390, %v367
      %405 = vst.msk [vmem:[#allocation2 + $0x70] sm:$0xff] %vm390, %v368
      %406 = vst.msk [vmem:[#allocation2 + $0x78] sm:$0xff] %vm390, %v369
      %407 = vst.msk [vmem:[#allocation2 + $0x80] sm:$0xff] %vm390, %v370
      %408 = vst.msk [vmem:[#allocation2 + $0x88] sm:$0xff] %vm390, %v371
      %v409 = vld [vmem:[%s231] sm:$0xf]
      %v410 = vld [vmem:[%s231 + $0x4] sm:$0xf]
      %v411 = vld [vmem:[%s231 + $0x8] sm:$0xf]
      %v412 = vld [vmem:[%s231 + $0xc] sm:$0xf]
      %v413 = vld [vmem:[%s231 + $0x10] sm:$0xf]
      %v414 = vld [vmem:[%s231 + $0x14] sm:$0xf]
      %v415 = vld [vmem:[%s231 + $0x18] sm:$0xf]
      %v416 = vld [vmem:[%s231 + $0x1c] sm:$0xf]
      %v417 = vld [vmem:[%s231 + $0x20] sm:$0xf]
      %v418 = vld [vmem:[%s231 + $0x24] sm:$0xf]
      %v419 = vld [vmem:[%s231 + $0x28] sm:$0xf]
      %v420 = vld [vmem:[%s231 + $0x2c] sm:$0xf]
      %v421 = vld [vmem:[%s231 + $0x30] sm:$0xf]
      %v422 = vld [vmem:[%s231 + $0x34] sm:$0xf]
      %v423 = vld [vmem:[%s231 + $0x38] sm:$0xf]
      %v424 = vld [vmem:[%s231 + $0x3c] sm:$0xf]
      %v425 = vld [vmem:[%s231 + $0x40] sm:$0xf]
      %v426 = vld [vmem:[%s231 + $0x44] sm:$0xf]
      %v427 = vld [vmem:[%s231 + $0x48] sm:$0xf]
      %v428 = vld [vmem:[%s231 + $0x4c] sm:$0xf]
      %v429 = vld [vmem:[%s231 + $0x50] sm:$0xf]
      %v430 = vld [vmem:[%s231 + $0x54] sm:$0xf]
      %v431 = vld [vmem:[%s231 + $0x58] sm:$0xf]
      %v432 = vld [vmem:[%s231 + $0x5c] sm:$0xf]
      %v433 = vld [vmem:[%s231 + $0x60] sm:$0xf]
      %v434 = vld [vmem:[%s231 + $0x64] sm:$0xf]
      %v435 = vld [vmem:[%s231 + $0x68] sm:$0xf]
      %v436 = vld [vmem:[%s231 + $0x6c] sm:$0xf]
      %v437 = vld [vmem:[%s231 + $0x70] sm:$0xf]
      %v438 = vld [vmem:[%s231 + $0x74] sm:$0xf]
      %v439 = vld [vmem:[%s231 + $0x78] sm:$0xf]
      %v440 = vld [vmem:[%s231 + $0x7c] sm:$0xf]
      %v441 = vld [vmem:[%s231 + $0x80] sm:$0xf]
      %v442 = vld [vmem:[%s231 + $0x84] sm:$0xf]
      %v443 = vld [vmem:[%s231 + $0x88] sm:$0xf]
      %v444 = vld [vmem:[%s231 + $0x8c] sm:$0xf]
      %v445 = vld [vmem:[%s231 + $0x90] sm:$0x1]
      %v483 = vunpack.c.l.b16 %v409
      %v484 = vunpack.c.l.b16 %v410
      %v485 = vunpack.c.l.b16 %v411
      %v486 = vunpack.c.l.b16 %v412
      %v487 = vunpack.c.l.b16 %v413
      %v488 = vunpack.c.l.b16 %v414
      %v489 = vunpack.c.l.b16 %v415
      %v490 = vunpack.c.l.b16 %v416
      %v491 = vunpack.c.l.b16 %v417
      %v492 = vunpack.c.l.b16 %v418
      %v493 = vunpack.c.l.b16 %v419
      %v494 = vunpack.c.l.b16 %v420
      %v495 = vunpack.c.l.b16 %v421
      %v496 = vunpack.c.l.b16 %v422
      %v497 = vunpack.c.l.b16 %v423
      %v498 = vunpack.c.l.b16 %v424
      %v499 = vunpack.c.l.b16 %v425
      %v500 = vunpack.c.l.b16 %v426
      %v501 = vunpack.c.l.b16 %v427
      %v502 = vunpack.c.l.b16 %v428
      %v503 = vunpack.c.l.b16 %v429
      %v504 = vunpack.c.l.b16 %v430
      %v505 = vunpack.c.l.b16 %v431
      %v506 = vunpack.c.l.b16 %v432
      %v507 = vunpack.c.l.b16 %v433
      %v508 = vunpack.c.l.b16 %v434
      %v509 = vunpack.c.l.b16 %v435
      %v510 = vunpack.c.l.b16 %v436
      %v511 = vunpack.c.l.b16 %v437
      %v512 = vunpack.c.l.b16 %v438
      %v513 = vunpack.c.l.b16 %v439
      %v514 = vunpack.c.l.b16 %v440
      %v515 = vunpack.c.l.b16 %v441
      %v516 = vunpack.c.l.b16 %v442
      %v517 = vunpack.c.l.b16 %v443
      %v518 = vunpack.c.l.b16 %v444
      %v519 = vunpack.c.l.b16 %v445
      %v520 = vpack.c.b16 %v484, %v483
      %v521 = vpack.c.b16 %v486, %v485
      %v522 = vpack.c.b16 %v488, %v487
      %v523 = vpack.c.b16 %v490, %v489
      %v524 = vpack.c.b16 %v492, %v491
      %v525 = vpack.c.b16 %v494, %v493
      %v526 = vpack.c.b16 %v496, %v495
      %v527 = vpack.c.b16 %v498, %v497
      %v528 = vpack.c.b16 %v500, %v499
      %v529 = vpack.c.b16 %v502, %v501
      %v530 = vpack.c.b16 %v504, %v503
      %v531 = vpack.c.b16 %v506, %v505
      %v532 = vpack.c.b16 %v508, %v507
      %v533 = vpack.c.b16 %v510, %v509
      %v534 = vpack.c.b16 %v512, %v511
      %v535 = vpack.c.b16 %v514, %v513
      %v536 = vpack.c.b16 %v516, %v515
      %v537 = vpack.c.b16 %v518, %v517
      %v538 = vpack.c.b16 %v519, %v519
      %vm539 = vsmask.f32 7424
      %v541 = vshrl.u32 %v520, 16
      %v543 = vshll.u32 %v520, 16
      %v545 = vrot.slane %v543, 1
      %v546 = vor.u32 %v541, %v545
      %v548 = vshll.u32 %v521, 16
      %v550 = vrot.slane %v548, 1
      %v551 = vsel %vm539, %v546, %v550
      %v552 = vshrl.u32 %v521, 16
      %v554 = vor.u32 %v552, %v550
      %v556 = vshll.u32 %v522, 16
      %v558 = vrot.slane %v556, 1
      %v559 = vsel %vm539, %v554, %v558
      %v560 = vshrl.u32 %v522, 16
      %v562 = vor.u32 %v560, %v558
      %v564 = vshll.u32 %v523, 16
      %v566 = vrot.slane %v564, 1
      %v567 = vsel %vm539, %v562, %v566
      %v568 = vshrl.u32 %v523, 16
      %v570 = vor.u32 %v568, %v566
      %v572 = vshll.u32 %v524, 16
      %v574 = vrot.slane %v572, 1
      %v575 = vsel %vm539, %v570, %v574
      %v576 = vshrl.u32 %v524, 16
      %v578 = vor.u32 %v576, %v574
      %v580 = vshll.u32 %v525, 16
      %v582 = vrot.slane %v580, 1
      %v583 = vsel %vm539, %v578, %v582
      %v584 = vshrl.u32 %v525, 16
      %v586 = vor.u32 %v584, %v582
      %v588 = vshll.u32 %v526, 16
      %v590 = vrot.slane %v588, 1
      %v591 = vsel %vm539, %v586, %v590
      %v592 = vshrl.u32 %v526, 16
      %v594 = vor.u32 %v592, %v590
      %v596 = vshll.u32 %v527, 16
      %v598 = vrot.slane %v596, 1
      %v599 = vsel %vm539, %v594, %v598
      %v600 = vshrl.u32 %v527, 16
      %v602 = vor.u32 %v600, %v598
      %v604 = vshll.u32 %v528, 16
      %v606 = vrot.slane %v604, 1
      %v607 = vsel %vm539, %v602, %v606
      %v608 = vshrl.u32 %v528, 16
      %v610 = vor.u32 %v608, %v606
      %v612 = vshll.u32 %v529, 16
      %v614 = vrot.slane %v612, 1
      %v615 = vsel %vm539, %v610, %v614
      %v616 = vshrl.u32 %v529, 16
      %v618 = vor.u32 %v616, %v614
      %v620 = vshll.u32 %v530, 16
      %v622 = vrot.slane %v620, 1
      %v623 = vsel %vm539, %v618, %v622
      %v624 = vshrl.u32 %v530, 16
      %v626 = vor.u32 %v624, %v622
      %v628 = vshll.u32 %v531, 16
      %v630 = vrot.slane %v628, 1
      %v631 = vsel %vm539, %v626, %v630
      %v632 = vshrl.u32 %v531, 16
      %v634 = vor.u32 %v632, %v630
      %v636 = vshll.u32 %v532, 16
      %v638 = vrot.slane %v636, 1
      %v639 = vsel %vm539, %v634, %v638
      %v640 = vshrl.u32 %v532, 16
      %v642 = vor.u32 %v640, %v638
      %v644 = vshll.u32 %v533, 16
      %v646 = vrot.slane %v644, 1
      %v647 = vsel %vm539, %v642, %v646
      %v648 = vshrl.u32 %v533, 16
      %v650 = vor.u32 %v648, %v646
      %v652 = vshll.u32 %v534, 16
      %v654 = vrot.slane %v652, 1
      %v655 = vsel %vm539, %v650, %v654
      %v656 = vshrl.u32 %v534, 16
      %v658 = vor.u32 %v656, %v654
      %v660 = vshll.u32 %v535, 16
      %v662 = vrot.slane %v660, 1
      %v663 = vsel %vm539, %v658, %v662
      %v664 = vshrl.u32 %v535, 16
      %v666 = vor.u32 %v664, %v662
      %v668 = vshll.u32 %v536, 16
      %v670 = vrot.slane %v668, 1
      %v671 = vsel %vm539, %v666, %v670
      %v672 = vshrl.u32 %v536, 16
      %v674 = vor.u32 %v672, %v670
      %v676 = vshll.u32 %v537, 16
      %v678 = vrot.slane %v676, 1
      %v679 = vsel %vm539, %v674, %v678
      %v680 = vshrl.u32 %v537, 16
      %v682 = vor.u32 %v680, %v678
      %v684 = vshll.u32 %v538, 16
      %v686 = vrot.slane %v684, 1
      %v687 = vsel %vm539, %v682, %v686
      %688 = vrot.lane.b32.xlu0 %v551, 8
      %v689 = vpop.permute.xlu0 %688
      %690 = vrot.lane.b32.xlu0 %v559, 8
      %v691 = vpop.permute.xlu0 %690
      %692 = vrot.lane.b32.xlu0 %v567, 8
      %v693 = vpop.permute.xlu0 %692
      %694 = vrot.lane.b32.xlu0 %v575, 8
      %v695 = vpop.permute.xlu0 %694
      %696 = vrot.lane.b32.xlu0 %v583, 8
      %v697 = vpop.permute.xlu0 %696
      %698 = vrot.lane.b32.xlu0 %v591, 8
      %v699 = vpop.permute.xlu0 %698
      %700 = vrot.lane.b32.xlu0 %v599, 8
      %v701 = vpop.permute.xlu0 %700
      %702 = vrot.lane.b32.xlu0 %v607, 8
      %v703 = vpop.permute.xlu0 %702
      %704 = vrot.lane.b32.xlu0 %v615, 8
      %v705 = vpop.permute.xlu0 %704
      %706 = vrot.lane.b32.xlu0 %v623, 8
      %v707 = vpop.permute.xlu0 %706
      %708 = vrot.lane.b32.xlu0 %v631, 8
      %v709 = vpop.permute.xlu0 %708
      %710 = vrot.lane.b32.xlu0 %v639, 8
      %v711 = vpop.permute.xlu0 %710
      %712 = vrot.lane.b32.xlu0 %v647, 8
      %v713 = vpop.permute.xlu0 %712
      %714 = vrot.lane.b32.xlu0 %v655, 8
      %v715 = vpop.permute.xlu0 %714
      %716 = vrot.lane.b32.xlu0 %v663, 8
      %v717 = vpop.permute.xlu0 %716
      %718 = vrot.lane.b32.xlu0 %v671, 8
      %v719 = vpop.permute.xlu0 %718
      %720 = vrot.lane.b32.xlu0 %v679, 8
      %v721 = vpop.permute.xlu0 %720
      %722 = vrot.lane.b32.xlu0 %v687, 8
      %v723 = vpop.permute.xlu0 %722
      %vm742 = vcmask 130112
      %743 = vst.msk [vmem:[#allocation2] sm:$0xff] %vm742, %v689
      %744 = vst.msk [vmem:[#allocation2 + $0x8] sm:$0xff] %vm742, %v691
      %745 = vst.msk [vmem:[#allocation2 + $0x10] sm:$0xff] %vm742, %v693
      %746 = vst.msk [vmem:[#allocation2 + $0x18] sm:$0xff] %vm742, %v695
      %747 = vst.msk [vmem:[#allocation2 + $0x20] sm:$0xff] %vm742, %v697
      %748 = vst.msk [vmem:[#allocation2 + $0x28] sm:$0xff] %vm742, %v699
      %749 = vst.msk [vmem:[#allocation2 + $0x30] sm:$0xff] %vm742, %v701
      %750 = vst.msk [vmem:[#allocation2 + $0x38] sm:$0xff] %vm742, %v703
      %751 = vst.msk [vmem:[#allocation2 + $0x40] sm:$0xff] %vm742, %v705
      %752 = vst.msk [vmem:[#allocation2 + $0x48] sm:$0xff] %vm742, %v707
      %753 = vst.msk [vmem:[#allocation2 + $0x50] sm:$0xff] %vm742, %v709
      %754 = vst.msk [vmem:[#allocation2 + $0x58] sm:$0xff] %vm742, %v711
      %755 = vst.msk [vmem:[#allocation2 + $0x60] sm:$0xff] %vm742, %v713
      %756 = vst.msk [vmem:[#allocation2 + $0x68] sm:$0xff] %vm742, %v715
      %757 = vst.msk [vmem:[#allocation2 + $0x70] sm:$0xff] %vm742, %v717
      %758 = vst.msk [vmem:[#allocation2 + $0x78] sm:$0xff] %vm742, %v719
      %759 = vst.msk [vmem:[#allocation2 + $0x80] sm:$0xff] %vm742, %v721
      %760 = vst.msk [vmem:[#allocation2 + $0x88] sm:$0xff] %vm742, %v723
      %v761 = vld [vmem:[%s231] sm:$0xe]
      %v762 = vld [vmem:[%s231 + $0x4] sm:$0xf]
      %v763 = vld [vmem:[%s231 + $0x8] sm:$0xf]
      %v764 = vld [vmem:[%s231 + $0xc] sm:$0xf]
      %v765 = vld [vmem:[%s231 + $0x10] sm:$0xf]
      %v766 = vld [vmem:[%s231 + $0x14] sm:$0xf]
      %v767 = vld [vmem:[%s231 + $0x18] sm:$0xf]
      %v768 = vld [vmem:[%s231 + $0x1c] sm:$0xf]
      %v769 = vld [vmem:[%s231 + $0x20] sm:$0xf]
      %v770 = vld [vmem:[%s231 + $0x24] sm:$0xf]
      %v771 = vld [vmem:[%s231 + $0x28] sm:$0xf]
      %v772 = vld [vmem:[%s231 + $0x2c] sm:$0xf]
      %v773 = vld [vmem:[%s231 + $0x30] sm:$0xf]
      %v774 = vld [vmem:[%s231 + $0x34] sm:$0xf]
      %v775 = vld [vmem:[%s231 + $0x38] sm:$0xf]
      %v776 = vld [vmem:[%s231 + $0x3c] sm:$0xf]
      %v777 = vld [vmem:[%s231 + $0x40] sm:$0xf]
      %v778 = vld [vmem:[%s231 + $0x44] sm:$0xf]
      %v779 = vld [vmem:[%s231 + $0x48] sm:$0xf]
      %v780 = vld [vmem:[%s231 + $0x4c] sm:$0xf]
      %v781 = vld [vmem:[%s231 + $0x50] sm:$0xf]
      %v782 = vld [vmem:[%s231 + $0x54] sm:$0xf]
      %v783 = vld [vmem:[%s231 + $0x58] sm:$0xf]
      %v784 = vld [vmem:[%s231 + $0x5c] sm:$0xf]
      %v785 = vld [vmem:[%s231 + $0x60] sm:$0xf]
      %v786 = vld [vmem:[%s231 + $0x64] sm:$0xf]
      %v787 = vld [vmem:[%s231 + $0x68] sm:$0xf]
      %v788 = vld [vmem:[%s231 + $0x6c] sm:$0xf]
      %v789 = vld [vmem:[%s231 + $0x70] sm:$0xf]
      %v790 = vld [vmem:[%s231 + $0x74] sm:$0xf]
      %v791 = vld [vmem:[%s231 + $0x78] sm:$0xf]
      %v792 = vld [vmem:[%s231 + $0x7c] sm:$0xf]
      %v793 = vld [vmem:[%s231 + $0x80] sm:$0xf]
      %v794 = vld [vmem:[%s231 + $0x84] sm:$0xf]
      %v795 = vld [vmem:[%s231 + $0x88] sm:$0xf]
      %v796 = vld [vmem:[%s231 + $0x8c] sm:$0xf]
      %v797 = vld [vmem:[%s231 + $0x90] sm:$0x1]
      %v835 = vunpack.c.l.b16 %v761
      %v836 = vunpack.c.l.b16 %v762
      %v837 = vunpack.c.l.b16 %v763
      %v838 = vunpack.c.l.b16 %v764
      %v839 = vunpack.c.l.b16 %v765
      %v840 = vunpack.c.l.b16 %v766
      %v841 = vunpack.c.l.b16 %v767
      %v842 = vunpack.c.l.b16 %v768
      %v843 = vunpack.c.l.b16 %v769
      %v844 = vunpack.c.l.b16 %v770
      %v845 = vunpack.c.l.b16 %v771
      %v846 = vunpack.c.l.b16 %v772
      %v847 = vunpack.c.l.b16 %v773
      %v848 = vunpack.c.l.b16 %v774
      %v849 = vunpack.c.l.b16 %v775
      %v850 = vunpack.c.l.b16 %v776
      %v851 = vunpack.c.l.b16 %v777
      %v852 = vunpack.c.l.b16 %v778
      %v853 = vunpack.c.l.b16 %v779
      %v854 = vunpack.c.l.b16 %v780
      %v855 = vunpack.c.l.b16 %v781
      %v856 = vunpack.c.l.b16 %v782
      %v857 = vunpack.c.l.b16 %v783
      %v858 = vunpack.c.l.b16 %v784
      %v859 = vunpack.c.l.b16 %v785
      %v860 = vunpack.c.l.b16 %v786
      %v861 = vunpack.c.l.b16 %v787
      %v862 = vunpack.c.l.b16 %v788
      %v863 = vunpack.c.l.b16 %v789
      %v864 = vunpack.c.l.b16 %v790
      %v865 = vunpack.c.l.b16 %v791
      %v866 = vunpack.c.l.b16 %v792
      %v867 = vunpack.c.l.b16 %v793
      %v868 = vunpack.c.l.b16 %v794
      %v869 = vunpack.c.l.b16 %v795
      %v870 = vunpack.c.l.b16 %v796
      %v871 = vunpack.c.l.b16 %v797
      %v872 = vpack.c.b16 %v836, %v835
      %v873 = vpack.c.b16 %v838, %v837
      %v874 = vpack.c.b16 %v840, %v839
      %v875 = vpack.c.b16 %v842, %v841
      %v876 = vpack.c.b16 %v844, %v843
      %v877 = vpack.c.b16 %v846, %v845
      %v878 = vpack.c.b16 %v848, %v847
      %v879 = vpack.c.b16 %v850, %v849
      %v880 = vpack.c.b16 %v852, %v851
      %v881 = vpack.c.b16 %v854, %v853
      %v882 = vpack.c.b16 %v856, %v855
      %v883 = vpack.c.b16 %v858, %v857
      %v884 = vpack.c.b16 %v860, %v859
      %v885 = vpack.c.b16 %v862, %v861
      %v886 = vpack.c.b16 %v864, %v863
      %v887 = vpack.c.b16 %v866, %v865
      %v888 = vpack.c.b16 %v868, %v867
      %v889 = vpack.c.b16 %v870, %v869
      %v890 = vpack.c.b16 %v871, %v871
      %vm891 = vcmask 1046528
      %v892 = vrot.slane %v872, 1
      %v893 = vrot.slane %v873, 1
      %v894 = vsel %vm891, %v892, %v893
      %v895 = vrot.slane %v874, 1
      %v896 = vsel %vm891, %v893, %v895
      %v897 = vrot.slane %v875, 1
      %v898 = vsel %vm891, %v895, %v897
      %v899 = vrot.slane %v876, 1
      %v900 = vsel %vm891, %v897, %v899
      %v901 = vrot.slane %v877, 1
      %v902 = vsel %vm891, %v899, %v901
      %v903 = vrot.slane %v878, 1
      %v904 = vsel %vm891, %v901, %v903
      %v905 = vrot.slane %v879, 1
      %v906 = vsel %vm891, %v903, %v905
      %v907 = vrot.slane %v880, 1
      %v908 = vsel %vm891, %v905, %v907
      %v909 = vrot.slane %v881, 1
      %v910 = vsel %vm891, %v907, %v909
      %v911 = vrot.slane %v882, 1
      %v912 = vsel %vm891, %v909, %v911
      %v913 = vrot.slane %v883, 1
      %v914 = vsel %vm891, %v911, %v913
      %v915 = vrot.slane %v884, 1
      %v916 = vsel %vm891, %v913, %v915
      %v917 = vrot.slane %v885, 1
      %v918 = vsel %vm891, %v915, %v917
      %v919 = vrot.slane %v886, 1
      %v920 = vsel %vm891, %v917, %v919
      %v921 = vrot.slane %v887, 1
      %v922 = vsel %vm891, %v919, %v921
      %v923 = vrot.slane %v888, 1
      %v924 = vsel %vm891, %v921, %v923
      %v925 = vrot.slane %v889, 1
      %v926 = vsel %vm891, %v923, %v925
      %v927 = vrot.slane %v890, 1
      %v928 = vsel %vm891, %v925, %v927
      %929 = vrot.lane.b32.xlu0 %v894, 16
      %v930 = vpop.permute.xlu0 %929
      %931 = vrot.lane.b32.xlu0 %v896, 16
      %v932 = vpop.permute.xlu0 %931
      %933 = vrot.lane.b32.xlu0 %v898, 16
      %v934 = vpop.permute.xlu0 %933
      %935 = vrot.lane.b32.xlu0 %v900, 16
      %v936 = vpop.permute.xlu0 %935
      %937 = vrot.lane.b32.xlu0 %v902, 16
      %v938 = vpop.permute.xlu0 %937
      %939 = vrot.lane.b32.xlu0 %v904, 16
      %v940 = vpop.permute.xlu0 %939
      %941 = vrot.lane.b32.xlu0 %v906, 16
      %v942 = vpop.permute.xlu0 %941
      %943 = vrot.lane.b32.xlu0 %v908, 16
      %v944 = vpop.permute.xlu0 %943
      %945 = vrot.lane.b32.xlu0 %v910, 16
      %v946 = vpop.permute.xlu0 %945
      %947 = vrot.lane.b32.xlu0 %v912, 16
      %v948 = vpop.permute.xlu0 %947
      %949 = vrot.lane.b32.xlu0 %v914, 16
      %v950 = vpop.permute.xlu0 %949
      %951 = vrot.lane.b32.xlu0 %v916, 16
      %v952 = vpop.permute.xlu0 %951
      %953 = vrot.lane.b32.xlu0 %v918, 16
      %v954 = vpop.permute.xlu0 %953
      %955 = vrot.lane.b32.xlu0 %v920, 16
      %v956 = vpop.permute.xlu0 %955
      %957 = vrot.lane.b32.xlu0 %v922, 16
      %v958 = vpop.permute.xlu0 %957
      %959 = vrot.lane.b32.xlu0 %v924, 16
      %v960 = vpop.permute.xlu0 %959
      %961 = vrot.lane.b32.xlu0 %v926, 16
      %v962 = vpop.permute.xlu0 %961
      %963 = vrot.lane.b32.xlu0 %v928, 16
      %v964 = vpop.permute.xlu0 %963
      %vm983 = vcmask 195712
      %984 = vst.msk [vmem:[#allocation2] sm:$0xff] %vm983, %v930
      %985 = vst.msk [vmem:[#allocation2 + $0x8] sm:$0xff] %vm983, %v932
      %986 = vst.msk [vmem:[#allocation2 + $0x10] sm:$0xff] %vm983, %v934
      %987 = vst.msk [vmem:[#allocation2 + $0x18] sm:$0xff] %vm983, %v936
      %988 = vst.msk [vmem:[#allocation2 + $0x20] sm:$0xff] %vm983, %v938
      %989 = vst.msk [vmem:[#allocation2 + $0x28] sm:$0xff] %vm983, %v940
      %990 = vst.msk [vmem:[#allocation2 + $0x30] sm:$0xff] %vm983, %v942
      %991 = vst.msk [vmem:[#allocation2 + $0x38] sm:$0xff] %vm983, %v944
      %992 = vst.msk [vmem:[#allocation2 + $0x40] sm:$0xff] %vm983, %v946
      %993 = vst.msk [vmem:[#allocation2 + $0x48] sm:$0xff] %vm983, %v948
      %994 = vst.msk [vmem:[#allocation2 + $0x50] sm:$0xff] %vm983, %v950
      %995 = vst.msk [vmem:[#allocation2 + $0x58] sm:$0xff] %vm983, %v952
      %996 = vst.msk [vmem:[#allocation2 + $0x60] sm:$0xff] %vm983, %v954
      %997 = vst.msk [vmem:[#allocation2 + $0x68] sm:$0xff] %vm983, %v956
      %998 = vst.msk [vmem:[#allocation2 + $0x70] sm:$0xff] %vm983, %v958
      %999 = vst.msk [vmem:[#allocation2 + $0x78] sm:$0xff] %vm983, %v960
      %1000 = vst.msk [vmem:[#allocation2 + $0x80] sm:$0xff] %vm983, %v962
      %1001 = vst.msk [vmem:[#allocation2 + $0x88] sm:$0xff] %vm983, %v964
      %v1002 = vld [vmem:[%s231 + $0x8] sm:$0xe]
      %v1003 = vld [vmem:[%s231 + $0xc] sm:$0xf]
      %v1004 = vld [vmem:[%s231 + $0x10] sm:$0xf]
      %v1005 = vld [vmem:[%s231 + $0x14] sm:$0xf]
      %v1006 = vld [vmem:[%s231 + $0x18] sm:$0xf]
      %v1007 = vld [vmem:[%s231 + $0x1c] sm:$0xf]
      %v1008 = vld [vmem:[%s231 + $0x20] sm:$0xf]
      %v1009 = vld [vmem:[%s231 + $0x24] sm:$0xf]
      %v1010 = vld [vmem:[%s231 + $0x28] sm:$0xf]
      %v1011 = vld [vmem:[%s231 + $0x2c] sm:$0xf]
      %v1012 = vld [vmem:[%s231 + $0x30] sm:$0xf]
      %v1013 = vld [vmem:[%s231 + $0x34] sm:$0xf]
      %v1014 = vld [vmem:[%s231 + $0x38] sm:$0xf]
      %v1015 = vld [vmem:[%s231 + $0x3c] sm:$0xf]
      %v1016 = vld [vmem:[%s231 + $0x40] sm:$0xf]
      %v1017 = vld [vmem:[%s231 + $0x44] sm:$0xf]
      %v1018 = vld [vmem:[%s231 + $0x48] sm:$0xf]
      %v1019 = vld [vmem:[%s231 + $0x4c] sm:$0xf]
      %v1020 = vld [vmem:[%s231 + $0x50] sm:$0xf]
      %v1021 = vld [vmem:[%s231 + $0x54] sm:$0xf]
      %v1022 = vld [vmem:[%s231 + $0x58] sm:$0xf]
      %v1023 = vld [vmem:[%s231 + $0x5c] sm:$0xf]
      %v1024 = vld [vmem:[%s231 + $0x60] sm:$0xf]
      %v1025 = vld [vmem:[%s231 + $0x64] sm:$0xf]
      %v1026 = vld [vmem:[%s231 + $0x68] sm:$0xf]
      %v1027 = vld [vmem:[%s231 + $0x6c] sm:$0xf]
      %v1028 = vld [vmem:[%s231 + $0x70] sm:$0xf]
      %v1029 = vld [vmem:[%s231 + $0x74] sm:$0xf]
      %v1030 = vld [vmem:[%s231 + $0x78] sm:$0xf]
      %v1031 = vld [vmem:[%s231 + $0x7c] sm:$0xf]
      %v1032 = vld [vmem:[%s231 + $0x80] sm:$0xf]
      %v1033 = vld [vmem:[%s231 + $0x84] sm:$0xf]
      %v1034 = vld [vmem:[%s231 + $0x88] sm:$0xf]
      %v1035 = vld [vmem:[%s231 + $0x8c] sm:$0xf]
      %v1036 = vld [vmem:[%s231 + $0x90] sm:$0xf]
      %v1037 = vld [vmem:[%s231 + $0x94] sm:$0xf]
      %v1038 = vld [vmem:[%s231 + $0x98] sm:$0x1]
      %v1076 = vunpack.c.l.b16 %v1002
      %v1077 = vunpack.c.l.b16 %v1003
      %v1078 = vunpack.c.l.b16 %v1004
      %v1079 = vunpack.c.l.b16 %v1005
      %v1080 = vunpack.c.l.b16 %v1006
      %v1081 = vunpack.c.l.b16 %v1007
      %v1082 = vunpack.c.l.b16 %v1008
      %v1083 = vunpack.c.l.b16 %v1009
      %v1084 = vunpack.c.l.b16 %v1010
      %v1085 = vunpack.c.l.b16 %v1011
      %v1086 = vunpack.c.l.b16 %v1012
      %v1087 = vunpack.c.l.b16 %v1013
      %v1088 = vunpack.c.l.b16 %v1014
      %v1089 = vunpack.c.l.b16 %v1015
      %v1090 = vunpack.c.l.b16 %v1016
      %v1091 = vunpack.c.l.b16 %v1017
      %v1092 = vunpack.c.l.b16 %v1018
      %v1093 = vunpack.c.l.b16 %v1019
      %v1094 = vunpack.c.l.b16 %v1020
      %v1095 = vunpack.c.l.b16 %v1021
      %v1096 = vunpack.c.l.b16 %v1022
      %v1097 = vunpack.c.l.b16 %v1023
      %v1098 = vunpack.c.l.b16 %v1024
      %v1099 = vunpack.c.l.b16 %v1025
      %v1100 = vunpack.c.l.b16 %v1026
      %v1101 = vunpack.c.l.b16 %v1027
      %v1102 = vunpack.c.l.b16 %v1028
      %v1103 = vunpack.c.l.b16 %v1029
      %v1104 = vunpack.c.l.b16 %v1030
      %v1105 = vunpack.c.l.b16 %v1031
      %v1106 = vunpack.c.l.b16 %v1032
      %v1107 = vunpack.c.l.b16 %v1033
      %v1108 = vunpack.c.l.b16 %v1034
      %v1109 = vunpack.c.l.b16 %v1035
      %v1110 = vunpack.c.l.b16 %v1036
      %v1111 = vunpack.c.l.b16 %v1037
      %v1112 = vunpack.c.l.b16 %v1038
      %v1113 = vpack.c.b16 %v1077, %v1076
      %v1114 = vpack.c.b16 %v1079, %v1078
      %v1115 = vpack.c.b16 %v1081, %v1080
      %v1116 = vpack.c.b16 %v1083, %v1082
      %v1117 = vpack.c.b16 %v1085, %v1084
      %v1118 = vpack.c.b16 %v1087, %v1086
      %v1119 = vpack.c.b16 %v1089, %v1088
      %v1120 = vpack.c.b16 %v1091, %v1090
      %v1121 = vpack.c.b16 %v1093, %v1092
      %v1122 = vpack.c.b16 %v1095, %v1094
      %v1123 = vpack.c.b16 %v1097, %v1096
      %v1124 = vpack.c.b16 %v1099, %v1098
      %v1125 = vpack.c.b16 %v1101, %v1100
      %v1126 = vpack.c.b16 %v1103, %v1102
      %v1127 = vpack.c.b16 %v1105, %v1104
      %v1128 = vpack.c.b16 %v1107, %v1106
      %v1129 = vpack.c.b16 %v1109, %v1108
      %v1130 = vpack.c.b16 %v1111, %v1110
      %v1131 = vpack.c.b16 %v1112, %v1112
      %v1132 = vrot.slane %v1113, 1
      %v1133 = vrot.slane %v1114, 1
      %v1134 = vsel %vm891, %v1132, %v1133
      %v1135 = vrot.slane %v1115, 1
      %v1136 = vsel %vm891, %v1133, %v1135
      %v1137 = vrot.slane %v1116, 1
      %v1138 = vsel %vm891, %v1135, %v1137
      %v1139 = vrot.slane %v1117, 1
      %v1140 = vsel %vm891, %v1137, %v1139
      %v1141 = vrot.slane %v1118, 1
      %v1142 = vsel %vm891, %v1139, %v1141
      %v1143 = vrot.slane %v1119, 1
      %v1144 = vsel %vm891, %v1141, %v1143
      %v1145 = vrot.slane %v1120, 1
      %v1146 = vsel %vm891, %v1143, %v1145
      %v1147 = vrot.slane %v1121, 1
      %v1148 = vsel %vm891, %v1145, %v1147
      %v1149 = vrot.slane %v1122, 1
      %v1150 = vsel %vm891, %v1147, %v1149
      %v1151 = vrot.slane %v1123, 1
      %v1152 = vsel %vm891, %v1149, %v1151
      %v1153 = vrot.slane %v1124, 1
      %v1154 = vsel %vm891, %v1151, %v1153
      %v1155 = vrot.slane %v1125, 1
      %v1156 = vsel %vm891, %v1153, %v1155
      %v1157 = vrot.slane %v1126, 1
      %v1158 = vsel %vm891, %v1155, %v1157
      %v1159 = vrot.slane %v1127, 1
      %v1160 = vsel %vm891, %v1157, %v1159
      %v1161 = vrot.slane %v1128, 1
      %v1162 = vsel %vm891, %v1159, %v1161
      %v1163 = vrot.slane %v1129, 1
      %v1164 = vsel %vm891, %v1161, %v1163
      %v1165 = vrot.slane %v1130, 1
      %v1166 = vsel %vm891, %v1163, %v1165
      %v1167 = vrot.slane %v1131, 1
      %v1168 = vsel %vm891, %v1165, %v1167
      %1169 = vrot.lane.b32.xlu0 %v1134, 24
      %v1170 = vpop.permute.xlu0 %1169
      %1171 = vrot.lane.b32.xlu0 %v1136, 24
      %v1172 = vpop.permute.xlu0 %1171
      %1173 = vrot.lane.b32.xlu0 %v1138, 24
      %v1174 = vpop.permute.xlu0 %1173
      %1175 = vrot.lane.b32.xlu0 %v1140, 24
      %v1176 = vpop.permute.xlu0 %1175
      %1177 = vrot.lane.b32.xlu0 %v1142, 24
      %v1178 = vpop.permute.xlu0 %1177
      %1179 = vrot.lane.b32.xlu0 %v1144, 24
      %v1180 = vpop.permute.xlu0 %1179
      %1181 = vrot.lane.b32.xlu0 %v1146, 24
      %v1182 = vpop.permute.xlu0 %1181
      %1183 = vrot.lane.b32.xlu0 %v1148, 24
      %v1184 = vpop.permute.xlu0 %1183
      %1185 = vrot.lane.b32.xlu0 %v1150, 24
      %v1186 = vpop.permute.xlu0 %1185
      %1187 = vrot.lane.b32.xlu0 %v1152, 24
      %v1188 = vpop.permute.xlu0 %1187
      %1189 = vrot.lane.b32.xlu0 %v1154, 24
      %v1190 = vpop.permute.xlu0 %1189
      %1191 = vrot.lane.b32.xlu0 %v1156, 24
      %v1192 = vpop.permute.xlu0 %1191
      %1193 = vrot.lane.b32.xlu0 %v1158, 24
      %v1194 = vpop.permute.xlu0 %1193
      %1195 = vrot.lane.b32.xlu0 %v1160, 24
      %v1196 = vpop.permute.xlu0 %1195
      %1197 = vrot.lane.b32.xlu0 %v1162, 24
      %v1198 = vpop.permute.xlu0 %1197
      %1199 = vrot.lane.b32.xlu0 %v1164, 24
      %v1200 = vpop.permute.xlu0 %1199
      %1201 = vrot.lane.b32.xlu0 %v1166, 24
      %v1202 = vpop.permute.xlu0 %1201
      %1203 = vrot.lane.b32.xlu0 %v1168, 24
      %v1204 = vpop.permute.xlu0 %1203
      %vm1223 = vcmask 261312
      %1224 = vst.msk [vmem:[#allocation2] sm:$0xff] %vm1223, %v1170
      %1225 = vst.msk [vmem:[#allocation2 + $0x8] sm:$0xff] %vm1223, %v1172
      %1226 = vst.msk [vmem:[#allocation2 + $0x10] sm:$0xff] %vm1223, %v1174
      %1227 = vst.msk [vmem:[#allocation2 + $0x18] sm:$0xff] %vm1223, %v1176
      %1228 = vst.msk [vmem:[#allocation2 + $0x20] sm:$0xff] %vm1223, %v1178
      %1229 = vst.msk [vmem:[#allocation2 + $0x28] sm:$0xff] %vm1223, %v1180
      %1230 = vst.msk [vmem:[#allocation2 + $0x30] sm:$0xff] %vm1223, %v1182
      %1231 = vst.msk [vmem:[#allocation2 + $0x38] sm:$0xff] %vm1223, %v1184
      %1232 = vst.msk [vmem:[#allocation2 + $0x40] sm:$0xff] %vm1223, %v1186
      %1233 = vst.msk [vmem:[#allocation2 + $0x48] sm:$0xff] %vm1223, %v1188
      %1234 = vst.msk [vmem:[#allocation2 + $0x50] sm:$0xff] %vm1223, %v1190
      %1235 = vst.msk [vmem:[#allocation2 + $0x58] sm:$0xff] %vm1223, %v1192
      %1236 = vst.msk [vmem:[#allocation2 + $0x60] sm:$0xff] %vm1223, %v1194
      %1237 = vst.msk [vmem:[#allocation2 + $0x68] sm:$0xff] %vm1223, %v1196
      %1238 = vst.msk [vmem:[#allocation2 + $0x70] sm:$0xff] %vm1223, %v1198
      %1239 = vst.msk [vmem:[#allocation2 + $0x78] sm:$0xff] %vm1223, %v1200
      %1240 = vst.msk [vmem:[#allocation2 + $0x80] sm:$0xff] %vm1223, %v1202
      %1241 = vst.msk [vmem:[#allocation2 + $0x88] sm:$0xff] %vm1223, %v1204
      %v1242 = vld [vmem:[%s231 + $0x8] sm:$0xe]
      %v1243 = vld [vmem:[%s231 + $0xc] sm:$0xf]
      %v1244 = vld [vmem:[%s231 + $0x10] sm:$0xf]
      %v1245 = vld [vmem:[%s231 + $0x14] sm:$0xf]
      %v1246 = vld [vmem:[%s231 + $0x18] sm:$0xf]
      %v1247 = vld [vmem:[%s231 + $0x1c] sm:$0xf]
      %v1248 = vld [vmem:[%s231 + $0x20] sm:$0xf]
      %v1249 = vld [vmem:[%s231 + $0x24] sm:$0xf]
      %v1250 = vld [vmem:[%s231 + $0x28] sm:$0xf]
      %v1251 = vld [vmem:[%s231 + $0x2c] sm:$0xf]
      %v1252 = vld [vmem:[%s231 + $0x30] sm:$0xf]
      %v1253 = vld [vmem:[%s231 + $0x34] sm:$0xf]
      %v1254 = vld [vmem:[%s231 + $0x38] sm:$0xf]
      %v1255 = vld [vmem:[%s231 + $0x3c] sm:$0xf]
      %v1256 = vld [vmem:[%s231 + $0x40] sm:$0xf]
      %v1257 = vld [vmem:[%s231 + $0x44] sm:$0xf]
      %v1258 = vld [vmem:[%s231 + $0x48] sm:$0xf]
      %v1259 = vld [vmem:[%s231 + $0x4c] sm:$0xf]
      %v1260 = vld [vmem:[%s231 + $0x50] sm:$0xf]
      %v1261 = vld [vmem:[%s231 + $0x54] sm:$0xf]
      %v1262 = vld [vmem:[%s231 + $0x58] sm:$0xf]
      %v1263 = vld [vmem:[%s231 + $0x5c] sm:$0xf]
      %v1264 = vld [vmem:[%s231 + $0x60] sm:$0xf]
      %v1265 = vld [vmem:[%s231 + $0x64] sm:$0xf]
      %v1266 = vld [vmem:[%s231 + $0x68] sm:$0xf]
      %v1267 = vld [vmem:[%s231 + $0x6c] sm:$0xf]
      %v1268 = vld [vmem:[%s231 + $0x70] sm:$0xf]
      %v1269 = vld [vmem:[%s231 + $0x74] sm:$0xf]
      %v1270 = vld [vmem:[%s231 + $0x78] sm:$0xf]
      %v1271 = vld [vmem:[%s231 + $0x7c] sm:$0xf]
      %v1272 = vld [vmem:[%s231 + $0x80] sm:$0xf]
      %v1273 = vld [vmem:[%s231 + $0x84] sm:$0xf]
      %v1274 = vld [vmem:[%s231 + $0x88] sm:$0xf]
      %v1275 = vld [vmem:[%s231 + $0x8c] sm:$0xf]
      %v1276 = vld [vmem:[%s231 + $0x90] sm:$0xf]
      %v1277 = vld [vmem:[%s231 + $0x94] sm:$0xf]
      %v1278 = vld [vmem:[%s231 + $0x98] sm:$0x3]
      %v1316 = vunpack.c.l.b16 %v1242
      %v1317 = vunpack.c.l.b16 %v1243
      %v1318 = vunpack.c.l.b16 %v1244
      %v1319 = vunpack.c.l.b16 %v1245
      %v1320 = vunpack.c.l.b16 %v1246
      %v1321 = vunpack.c.l.b16 %v1247
      %v1322 = vunpack.c.l.b16 %v1248
      %v1323 = vunpack.c.l.b16 %v1249
      %v1324 = vunpack.c.l.b16 %v1250
      %v1325 = vunpack.c.l.b16 %v1251
      %v1326 = vunpack.c.l.b16 %v1252
      %v1327 = vunpack.c.l.b16 %v1253
      %v1328 = vunpack.c.l.b16 %v1254
      %v1329 = vunpack.c.l.b16 %v1255
      %v1330 = vunpack.c.l.b16 %v1256
      %v1331 = vunpack.c.l.b16 %v1257
      %v1332 = vunpack.c.l.b16 %v1258
      %v1333 = vunpack.c.l.b16 %v1259
      %v1334 = vunpack.c.l.b16 %v1260
      %v1335 = vunpack.c.l.b16 %v1261
      %v1336 = vunpack.c.l.b16 %v1262
      %v1337 = vunpack.c.l.b16 %v1263
      %v1338 = vunpack.c.l.b16 %v1264
      %v1339 = vunpack.c.l.b16 %v1265
      %v1340 = vunpack.c.l.b16 %v1266
      %v1341 = vunpack.c.l.b16 %v1267
      %v1342 = vunpack.c.l.b16 %v1268
      %v1343 = vunpack.c.l.b16 %v1269
      %v1344 = vunpack.c.l.b16 %v1270
      %v1345 = vunpack.c.l.b16 %v1271
      %v1346 = vunpack.c.l.b16 %v1272
      %v1347 = vunpack.c.l.b16 %v1273
      %v1348 = vunpack.c.l.b16 %v1274
      %v1349 = vunpack.c.l.b16 %v1275
      %v1350 = vunpack.c.l.b16 %v1276
      %v1351 = vunpack.c.l.b16 %v1277
      %v1352 = vunpack.c.l.b16 %v1278
      %v1353 = vpack.c.b16 %v1317, %v1316
      %v1354 = vpack.c.b16 %v1319, %v1318
      %v1355 = vpack.c.b16 %v1321, %v1320
      %v1356 = vpack.c.b16 %v1323, %v1322
      %v1357 = vpack.c.b16 %v1325, %v1324
      %v1358 = vpack.c.b16 %v1327, %v1326
      %v1359 = vpack.c.b16 %v1329, %v1328
      %v1360 = vpack.c.b16 %v1331, %v1330
      %v1361 = vpack.c.b16 %v1333, %v1332
      %v1362 = vpack.c.b16 %v1335, %v1334
      %v1363 = vpack.c.b16 %v1337, %v1336
      %v1364 = vpack.c.b16 %v1339, %v1338
      %v1365 = vpack.c.b16 %v1341, %v1340
      %v1366 = vpack.c.b16 %v1343, %v1342
      %v1367 = vpack.c.b16 %v1345, %v1344
      %v1368 = vpack.c.b16 %v1347, %v1346
      %v1369 = vpack.c.b16 %v1349, %v1348
      %v1370 = vpack.c.b16 %v1351, %v1350
      %v1371 = vpack.c.b16 %v1352, %v1352
      %vm1372 = vsmask.f32 6400
      %v1374 = vshrl.u32 %v1353, 16
      %v1376 = vrot.slane %v1374, 1
      %v1377 = vshll.u32 %v1353, 16
      %v1379 = vrot.slane %v1377, 2
      %v1380 = vor.u32 %v1376, %v1379
      %v1382 = vshrl.u32 %v1354, 16
      %v1384 = vrot.slane %v1382, 1
      %v1385 = vshll.u32 %v1354, 16
      %v1387 = vrot.slane %v1385, 2
      %v1388 = vor.u32 %v1384, %v1387
      %v1389 = vsel %vm1372, %v1380, %v1388
      %v1391 = vshrl.u32 %v1355, 16
      %v1393 = vrot.slane %v1391, 1
      %v1394 = vshll.u32 %v1355, 16
      %v1396 = vrot.slane %v1394, 2
      %v1397 = vor.u32 %v1393, %v1396
      %v1398 = vsel %vm1372, %v1388, %v1397
      %v1400 = vshrl.u32 %v1356, 16
      %v1402 = vrot.slane %v1400, 1
      %v1403 = vshll.u32 %v1356, 16
      %v1405 = vrot.slane %v1403, 2
      %v1406 = vor.u32 %v1402, %v1405
      %v1407 = vsel %vm1372, %v1397, %v1406
      %v1409 = vshrl.u32 %v1357, 16
      %v1411 = vrot.slane %v1409, 1
      %v1412 = vshll.u32 %v1357, 16
      %v1414 = vrot.slane %v1412, 2
      %v1415 = vor.u32 %v1411, %v1414
      %v1416 = vsel %vm1372, %v1406, %v1415
      %v1418 = vshrl.u32 %v1358, 16
      %v1420 = vrot.slane %v1418, 1
      %v1421 = vshll.u32 %v1358, 16
      %v1423 = vrot.slane %v1421, 2
      %v1424 = vor.u32 %v1420, %v1423
      %v1425 = vsel %vm1372, %v1415, %v1424
      %v1427 = vshrl.u32 %v1359, 16
      %v1429 = vrot.slane %v1427, 1
      %v1430 = vshll.u32 %v1359, 16
      %v1432 = vrot.slane %v1430, 2
      %v1433 = vor.u32 %v1429, %v1432
      %v1434 = vsel %vm1372, %v1424, %v1433
      %v1436 = vshrl.u32 %v1360, 16
      %v1438 = vrot.slane %v1436, 1
      %v1439 = vshll.u32 %v1360, 16
      %v1441 = vrot.slane %v1439, 2
      %v1442 = vor.u32 %v1438, %v1441
      %v1443 = vsel %vm1372, %v1433, %v1442
      %v1445 = vshrl.u32 %v1361, 16
      %v1447 = vrot.slane %v1445, 1
      %v1448 = vshll.u32 %v1361, 16
      %v1450 = vrot.slane %v1448, 2
      %v1451 = vor.u32 %v1447, %v1450
      %v1452 = vsel %vm1372, %v1442, %v1451
      %v1454 = vshrl.u32 %v1362, 16
      %v1456 = vrot.slane %v1454, 1
      %v1457 = vshll.u32 %v1362, 16
      %v1459 = vrot.slane %v1457, 2
      %v1460 = vor.u32 %v1456, %v1459
      %v1461 = vsel %vm1372, %v1451, %v1460
      %v1463 = vshrl.u32 %v1363, 16
      %v1465 = vrot.slane %v1463, 1
      %v1466 = vshll.u32 %v1363, 16
      %v1468 = vrot.slane %v1466, 2
      %v1469 = vor.u32 %v1465, %v1468
      %v1470 = vsel %vm1372, %v1460, %v1469
      %v1472 = vshrl.u32 %v1364, 16
      %v1474 = vrot.slane %v1472, 1
      %v1475 = vshll.u32 %v1364, 16
      %v1477 = vrot.slane %v1475, 2
      %v1478 = vor.u32 %v1474, %v1477
      %v1479 = vsel %vm1372, %v1469, %v1478
      %v1481 = vshrl.u32 %v1365, 16
      %v1483 = vrot.slane %v1481, 1
      %v1484 = vshll.u32 %v1365, 16
      %v1486 = vrot.slane %v1484, 2
      %v1487 = vor.u32 %v1483, %v1486
      %v1488 = vsel %vm1372, %v1478, %v1487
      %v1490 = vshrl.u32 %v1366, 16
      %v1492 = vrot.slane %v1490, 1
      %v1493 = vshll.u32 %v1366, 16
      %v1495 = vrot.slane %v1493, 2
      %v1496 = vor.u32 %v1492, %v1495
      %v1497 = vsel %vm1372, %v1487, %v1496
      %v1499 = vshrl.u32 %v1367, 16
      %v1501 = vrot.slane %v1499, 1
      %v1502 = vshll.u32 %v1367, 16
      %v1504 = vrot.slane %v1502, 2
      %v1505 = vor.u32 %v1501, %v1504
      %v1506 = vsel %vm1372, %v1496, %v1505
      %v1508 = vshrl.u32 %v1368, 16
      %v1510 = vrot.slane %v1508, 1
      %v1511 = vshll.u32 %v1368, 16
      %v1513 = vrot.slane %v1511, 2
      %v1514 = vor.u32 %v1510, %v1513
      %v1515 = vsel %vm1372, %v1505, %v1514
      %v1517 = vshrl.u32 %v1369, 16
      %v1519 = vrot.slane %v1517, 1
      %v1520 = vshll.u32 %v1369, 16
      %v1522 = vrot.slane %v1520, 2
      %v1523 = vor.u32 %v1519, %v1522
      %v1524 = vsel %vm1372, %v1514, %v1523
      %v1526 = vshrl.u32 %v1370, 16
      %v1528 = vrot.slane %v1526, 1
      %v1529 = vshll.u32 %v1370, 16
      %v1531 = vrot.slane %v1529, 2
      %v1532 = vor.u32 %v1528, %v1531
      %v1533 = vsel %vm1372, %v1523, %v1532
      %v1535 = vshrl.u32 %v1371, 16
      %v1537 = vrot.slane %v1535, 1
      %v1538 = vshll.u32 %v1371, 16
      %v1540 = vrot.slane %v1538, 2
      %v1541 = vor.u32 %v1537, %v1540
      %v1542 = vsel %vm1372, %v1532, %v1541
      %1543 = vrot.lane.b32.xlu0 %v1389, 32
      %v1544 = vpop.permute.xlu0 %1543
      %1545 = vrot.lane.b32.xlu0 %v1398, 32
      %v1546 = vpop.permute.xlu0 %1545
      %1547 = vrot.lane.b32.xlu0 %v1407, 32
      %v1548 = vpop.permute.xlu0 %1547
      %1549 = vrot.lane.b32.xlu0 %v1416, 32
      %v1550 = vpop.permute.xlu0 %1549
      %1551 = vrot.lane.b32.xlu0 %v1425, 32
      %v1552 = vpop.permute.xlu0 %1551
      %1553 = vrot.lane.b32.xlu0 %v1434, 32
      %v1554 = vpop.permute.xlu0 %1553
      %1555 = vrot.lane.b32.xlu0 %v1443, 32
      %v1556 = vpop.permute.xlu0 %1555
      %1557 = vrot.lane.b32.xlu0 %v1452, 32
      %v1558 = vpop.permute.xlu0 %1557
      %1559 = vrot.lane.b32.xlu0 %v1461, 32
      %v1560 = vpop.permute.xlu0 %1559
      %1561 = vrot.lane.b32.xlu0 %v1470, 32
      %v1562 = vpop.permute.xlu0 %1561
      %1563 = vrot.lane.b32.xlu0 %v1479, 32
      %v1564 = vpop.permute.xlu0 %1563
      %1565 = vrot.lane.b32.xlu0 %v1488, 32
      %v1566 = vpop.permute.xlu0 %1565
      %1567 = vrot.lane.b32.xlu0 %v1497, 32
      %v1568 = vpop.permute.xlu0 %1567
      %1569 = vrot.lane.b32.xlu0 %v1506, 32
      %v1570 = vpop.permute.xlu0 %1569
      %1571 = vrot.lane.b32.xlu0 %v1515, 32
      %v1572 = vpop.permute.xlu0 %1571
      %1573 = vrot.lane.b32.xlu0 %v1524, 32
      %v1574 = vpop.permute.xlu0 %1573
      %1575 = vrot.lane.b32.xlu0 %v1533, 32
      %v1576 = vpop.permute.xlu0 %1575
      %1577 = vrot.lane.b32.xlu0 %v1542, 32
      %v1578 = vpop.permute.xlu0 %1577
      %vm1597 = vcmask 326912
      %1598 = vst.msk [vmem:[#allocation2] sm:$0xff] %vm1597, %v1544
      %1599 = vst.msk [vmem:[#allocation2 + $0x8] sm:$0xff] %vm1597, %v1546
      %1600 = vst.msk [vmem:[#allocation2 + $0x10] sm:$0xff] %vm1597, %v1548
      %1601 = vst.msk [vmem:[#allocation2 + $0x18] sm:$0xff] %vm1597, %v1550
      %1602 = vst.msk [vmem:[#allocation2 + $0x20] sm:$0xff] %vm1597, %v1552
      %1603 = vst.msk [vmem:[#allocation2 + $0x28] sm:$0xff] %vm1597, %v1554
      %1604 = vst.msk [vmem:[#allocation2 + $0x30] sm:$0xff] %vm1597, %v1556
      %1605 = vst.msk [vmem:[#allocation2 + $0x38] sm:$0xff] %vm1597, %v1558
      %1606 = vst.msk [vmem:[#allocation2 + $0x40] sm:$0xff] %vm1597, %v1560
      %1607 = vst.msk [vmem:[#allocation2 + $0x48] sm:$0xff] %vm1597, %v1562
      %1608 = vst.msk [vmem:[#allocation2 + $0x50] sm:$0xff] %vm1597, %v1564
      %1609 = vst.msk [vmem:[#allocation2 + $0x58] sm:$0xff] %vm1597, %v1566
      %1610 = vst.msk [vmem:[#allocation2 + $0x60] sm:$0xff] %vm1597, %v1568
      %1611 = vst.msk [vmem:[#allocation2 + $0x68] sm:$0xff] %vm1597, %v1570
      %1612 = vst.msk [vmem:[#allocation2 + $0x70] sm:$0xff] %vm1597, %v1572
      %1613 = vst.msk [vmem:[#allocation2 + $0x78] sm:$0xff] %vm1597, %v1574
      %1614 = vst.msk [vmem:[#allocation2 + $0x80] sm:$0xff] %vm1597, %v1576
      %1615 = vst.msk [vmem:[#allocation2 + $0x88] sm:$0xff] %vm1597, %v1578
      %v1616 = vld [vmem:[%s231 + $0x8] sm:$0xc]
      %v1617 = vld [vmem:[%s231 + $0xc] sm:$0xf]
      %v1618 = vld [vmem:[%s231 + $0x10] sm:$0xf]
      %v1619 = vld [vmem:[%s231 + $0x14] sm:$0xf]
      %v1620 = vld [vmem:[%s231 + $0x18] sm:$0xf]
      %v1621 = vld [vmem:[%s231 + $0x1c] sm:$0xf]
      %v1622 = vld [vmem:[%s231 + $0x20] sm:$0xf]
      %v1623 = vld [vmem:[%s231 + $0x24] sm:$0xf]
      %v1624 = vld [vmem:[%s231 + $0x28] sm:$0xf]
      %v1625 = vld [vmem:[%s231 + $0x2c] sm:$0xf]
      %v1626 = vld [vmem:[%s231 + $0x30] sm:$0xf]
      %v1627 = vld [vmem:[%s231 + $0x34] sm:$0xf]
      %v1628 = vld [vmem:[%s231 + $0x38] sm:$0xf]
      %v1629 = vld [vmem:[%s231 + $0x3c] sm:$0xf]
      %v1630 = vld [vmem:[%s231 + $0x40] sm:$0xf]
      %v1631 = vld [vmem:[%s231 + $0x44] sm:$0xf]
      %v1632 = vld [vmem:[%s231 + $0x48] sm:$0xf]
      %v1633 = vld [vmem:[%s231 + $0x4c] sm:$0xf]
      %v1634 = vld [vmem:[%s231 + $0x50] sm:$0xf]
      %v1635 = vld [vmem:[%s231 + $0x54] sm:$0xf]
      %v1636 = vld [vmem:[%s231 + $0x58] sm:$0xf]
      %v1637 = vld [vmem:[%s231 + $0x5c] sm:$0xf]
      %v1638 = vld [vmem:[%s231 + $0x60] sm:$0xf]
      %v1639 = vld [vmem:[%s231 + $0x64] sm:$0xf]
      %v1640 = vld [vmem:[%s231 + $0x68] sm:$0xf]
      %v1641 = vld [vmem:[%s231 + $0x6c] sm:$0xf]
      %v1642 = vld [vmem:[%s231 + $0x70] sm:$0xf]
      %v1643 = vld [vmem:[%s231 + $0x74] sm:$0xf]
      %v1644 = vld [vmem:[%s231 + $0x78] sm:$0xf]
      %v1645 = vld [vmem:[%s231 + $0x7c] sm:$0xf]
      %v1646 = vld [vmem:[%s231 + $0x80] sm:$0xf]
      %v1647 = vld [vmem:[%s231 + $0x84] sm:$0xf]
      %v1648 = vld [vmem:[%s231 + $0x88] sm:$0xf]
      %v1649 = vld [vmem:[%s231 + $0x8c] sm:$0xf]
      %v1650 = vld [vmem:[%s231 + $0x90] sm:$0xf]
      %v1651 = vld [vmem:[%s231 + $0x94] sm:$0xf]
      %v1652 = vld [vmem:[%s231 + $0x98] sm:$0x3]
      %v1690 = vunpack.c.l.b16 %v1616
      %v1691 = vunpack.c.l.b16 %v1617
      %v1692 = vunpack.c.l.b16 %v1618
      %v1693 = vunpack.c.l.b16 %v1619
      %v1694 = vunpack.c.l.b16 %v1620
      %v1695 = vunpack.c.l.b16 %v1621
      %v1696 = vunpack.c.l.b16 %v1622
      %v1697 = vunpack.c.l.b16 %v1623
      %v1698 = vunpack.c.l.b16 %v1624
      %v1699 = vunpack.c.l.b16 %v1625
      %v1700 = vunpack.c.l.b16 %v1626
      %v1701 = vunpack.c.l.b16 %v1627
      %v1702 = vunpack.c.l.b16 %v1628
      %v1703 = vunpack.c.l.b16 %v1629
      %v1704 = vunpack.c.l.b16 %v1630
      %v1705 = vunpack.c.l.b16 %v1631
      %v1706 = vunpack.c.l.b16 %v1632
      %v1707 = vunpack.c.l.b16 %v1633
      %v1708 = vunpack.c.l.b16 %v1634
      %v1709 = vunpack.c.l.b16 %v1635
      %v1710 = vunpack.c.l.b16 %v1636
      %v1711 = vunpack.c.l.b16 %v1637
      %v1712 = vunpack.c.l.b16 %v1638
      %v1713 = vunpack.c.l.b16 %v1639
      %v1714 = vunpack.c.l.b16 %v1640
      %v1715 = vunpack.c.l.b16 %v1641
      %v1716 = vunpack.c.l.b16 %v1642
      %v1717 = vunpack.c.l.b16 %v1643
      %v1718 = vunpack.c.l.b16 %v1644
      %v1719 = vunpack.c.l.b16 %v1645
      %v1720 = vunpack.c.l.b16 %v1646
      %v1721 = vunpack.c.l.b16 %v1647
      %v1722 = vunpack.c.l.b16 %v1648
      %v1723 = vunpack.c.l.b16 %v1649
      %v1724 = vunpack.c.l.b16 %v1650
      %v1725 = vunpack.c.l.b16 %v1651
      %v1726 = vunpack.c.l.b16 %v1652
      %v1727 = vpack.c.b16 %v1691, %v1690
      %v1728 = vpack.c.b16 %v1693, %v1692
      %v1729 = vpack.c.b16 %v1695, %v1694
      %v1730 = vpack.c.b16 %v1697, %v1696
      %v1731 = vpack.c.b16 %v1699, %v1698
      %v1732 = vpack.c.b16 %v1701, %v1700
      %v1733 = vpack.c.b16 %v1703, %v1702
      %v1734 = vpack.c.b16 %v1705, %v1704
      %v1735 = vpack.c.b16 %v1707, %v1706
      %v1736 = vpack.c.b16 %v1709, %v1708
      %v1737 = vpack.c.b16 %v1711, %v1710
      %v1738 = vpack.c.b16 %v1713, %v1712
      %v1739 = vpack.c.b16 %v1715, %v1714
      %v1740 = vpack.c.b16 %v1717, %v1716
      %v1741 = vpack.c.b16 %v1719, %v1718
      %v1742 = vpack.c.b16 %v1721, %v1720
      %v1743 = vpack.c.b16 %v1723, %v1722
      %v1744 = vpack.c.b16 %v1725, %v1724
      %v1745 = vpack.c.b16 %v1726, %v1726
      %vm1746 = vcmask 1045504
      %v1747 = vrot.slane %v1727, 2
      %v1748 = vrot.slane %v1728, 2
      %v1749 = vsel %vm1746, %v1747, %v1748
      %v1750 = vrot.slane %v1729, 2
      %v1751 = vsel %vm1746, %v1748, %v1750
      %v1752 = vrot.slane %v1730, 2
      %v1753 = vsel %vm1746, %v1750, %v1752
      %v1754 = vrot.slane %v1731, 2
      %v1755 = vsel %vm1746, %v1752, %v1754
      %v1756 = vrot.slane %v1732, 2
      %v1757 = vsel %vm1746, %v1754, %v1756
      %v1758 = vrot.slane %v1733, 2
      %v1759 = vsel %vm1746, %v1756, %v1758
      %v1760 = vrot.slane %v1734, 2
      %v1761 = vsel %vm1746, %v1758, %v1760
      %v1762 = vrot.slane %v1735, 2
      %v1763 = vsel %vm1746, %v1760, %v1762
      %v1764 = vrot.slane %v1736, 2
      %v1765 = vsel %vm1746, %v1762, %v1764
      %v1766 = vrot.slane %v1737, 2
      %v1767 = vsel %vm1746, %v1764, %v1766
      %v1768 = vrot.slane %v1738, 2
      %v1769 = vsel %vm1746, %v1766, %v1768
      %v1770 = vrot.slane %v1739, 2
      %v1771 = vsel %vm1746, %v1768, %v1770
      %v1772 = vrot.slane %v1740, 2
      %v1773 = vsel %vm1746, %v1770, %v1772
      %v1774 = vrot.slane %v1741, 2
      %v1775 = vsel %vm1746, %v1772, %v1774
      %v1776 = vrot.slane %v1742, 2
      %v1777 = vsel %vm1746, %v1774, %v1776
      %v1778 = vrot.slane %v1743, 2
      %v1779 = vsel %vm1746, %v1776, %v1778
      %v1780 = vrot.slane %v1744, 2
      %v1781 = vsel %vm1746, %v1778, %v1780
      %v1782 = vrot.slane %v1745, 2
      %v1783 = vsel %vm1746, %v1780, %v1782
      %1784 = vrot.lane.b32.xlu0 %v1749, 40
      %v1785 = vpop.permute.xlu0 %1784
      %1786 = vrot.lane.b32.xlu0 %v1751, 40
      %v1787 = vpop.permute.xlu0 %1786
      %1788 = vrot.lane.b32.xlu0 %v1753, 40
      %v1789 = vpop.permute.xlu0 %1788
      %1790 = vrot.lane.b32.xlu0 %v1755, 40
      %v1791 = vpop.permute.xlu0 %1790
      %1792 = vrot.lane.b32.xlu0 %v1757, 40
      %v1793 = vpop.permute.xlu0 %1792
      %1794 = vrot.lane.b32.xlu0 %v1759, 40
      %v1795 = vpop.permute.xlu0 %1794
      %1796 = vrot.lane.b32.xlu0 %v1761, 40
      %v1797 = vpop.permute.xlu0 %1796
      %1798 = vrot.lane.b32.xlu0 %v1763, 40
      %v1799 = vpop.permute.xlu0 %1798
      %1800 = vrot.lane.b32.xlu0 %v1765, 40
      %v1801 = vpop.permute.xlu0 %1800
      %1802 = vrot.lane.b32.xlu0 %v1767, 40
      %v1803 = vpop.permute.xlu0 %1802
      %1804 = vrot.lane.b32.xlu0 %v1769, 40
      %v1805 = vpop.permute.xlu0 %1804
      %1806 = vrot.lane.b32.xlu0 %v1771, 40
      %v1807 = vpop.permute.xlu0 %1806
      %1808 = vrot.lane.b32.xlu0 %v1773, 40
      %v1809 = vpop.permute.xlu0 %1808
      %1810 = vrot.lane.b32.xlu0 %v1775, 40
      %v1811 = vpop.permute.xlu0 %1810
      %1812 = vrot.lane.b32.xlu0 %v1777, 40
      %v1813 = vpop.permute.xlu0 %1812
      %1814 = vrot.lane.b32.xlu0 %v1779, 40
      %v1815 = vpop.permute.xlu0 %1814
      %1816 = vrot.lane.b32.xlu0 %v1781, 40
      %v1817 = vpop.permute.xlu0 %1816
      %1818 = vrot.lane.b32.xlu0 %v1783, 40
      %v1819 = vpop.permute.xlu0 %1818
      %vm1838 = vcmask 392512
      %1839 = vst.msk [vmem:[#allocation2] sm:$0xff] %vm1838, %v1785
      %1840 = vst.msk [vmem:[#allocation2 + $0x8] sm:$0xff] %vm1838, %v1787
      %1841 = vst.msk [vmem:[#allocation2 + $0x10] sm:$0xff] %vm1838, %v1789
      %1842 = vst.msk [vmem:[#allocation2 + $0x18] sm:$0xff] %vm1838, %v1791
      %1843 = vst.msk [vmem:[#allocation2 + $0x20] sm:$0xff] %vm1838, %v1793
      %1844 = vst.msk [vmem:[#allocation2 + $0x28] sm:$0xff] %vm1838, %v1795
      %1845 = vst.msk [vmem:[#allocation2 + $0x30] sm:$0xff] %vm1838, %v1797
      %1846 = vst.msk [vmem:[#allocation2 + $0x38] sm:$0xff] %vm1838, %v1799
      %1847 = vst.msk [vmem:[#allocation2 + $0x40] sm:$0xff] %vm1838, %v1801
      %1848 = vst.msk [vmem:[#allocation2 + $0x48] sm:$0xff] %vm1838, %v1803
      %1849 = vst.msk [vmem:[#allocation2 + $0x50] sm:$0xff] %vm1838, %v1805
      %1850 = vst.msk [vmem:[#allocation2 + $0x58] sm:$0xff] %vm1838, %v1807
      %1851 = vst.msk [vmem:[#allocation2 + $0x60] sm:$0xff] %vm1838, %v1809
      %1852 = vst.msk [vmem:[#allocation2 + $0x68] sm:$0xff] %vm1838, %v1811
      %1853 = vst.msk [vmem:[#allocation2 + $0x70] sm:$0xff] %vm1838, %v1813
      %1854 = vst.msk [vmem:[#allocation2 + $0x78] sm:$0xff] %vm1838, %v1815
      %1855 = vst.msk [vmem:[#allocation2 + $0x80] sm:$0xff] %vm1838, %v1817
      %1856 = vst.msk [vmem:[#allocation2 + $0x88] sm:$0xff] %vm1838, %v1819
      %v1857 = vld [vmem:[%s231 + $0x10] sm:$0xc]
      %v1858 = vld [vmem:[%s231 + $0x14] sm:$0xf]
      %v1859 = vld [vmem:[%s231 + $0x18] sm:$0xf]
      %v1860 = vld [vmem:[%s231 + $0x1c] sm:$0xf]
      %v1861 = vld [vmem:[%s231 + $0x20] sm:$0xf]
      %v1862 = vld [vmem:[%s231 + $0x24] sm:$0xf]
      %v1863 = vld [vmem:[%s231 + $0x28] sm:$0xf]
      %v1864 = vld [vmem:[%s231 + $0x2c] sm:$0xf]
      %v1865 = vld [vmem:[%s231 + $0x30] sm:$0xf]
      %v1866 = vld [vmem:[%s231 + $0x34] sm:$0xf]
      %v1867 = vld [vmem:[%s231 + $0x38] sm:$0xf]
      %v1868 = vld [vmem:[%s231 + $0x3c] sm:$0xf]
      %v1869 = vld [vmem:[%s231 + $0x40] sm:$0xf]
      %v1870 = vld [vmem:[%s231 + $0x44] sm:$0xf]
      %v1871 = vld [vmem:[%s231 + $0x48] sm:$0xf]
      %v1872 = vld [vmem:[%s231 + $0x4c] sm:$0xf]
      %v1873 = vld [vmem:[%s231 + $0x50] sm:$0xf]
      %v1874 = vld [vmem:[%s231 + $0x54] sm:$0xf]
      %v1875 = vld [vmem:[%s231 + $0x58] sm:$0xf]
      %v1876 = vld [vmem:[%s231 + $0x5c] sm:$0xf]
      %v1877 = vld [vmem:[%s231 + $0x60] sm:$0xf]
      %v1878 = vld [vmem:[%s231 + $0x64] sm:$0xf]
      %v1879 = vld [vmem:[%s231 + $0x68] sm:$0xf]
      %v1880 = vld [vmem:[%s231 + $0x6c] sm:$0xf]
      %v1881 = vld [vmem:[%s231 + $0x70] sm:$0xf]
      %v1882 = vld [vmem:[%s231 + $0x74] sm:$0xf]
      %v1883 = vld [vmem:[%s231 + $0x78] sm:$0xf]
      %v1884 = vld [vmem:[%s231 + $0x7c] sm:$0xf]
      %v1885 = vld [vmem:[%s231 + $0x80] sm:$0xf]
      %v1886 = vld [vmem:[%s231 + $0x84] sm:$0xf]
      %v1887 = vld [vmem:[%s231 + $0x88] sm:$0xf]
      %v1888 = vld [vmem:[%s231 + $0x8c] sm:$0xf]
      %v1889 = vld [vmem:[%s231 + $0x90] sm:$0xf]
      %v1890 = vld [vmem:[%s231 + $0x94] sm:$0xf]
      %v1891 = vld [vmem:[%s231 + $0x98] sm:$0xf]
      %v1892 = vld [vmem:[%s231 + $0x9c] sm:$0xf]
      %v1893 = vld [vmem:[%s231 + $0xa0] sm:$0x3]
      %v1931 = vunpack.c.l.b16 %v1857
      %v1932 = vunpack.c.l.b16 %v1858
      %v1933 = vunpack.c.l.b16 %v1859
      %v1934 = vunpack.c.l.b16 %v1860
      %v1935 = vunpack.c.l.b16 %v1861
      %v1936 = vunpack.c.l.b16 %v1862
      %v1937 = vunpack.c.l.b16 %v1863
      %v1938 = vunpack.c.l.b16 %v1864
      %v1939 = vunpack.c.l.b16 %v1865
      %v1940 = vunpack.c.l.b16 %v1866
      %v1941 = vunpack.c.l.b16 %v1867
      %v1942 = vunpack.c.l.b16 %v1868
      %v1943 = vunpack.c.l.b16 %v1869
      %v1944 = vunpack.c.l.b16 %v1870
      %v1945 = vunpack.c.l.b16 %v1871
      %v1946 = vunpack.c.l.b16 %v1872
      %v1947 = vunpack.c.l.b16 %v1873
      %v1948 = vunpack.c.l.b16 %v1874
      %v1949 = vunpack.c.l.b16 %v1875
      %v1950 = vunpack.c.l.b16 %v1876
      %v1951 = vunpack.c.l.b16 %v1877
      %v1952 = vunpack.c.l.b16 %v1878
      %v1953 = vunpack.c.l.b16 %v1879
      %v1954 = vunpack.c.l.b16 %v1880
      %v1955 = vunpack.c.l.b16 %v1881
      %v1956 = vunpack.c.l.b16 %v1882
      %v1957 = vunpack.c.l.b16 %v1883
      %v1958 = vunpack.c.l.b16 %v1884
      %v1959 = vunpack.c.l.b16 %v1885
      %v1960 = vunpack.c.l.b16 %v1886
      %v1961 = vunpack.c.l.b16 %v1887
      %v1962 = vunpack.c.l.b16 %v1888
      %v1963 = vunpack.c.l.b16 %v1889
      %v1964 = vunpack.c.l.b16 %v1890
      %v1965 = vunpack.c.l.b16 %v1891
      %v1966 = vunpack.c.l.b16 %v1892
      %v1967 = vunpack.c.l.b16 %v1893
      %v1968 = vpack.c.b16 %v1932, %v1931
      %v1969 = vpack.c.b16 %v1934, %v1933
      %v1970 = vpack.c.b16 %v1936, %v1935
      %v1971 = vpack.c.b16 %v1938, %v1937
      %v1972 = vpack.c.b16 %v1940, %v1939
      %v1973 = vpack.c.b16 %v1942, %v1941
      %v1974 = vpack.c.b16 %v1944, %v1943
      %v1975 = vpack.c.b16 %v1946, %v1945
      %v1976 = vpack.c.b16 %v1948, %v1947
      %v1977 = vpack.c.b16 %v1950, %v1949
      %v1978 = vpack.c.b16 %v1952, %v1951
      %v1979 = vpack.c.b16 %v1954, %v1953
      %v1980 = vpack.c.b16 %v1956, %v1955
      %v1981 = vpack.c.b16 %v1958, %v1957
      %v1982 = vpack.c.b16 %v1960, %v1959
      %v1983 = vpack.c.b16 %v1962, %v1961
      %v1984 = vpack.c.b16 %v1964, %v1963
      %v1985 = vpack.c.b16 %v1966, %v1965
      %v1986 = vpack.c.b16 %v1967, %v1967
      %v1987 = vrot.slane %v1968, 2
      %v1988 = vrot.slane %v1969, 2
      %v1989 = vsel %vm1746, %v1987, %v1988
      %v1990 = vrot.slane %v1970, 2
      %v1991 = vsel %vm1746, %v1988, %v1990
      %v1992 = vrot.slane %v1971, 2
      %v1993 = vsel %vm1746, %v1990, %v1992
      %v1994 = vrot.slane %v1972, 2
      %v1995 = vsel %vm1746, %v1992, %v1994
      %v1996 = vrot.slane %v1973, 2
      %v1997 = vsel %vm1746, %v1994, %v1996
      %v1998 = vrot.slane %v1974, 2
      %v1999 = vsel %vm1746, %v1996, %v1998
      %v2000 = vrot.slane %v1975, 2
      %v2001 = vsel %vm1746, %v1998, %v2000
      %v2002 = vrot.slane %v1976, 2
      %v2003 = vsel %vm1746, %v2000, %v2002
      %v2004 = vrot.slane %v1977, 2
      %v2005 = vsel %vm1746, %v2002, %v2004
      %v2006 = vrot.slane %v1978, 2
      %v2007 = vsel %vm1746, %v2004, %v2006
      %v2008 = vrot.slane %v1979, 2
      %v2009 = vsel %vm1746, %v2006, %v2008
      %v2010 = vrot.slane %v1980, 2
      %v2011 = vsel %vm1746, %v2008, %v2010
      %v2012 = vrot.slane %v1981, 2
      %v2013 = vsel %vm1746, %v2010, %v2012
      %v2014 = vrot.slane %v1982, 2
      %v2015 = vsel %vm1746, %v2012, %v2014
      %v2016 = vrot.slane %v1983, 2
      %v2017 = vsel %vm1746, %v2014, %v2016
      %v2018 = vrot.slane %v1984, 2
      %v2019 = vsel %vm1746, %v2016, %v2018
      %v2020 = vrot.slane %v1985, 2
      %v2021 = vsel %vm1746, %v2018, %v2020
      %v2022 = vrot.slane %v1986, 2
      %v2023 = vsel %vm1746, %v2020, %v2022
      %2024 = vrot.lane.b32.xlu0 %v1989, 48
      %v2025 = vpop.permute.xlu0 %2024
      %2026 = vrot.lane.b32.xlu0 %v1991, 48
      %v2027 = vpop.permute.xlu0 %2026
      %2028 = vrot.lane.b32.xlu0 %v1993, 48
      %v2029 = vpop.permute.xlu0 %2028
      %2030 = vrot.lane.b32.xlu0 %v1995, 48
      %v2031 = vpop.permute.xlu0 %2030
      %2032 = vrot.lane.b32.xlu0 %v1997, 48
      %v2033 = vpop.permute.xlu0 %2032
      %2034 = vrot.lane.b32.xlu0 %v1999, 48
      %v2035 = vpop.permute.xlu0 %2034
      %2036 = vrot.lane.b32.xlu0 %v2001, 48
      %v2037 = vpop.permute.xlu0 %2036
      %2038 = vrot.lane.b32.xlu0 %v2003, 48
      %v2039 = vpop.permute.xlu0 %2038
      %2040 = vrot.lane.b32.xlu0 %v2005, 48
      %v2041 = vpop.permute.xlu0 %2040
      %2042 = vrot.lane.b32.xlu0 %v2007, 48
      %v2043 = vpop.permute.xlu0 %2042
      %2044 = vrot.lane.b32.xlu0 %v2009, 48
      %v2045 = vpop.permute.xlu0 %2044
      %2046 = vrot.lane.b32.xlu0 %v2011, 48
      %v2047 = vpop.permute.xlu0 %2046
      %2048 = vrot.lane.b32.xlu0 %v2013, 48
      %v2049 = vpop.permute.xlu0 %2048
      %2050 = vrot.lane.b32.xlu0 %v2015, 48
      %v2051 = vpop.permute.xlu0 %2050
      %2052 = vrot.lane.b32.xlu0 %v2017, 48
      %v2053 = vpop.permute.xlu0 %2052
      %2054 = vrot.lane.b32.xlu0 %v2019, 48
      %v2055 = vpop.permute.xlu0 %2054
      %2056 = vrot.lane.b32.xlu0 %v2021, 48
      %v2057 = vpop.permute.xlu0 %2056
      %2058 = vrot.lane.b32.xlu0 %v2023, 48
      %v2059 = vpop.permute.xlu0 %2058
      %vm2078 = vcmask 458112
      %2079 = vst.msk [vmem:[#allocation2] sm:$0xff] %vm2078, %v2025
      %2080 = vst.msk [vmem:[#allocation2 + $0x8] sm:$0xff] %vm2078, %v2027
      %2081 = vst.msk [vmem:[#allocation2 + $0x10] sm:$0xff] %vm2078, %v2029
      %2082 = vst.msk [vmem:[#allocation2 + $0x18] sm:$0xff] %vm2078, %v2031
      %2083 = vst.msk [vmem:[#allocation2 + $0x20] sm:$0xff] %vm2078, %v2033
      %2084 = vst.msk [vmem:[#allocation2 + $0x28] sm:$0xff] %vm2078, %v2035
      %2085 = vst.msk [vmem:[#allocation2 + $0x30] sm:$0xff] %vm2078, %v2037
      %2086 = vst.msk [vmem:[#allocation2 + $0x38] sm:$0xff] %vm2078, %v2039
      %2087 = vst.msk [vmem:[#allocation2 + $0x40] sm:$0xff] %vm2078, %v2041
      %2088 = vst.msk [vmem:[#allocation2 + $0x48] sm:$0xff] %vm2078, %v2043
      %2089 = vst.msk [vmem:[#allocation2 + $0x50] sm:$0xff] %vm2078, %v2045
      %2090 = vst.msk [vmem:[#allocation2 + $0x58] sm:$0xff] %vm2078, %v2047
      %2091 = vst.msk [vmem:[#allocation2 + $0x60] sm:$0xff] %vm2078, %v2049
      %2092 = vst.msk [vmem:[#allocation2 + $0x68] sm:$0xff] %vm2078, %v2051
      %2093 = vst.msk [vmem:[#allocation2 + $0x70] sm:$0xff] %vm2078, %v2053
      %2094 = vst.msk [vmem:[#allocation2 + $0x78] sm:$0xff] %vm2078, %v2055
      %2095 = vst.msk [vmem:[#allocation2 + $0x80] sm:$0xff] %vm2078, %v2057
      %2096 = vst.msk [vmem:[#allocation2 + $0x88] sm:$0xff] %vm2078, %v2059
      %v2097 = vld [vmem:[%s231 + $0x10] sm:$0xc]
      %v2098 = vld [vmem:[%s231 + $0x14] sm:$0xf]
      %v2099 = vld [vmem:[%s231 + $0x18] sm:$0xf]
      %v2100 = vld [vmem:[%s231 + $0x1c] sm:$0xf]
      %v2101 = vld [vmem:[%s231 + $0x20] sm:$0xf]
      %v2102 = vld [vmem:[%s231 + $0x24] sm:$0xf]
      %v2103 = vld [vmem:[%s231 + $0x28] sm:$0xf]
      %v2104 = vld [vmem:[%s231 + $0x2c] sm:$0xf]
      %v2105 = vld [vmem:[%s231 + $0x30] sm:$0xf]
      %v2106 = vld [vmem:[%s231 + $0x34] sm:$0xf]
      %v2107 = vld [vmem:[%s231 + $0x38] sm:$0xf]
      %v2108 = vld [vmem:[%s231 + $0x3c] sm:$0xf]
      %v2109 = vld [vmem:[%s231 + $0x40] sm:$0xf]
      %v2110 = vld [vmem:[%s231 + $0x44] sm:$0xf]
      %v2111 = vld [vmem:[%s231 + $0x48] sm:$0xf]
      %v2112 = vld [vmem:[%s231 + $0x4c] sm:$0xf]
      %v2113 = vld [vmem:[%s231 + $0x50] sm:$0xf]
      %v2114 = vld [vmem:[%s231 + $0x54] sm:$0xf]
      %v2115 = vld [vmem:[%s231 + $0x58] sm:$0xf]
      %v2116 = vld [vmem:[%s231 + $0x5c] sm:$0xf]
      %v2117 = vld [vmem:[%s231 + $0x60] sm:$0xf]
      %v2118 = vld [vmem:[%s231 + $0x64] sm:$0xf]
      %v2119 = vld [vmem:[%s231 + $0x68] sm:$0xf]
      %v2120 = vld [vmem:[%s231 + $0x6c] sm:$0xf]
      %v2121 = vld [vmem:[%s231 + $0x70] sm:$0xf]
      %v2122 = vld [vmem:[%s231 + $0x74] sm:$0xf]
      %v2123 = vld [vmem:[%s231 + $0x78] sm:$0xf]
      %v2124 = vld [vmem:[%s231 + $0x7c] sm:$0xf]
      %v2125 = vld [vmem:[%s231 + $0x80] sm:$0xf]
      %v2126 = vld [vmem:[%s231 + $0x84] sm:$0xf]
      %v2127 = vld [vmem:[%s231 + $0x88] sm:$0xf]
      %v2128 = vld [vmem:[%s231 + $0x8c] sm:$0xf]
      %v2129 = vld [vmem:[%s231 + $0x90] sm:$0xf]
      %v2130 = vld [vmem:[%s231 + $0x94] sm:$0xf]
      %v2131 = vld [vmem:[%s231 + $0x98] sm:$0xf]
      %v2132 = vld [vmem:[%s231 + $0x9c] sm:$0xf]
      %v2133 = vld [vmem:[%s231 + $0xa0] sm:$0x7]
      %v2171 = vunpack.c.l.b16 %v2097
      %v2172 = vunpack.c.l.b16 %v2098
      %v2173 = vunpack.c.l.b16 %v2099
      %v2174 = vunpack.c.l.b16 %v2100
      %v2175 = vunpack.c.l.b16 %v2101
      %v2176 = vunpack.c.l.b16 %v2102
      %v2177 = vunpack.c.l.b16 %v2103
      %v2178 = vunpack.c.l.b16 %v2104
      %v2179 = vunpack.c.l.b16 %v2105
      %v2180 = vunpack.c.l.b16 %v2106
      %v2181 = vunpack.c.l.b16 %v2107
      %v2182 = vunpack.c.l.b16 %v2108
      %v2183 = vunpack.c.l.b16 %v2109
      %v2184 = vunpack.c.l.b16 %v2110
      %v2185 = vunpack.c.l.b16 %v2111
      %v2186 = vunpack.c.l.b16 %v2112
      %v2187 = vunpack.c.l.b16 %v2113
      %v2188 = vunpack.c.l.b16 %v2114
      %v2189 = vunpack.c.l.b16 %v2115
      %v2190 = vunpack.c.l.b16 %v2116
      %v2191 = vunpack.c.l.b16 %v2117
      %v2192 = vunpack.c.l.b16 %v2118
      %v2193 = vunpack.c.l.b16 %v2119
      %v2194 = vunpack.c.l.b16 %v2120
      %v2195 = vunpack.c.l.b16 %v2121
      %v2196 = vunpack.c.l.b16 %v2122
      %v2197 = vunpack.c.l.b16 %v2123
      %v2198 = vunpack.c.l.b16 %v2124
      %v2199 = vunpack.c.l.b16 %v2125
      %v2200 = vunpack.c.l.b16 %v2126
      %v2201 = vunpack.c.l.b16 %v2127
      %v2202 = vunpack.c.l.b16 %v2128
      %v2203 = vunpack.c.l.b16 %v2129
      %v2204 = vunpack.c.l.b16 %v2130
      %v2205 = vunpack.c.l.b16 %v2131
      %v2206 = vunpack.c.l.b16 %v2132
      %v2207 = vunpack.c.l.b16 %v2133
      %v2208 = vpack.c.b16 %v2172, %v2171
      %v2209 = vpack.c.b16 %v2174, %v2173
      %v2210 = vpack.c.b16 %v2176, %v2175
      %v2211 = vpack.c.b16 %v2178, %v2177
      %v2212 = vpack.c.b16 %v2180, %v2179
      %v2213 = vpack.c.b16 %v2182, %v2181
      %v2214 = vpack.c.b16 %v2184, %v2183
      %v2215 = vpack.c.b16 %v2186, %v2185
      %v2216 = vpack.c.b16 %v2188, %v2187
      %v2217 = vpack.c.b16 %v2190, %v2189
      %v2218 = vpack.c.b16 %v2192, %v2191
      %v2219 = vpack.c.b16 %v2194, %v2193
      %v2220 = vpack.c.b16 %v2196, %v2195
      %v2221 = vpack.c.b16 %v2198, %v2197
      %v2222 = vpack.c.b16 %v2200, %v2199
      %v2223 = vpack.c.b16 %v2202, %v2201
      %v2224 = vpack.c.b16 %v2204, %v2203
      %v2225 = vpack.c.b16 %v2206, %v2205
      %v2226 = vpack.c.b16 %v2207, %v2207
      %vm2227 = vsmask.f32 5376
      %v2229 = vshrl.u32 %v2208, 16
      %v2231 = vrot.slane %v2229, 2
      %v2232 = vshll.u32 %v2208, 16
      %v2234 = vrot.slane %v2232, 3
      %v2235 = vor.u32 %v2231, %v2234
      %v2237 = vshrl.u32 %v2209, 16
      %v2239 = vrot.slane %v2237, 2
      %v2240 = vshll.u32 %v2209, 16
      %v2242 = vrot.slane %v2240, 3
      %v2243 = vor.u32 %v2239, %v2242
      %v2244 = vsel %vm2227, %v2235, %v2243
      %v2246 = vshrl.u32 %v2210, 16
      %v2248 = vrot.slane %v2246, 2
      %v2249 = vshll.u32 %v2210, 16
      %v2251 = vrot.slane %v2249, 3
      %v2252 = vor.u32 %v2248, %v2251
      %v2253 = vsel %vm2227, %v2243, %v2252
      %v2255 = vshrl.u32 %v2211, 16
      %v2257 = vrot.slane %v2255, 2
      %v2258 = vshll.u32 %v2211, 16
      %v2260 = vrot.slane %v2258, 3
      %v2261 = vor.u32 %v2257, %v2260
      %v2262 = vsel %vm2227, %v2252, %v2261
      %v2264 = vshrl.u32 %v2212, 16
      %v2266 = vrot.slane %v2264, 2
      %v2267 = vshll.u32 %v2212, 16
      %v2269 = vrot.slane %v2267, 3
      %v2270 = vor.u32 %v2266, %v2269
      %v2271 = vsel %vm2227, %v2261, %v2270
      %v2273 = vshrl.u32 %v2213, 16
      %v2275 = vrot.slane %v2273, 2
      %v2276 = vshll.u32 %v2213, 16
      %v2278 = vrot.slane %v2276, 3
      %v2279 = vor.u32 %v2275, %v2278
      %v2280 = vsel %vm2227, %v2270, %v2279
      %v2282 = vshrl.u32 %v2214, 16
      %v2284 = vrot.slane %v2282, 2
      %v2285 = vshll.u32 %v2214, 16
      %v2287 = vrot.slane %v2285, 3
      %v2288 = vor.u32 %v2284, %v2287
      %v2289 = vsel %vm2227, %v2279, %v2288
      %v2291 = vshrl.u32 %v2215, 16
      %v2293 = vrot.slane %v2291, 2
      %v2294 = vshll.u32 %v2215, 16
      %v2296 = vrot.slane %v2294, 3
      %v2297 = vor.u32 %v2293, %v2296
      %v2298 = vsel %vm2227, %v2288, %v2297
      %v2300 = vshrl.u32 %v2216, 16
      %v2302 = vrot.slane %v2300, 2
      %v2303 = vshll.u32 %v2216, 16
      %v2305 = vrot.slane %v2303, 3
      %v2306 = vor.u32 %v2302, %v2305
      %v2307 = vsel %vm2227, %v2297, %v2306
      %v2309 = vshrl.u32 %v2217, 16
      %v2311 = vrot.slane %v2309, 2
      %v2312 = vshll.u32 %v2217, 16
      %v2314 = vrot.slane %v2312, 3
      %v2315 = vor.u32 %v2311, %v2314
      %v2316 = vsel %vm2227, %v2306, %v2315
      %v2318 = vshrl.u32 %v2218, 16
      %v2320 = vrot.slane %v2318, 2
      %v2321 = vshll.u32 %v2218, 16
      %v2323 = vrot.slane %v2321, 3
      %v2324 = vor.u32 %v2320, %v2323
      %v2325 = vsel %vm2227, %v2315, %v2324
      %v2327 = vshrl.u32 %v2219, 16
      %v2329 = vrot.slane %v2327, 2
      %v2330 = vshll.u32 %v2219, 16
      %v2332 = vrot.slane %v2330, 3
      %v2333 = vor.u32 %v2329, %v2332
      %v2334 = vsel %vm2227, %v2324, %v2333
      %v2336 = vshrl.u32 %v2220, 16
      %v2338 = vrot.slane %v2336, 2
      %v2339 = vshll.u32 %v2220, 16
      %v2341 = vrot.slane %v2339, 3
      %v2342 = vor.u32 %v2338, %v2341
      %v2343 = vsel %vm2227, %v2333, %v2342
      %v2345 = vshrl.u32 %v2221, 16
      %v2347 = vrot.slane %v2345, 2
      %v2348 = vshll.u32 %v2221, 16
      %v2350 = vrot.slane %v2348, 3
      %v2351 = vor.u32 %v2347, %v2350
      %v2352 = vsel %vm2227, %v2342, %v2351
      %v2354 = vshrl.u32 %v2222, 16
      %v2356 = vrot.slane %v2354, 2
      %v2357 = vshll.u32 %v2222, 16
      %v2359 = vrot.slane %v2357, 3
      %v2360 = vor.u32 %v2356, %v2359
      %v2361 = vsel %vm2227, %v2351, %v2360
      %v2363 = vshrl.u32 %v2223, 16
      %v2365 = vrot.slane %v2363, 2
      %v2366 = vshll.u32 %v2223, 16
      %v2368 = vrot.slane %v2366, 3
      %v2369 = vor.u32 %v2365, %v2368
      %v2370 = vsel %vm2227, %v2360, %v2369
      %v2372 = vshrl.u32 %v2224, 16
      %v2374 = vrot.slane %v2372, 2
      %v2375 = vshll.u32 %v2224, 16
      %v2377 = vrot.slane %v2375, 3
      %v2378 = vor.u32 %v2374, %v2377
      %v2379 = vsel %vm2227, %v2369, %v2378
      %v2381 = vshrl.u32 %v2225, 16
      %v2383 = vrot.slane %v2381, 2
      %v2384 = vshll.u32 %v2225, 16
      %v2386 = vrot.slane %v2384, 3
      %v2387 = vor.u32 %v2383, %v2386
      %v2388 = vsel %vm2227, %v2378, %v2387
      %v2390 = vshrl.u32 %v2226, 16
      %v2392 = vrot.slane %v2390, 2
      %v2393 = vshll.u32 %v2226, 16
      %v2395 = vrot.slane %v2393, 3
      %v2396 = vor.u32 %v2392, %v2395
      %v2397 = vsel %vm2227, %v2387, %v2396
      %2398 = vrot.lane.b32.xlu0 %v2244, 56
      %v2399 = vpop.permute.xlu0 %2398
      %2400 = vrot.lane.b32.xlu0 %v2253, 56
      %v2401 = vpop.permute.xlu0 %2400
      %2402 = vrot.lane.b32.xlu0 %v2262, 56
      %v2403 = vpop.permute.xlu0 %2402
      %2404 = vrot.lane.b32.xlu0 %v2271, 56
      %v2405 = vpop.permute.xlu0 %2404
      %2406 = vrot.lane.b32.xlu0 %v2280, 56
      %v2407 = vpop.permute.xlu0 %2406
      %2408 = vrot.lane.b32.xlu0 %v2289, 56
      %v2409 = vpop.permute.xlu0 %2408
      %2410 = vrot.lane.b32.xlu0 %v2298, 56
      %v2411 = vpop.permute.xlu0 %2410
      %2412 = vrot.lane.b32.xlu0 %v2307, 56
      %v2413 = vpop.permute.xlu0 %2412
      %2414 = vrot.lane.b32.xlu0 %v2316, 56
      %v2415 = vpop.permute.xlu0 %2414
      %2416 = vrot.lane.b32.xlu0 %v2325, 56
      %v2417 = vpop.permute.xlu0 %2416
      %2418 = vrot.lane.b32.xlu0 %v2334, 56
      %v2419 = vpop.permute.xlu0 %2418
      %2420 = vrot.lane.b32.xlu0 %v2343, 56
      %v2421 = vpop.permute.xlu0 %2420
      %2422 = vrot.lane.b32.xlu0 %v2352, 56
      %v2423 = vpop.permute.xlu0 %2422
      %2424 = vrot.lane.b32.xlu0 %v2361, 56
      %v2425 = vpop.permute.xlu0 %2424
      %2426 = vrot.lane.b32.xlu0 %v2370, 56
      %v2427 = vpop.permute.xlu0 %2426
      %2428 = vrot.lane.b32.xlu0 %v2379, 56
      %v2429 = vpop.permute.xlu0 %2428
      %2430 = vrot.lane.b32.xlu0 %v2388, 56
      %v2431 = vpop.permute.xlu0 %2430
      %2432 = vrot.lane.b32.xlu0 %v2397, 56
      %v2433 = vpop.permute.xlu0 %2432
      %vm2452 = vcmask 523712
      %2453 = vst.msk [vmem:[#allocation2] sm:$0xff] %vm2452, %v2399
      %2454 = vst.msk [vmem:[#allocation2 + $0x8] sm:$0xff] %vm2452, %v2401
      %2455 = vst.msk [vmem:[#allocation2 + $0x10] sm:$0xff] %vm2452, %v2403
      %2456 = vst.msk [vmem:[#allocation2 + $0x18] sm:$0xff] %vm2452, %v2405
      %2457 = vst.msk [vmem:[#allocation2 + $0x20] sm:$0xff] %vm2452, %v2407
      %2458 = vst.msk [vmem:[#allocation2 + $0x28] sm:$0xff] %vm2452, %v2409
      %2459 = vst.msk [vmem:[#allocation2 + $0x30] sm:$0xff] %vm2452, %v2411
      %2460 = vst.msk [vmem:[#allocation2 + $0x38] sm:$0xff] %vm2452, %v2413
      %2461 = vst.msk [vmem:[#allocation2 + $0x40] sm:$0xff] %vm2452, %v2415
      %2462 = vst.msk [vmem:[#allocation2 + $0x48] sm:$0xff] %vm2452, %v2417
      %2463 = vst.msk [vmem:[#allocation2 + $0x50] sm:$0xff] %vm2452, %v2419
      %2464 = vst.msk [vmem:[#allocation2 + $0x58] sm:$0xff] %vm2452, %v2421
      %2465 = vst.msk [vmem:[#allocation2 + $0x60] sm:$0xff] %vm2452, %v2423
      %2466 = vst.msk [vmem:[#allocation2 + $0x68] sm:$0xff] %vm2452, %v2425
      %2467 = vst.msk [vmem:[#allocation2 + $0x70] sm:$0xff] %vm2452, %v2427
      %2468 = vst.msk [vmem:[#allocation2 + $0x78] sm:$0xff] %vm2452, %v2429
      %2469 = vst.msk [vmem:[#allocation2 + $0x80] sm:$0xff] %vm2452, %v2431
      %2470 = vst.msk [vmem:[#allocation2 + $0x88] sm:$0xff] %vm2452, %v2433
      %v2471 = vld [vmem:[%s231 + $0x10] sm:$0x8]
      %v2472 = vld [vmem:[%s231 + $0x14] sm:$0xf]
      %v2473 = vld [vmem:[%s231 + $0x18] sm:$0xf]
      %v2474 = vld [vmem:[%s231 + $0x1c] sm:$0xf]
      %v2475 = vld [vmem:[%s231 + $0x20] sm:$0xf]
      %v2476 = vld [vmem:[%s231 + $0x24] sm:$0xf]
      %v2477 = vld [vmem:[%s231 + $0x28] sm:$0xf]
      %v2478 = vld [vmem:[%s231 + $0x2c] sm:$0xf]
      %v2479 = vld [vmem:[%s231 + $0x30] sm:$0xf]
      %v2480 = vld [vmem:[%s231 + $0x34] sm:$0xf]
      %v2481 = vld [vmem:[%s231 + $0x38] sm:$0xf]
      %v2482 = vld [vmem:[%s231 + $0x3c] sm:$0xf]
      %v2483 = vld [vmem:[%s231 + $0x40] sm:$0xf]
      %v2484 = vld [vmem:[%s231 + $0x44] sm:$0xf]
      %v2485 = vld [vmem:[%s231 + $0x48] sm:$0xf]
      %v2486 = vld [vmem:[%s231 + $0x4c] sm:$0xf]
      %v2487 = vld [vmem:[%s231 + $0x50] sm:$0xf]
      %v2488 = vld [vmem:[%s231 + $0x54] sm:$0xf]
      %v2489 = vld [vmem:[%s231 + $0x58] sm:$0xf]
      %v2490 = vld [vmem:[%s231 + $0x5c] sm:$0xf]
      %v2491 = vld [vmem:[%s231 + $0x60] sm:$0xf]
      %v2492 = vld [vmem:[%s231 + $0x64] sm:$0xf]
      %v2493 = vld [vmem:[%s231 + $0x68] sm:$0xf]
      %v2494 = vld [vmem:[%s231 + $0x6c] sm:$0xf]
      %v2495 = vld [vmem:[%s231 + $0x70] sm:$0xf]
      %v2496 = vld [vmem:[%s231 + $0x74] sm:$0xf]
      %v2497 = vld [vmem:[%s231 + $0x78] sm:$0xf]
      %v2498 = vld [vmem:[%s231 + $0x7c] sm:$0xf]
      %v2499 = vld [vmem:[%s231 + $0x80] sm:$0xf]
      %v2500 = vld [vmem:[%s231 + $0x84] sm:$0xf]
      %v2501 = vld [vmem:[%s231 + $0x88] sm:$0xf]
      %v2502 = vld [vmem:[%s231 + $0x8c] sm:$0xf]
      %v2503 = vld [vmem:[%s231 + $0x90] sm:$0xf]
      %v2504 = vld [vmem:[%s231 + $0x94] sm:$0xf]
      %v2505 = vld [vmem:[%s231 + $0x98] sm:$0xf]
      %v2506 = vld [vmem:[%s231 + $0x9c] sm:$0xf]
      %v2507 = vld [vmem:[%s231 + $0xa0] sm:$0x7]
      %v2545 = vunpack.c.l.b16 %v2471
      %v2546 = vunpack.c.l.b16 %v2472
      %v2547 = vunpack.c.l.b16 %v2473
      %v2548 = vunpack.c.l.b16 %v2474
      %v2549 = vunpack.c.l.b16 %v2475
      %v2550 = vunpack.c.l.b16 %v2476
      %v2551 = vunpack.c.l.b16 %v2477
      %v2552 = vunpack.c.l.b16 %v2478
      %v2553 = vunpack.c.l.b16 %v2479
      %v2554 = vunpack.c.l.b16 %v2480
      %v2555 = vunpack.c.l.b16 %v2481
      %v2556 = vunpack.c.l.b16 %v2482
      %v2557 = vunpack.c.l.b16 %v2483
      %v2558 = vunpack.c.l.b16 %v2484
      %v2559 = vunpack.c.l.b16 %v2485
      %v2560 = vunpack.c.l.b16 %v2486
      %v2561 = vunpack.c.l.b16 %v2487
      %v2562 = vunpack.c.l.b16 %v2488
      %v2563 = vunpack.c.l.b16 %v2489
      %v2564 = vunpack.c.l.b16 %v2490
      %v2565 = vunpack.c.l.b16 %v2491
      %v2566 = vunpack.c.l.b16 %v2492
      %v2567 = vunpack.c.l.b16 %v2493
      %v2568 = vunpack.c.l.b16 %v2494
      %v2569 = vunpack.c.l.b16 %v2495
      %v2570 = vunpack.c.l.b16 %v2496
      %v2571 = vunpack.c.l.b16 %v2497
      %v2572 = vunpack.c.l.b16 %v2498
      %v2573 = vunpack.c.l.b16 %v2499
      %v2574 = vunpack.c.l.b16 %v2500
      %v2575 = vunpack.c.l.b16 %v2501
      %v2576 = vunpack.c.l.b16 %v2502
      %v2577 = vunpack.c.l.b16 %v2503
      %v2578 = vunpack.c.l.b16 %v2504
      %v2579 = vunpack.c.l.b16 %v2505
      %v2580 = vunpack.c.l.b16 %v2506
      %v2581 = vunpack.c.l.b16 %v2507
      %v2582 = vpack.c.b16 %v2546, %v2545
      %v2583 = vpack.c.b16 %v2548, %v2547
      %v2584 = vpack.c.b16 %v2550, %v2549
      %v2585 = vpack.c.b16 %v2552, %v2551
      %v2586 = vpack.c.b16 %v2554, %v2553
      %v2587 = vpack.c.b16 %v2556, %v2555
      %v2588 = vpack.c.b16 %v2558, %v2557
      %v2589 = vpack.c.b16 %v2560, %v2559
      %v2590 = vpack.c.b16 %v2562, %v2561
      %v2591 = vpack.c.b16 %v2564, %v2563
      %v2592 = vpack.c.b16 %v2566, %v2565
      %v2593 = vpack.c.b16 %v2568, %v2567
      %v2594 = vpack.c.b16 %v2570, %v2569
      %v2595 = vpack.c.b16 %v2572, %v2571
      %v2596 = vpack.c.b16 %v2574, %v2573
      %v2597 = vpack.c.b16 %v2576, %v2575
      %v2598 = vpack.c.b16 %v2578, %v2577
      %v2599 = vpack.c.b16 %v2580, %v2579
      %v2600 = vpack.c.b16 %v2581, %v2581
      %vm2601 = vcmask 1044480
      %v2602 = vrot.slane %v2582, 3
      %v2603 = vrot.slane %v2583, 3
      %v2604 = vsel %vm2601, %v2602, %v2603
      %v2605 = vrot.slane %v2584, 3
      %v2606 = vsel %vm2601, %v2603, %v2605
      %v2607 = vrot.slane %v2585, 3
      %v2608 = vsel %vm2601, %v2605, %v2607
      %v2609 = vrot.slane %v2586, 3
      %v2610 = vsel %vm2601, %v2607, %v2609
      %v2611 = vrot.slane %v2587, 3
      %v2612 = vsel %vm2601, %v2609, %v2611
      %v2613 = vrot.slane %v2588, 3
      %v2614 = vsel %vm2601, %v2611, %v2613
      %v2615 = vrot.slane %v2589, 3
      %v2616 = vsel %vm2601, %v2613, %v2615
      %v2617 = vrot.slane %v2590, 3
      %v2618 = vsel %vm2601, %v2615, %v2617
      %v2619 = vrot.slane %v2591, 3
      %v2620 = vsel %vm2601, %v2617, %v2619
      %v2621 = vrot.slane %v2592, 3
      %v2622 = vsel %vm2601, %v2619, %v2621
      %v2623 = vrot.slane %v2593, 3
      %v2624 = vsel %vm2601, %v2621, %v2623
      %v2625 = vrot.slane %v2594, 3
      %v2626 = vsel %vm2601, %v2623, %v2625
      %v2627 = vrot.slane %v2595, 3
      %v2628 = vsel %vm2601, %v2625, %v2627
      %v2629 = vrot.slane %v2596, 3
      %v2630 = vsel %vm2601, %v2627, %v2629
      %v2631 = vrot.slane %v2597, 3
      %v2632 = vsel %vm2601, %v2629, %v2631
      %v2633 = vrot.slane %v2598, 3
      %v2634 = vsel %vm2601, %v2631, %v2633
      %v2635 = vrot.slane %v2599, 3
      %v2636 = vsel %vm2601, %v2633, %v2635
      %v2637 = vrot.slane %v2600, 3
      %v2638 = vsel %vm2601, %v2635, %v2637
      %2639 = vrot.lane.b32.xlu0 %v2604, 64
      %v2640 = vpop.permute.xlu0 %2639
      %2641 = vrot.lane.b32.xlu0 %v2606, 64
      %v2642 = vpop.permute.xlu0 %2641
      %2643 = vrot.lane.b32.xlu0 %v2608, 64
      %v2644 = vpop.permute.xlu0 %2643
      %2645 = vrot.lane.b32.xlu0 %v2610, 64
      %v2646 = vpop.permute.xlu0 %2645
      %2647 = vrot.lane.b32.xlu0 %v2612, 64
      %v2648 = vpop.permute.xlu0 %2647
      %2649 = vrot.lane.b32.xlu0 %v2614, 64
      %v2650 = vpop.permute.xlu0 %2649
      %2651 = vrot.lane.b32.xlu0 %v2616, 64
      %v2652 = vpop.permute.xlu0 %2651
      %2653 = vrot.lane.b32.xlu0 %v2618, 64
      %v2654 = vpop.permute.xlu0 %2653
      %2655 = vrot.lane.b32.xlu0 %v2620, 64
      %v2656 = vpop.permute.xlu0 %2655
      %2657 = vrot.lane.b32.xlu0 %v2622, 64
      %v2658 = vpop.permute.xlu0 %2657
      %2659 = vrot.lane.b32.xlu0 %v2624, 64
      %v2660 = vpop.permute.xlu0 %2659
      %2661 = vrot.lane.b32.xlu0 %v2626, 64
      %v2662 = vpop.permute.xlu0 %2661
      %2663 = vrot.lane.b32.xlu0 %v2628, 64
      %v2664 = vpop.permute.xlu0 %2663
      %2665 = vrot.lane.b32.xlu0 %v2630, 64
      %v2666 = vpop.permute.xlu0 %2665
      %2667 = vrot.lane.b32.xlu0 %v2632, 64
      %v2668 = vpop.permute.xlu0 %2667
      %2669 = vrot.lane.b32.xlu0 %v2634, 64
      %v2670 = vpop.permute.xlu0 %2669
      %2671 = vrot.lane.b32.xlu0 %v2636, 64
      %v2672 = vpop.permute.xlu0 %2671
      %2673 = vrot.lane.b32.xlu0 %v2638, 64
      %v2674 = vpop.permute.xlu0 %2673
      %vm2693 = vcmask 589312
      %2694 = vst.msk [vmem:[#allocation2] sm:$0xff] %vm2693, %v2640
      %2695 = vst.msk [vmem:[#allocation2 + $0x8] sm:$0xff] %vm2693, %v2642
      %2696 = vst.msk [vmem:[#allocation2 + $0x10] sm:$0xff] %vm2693, %v2644
      %2697 = vst.msk [vmem:[#allocation2 + $0x18] sm:$0xff] %vm2693, %v2646
      %2698 = vst.msk [vmem:[#allocation2 + $0x20] sm:$0xff] %vm2693, %v2648
      %2699 = vst.msk [vmem:[#allocation2 + $0x28] sm:$0xff] %vm2693, %v2650
      %2700 = vst.msk [vmem:[#allocation2 + $0x30] sm:$0xff] %vm2693, %v2652
      %2701 = vst.msk [vmem:[#allocation2 + $0x38] sm:$0xff] %vm2693, %v2654
      %2702 = vst.msk [vmem:[#allocation2 + $0x40] sm:$0xff] %vm2693, %v2656
      %2703 = vst.msk [vmem:[#allocation2 + $0x48] sm:$0xff] %vm2693, %v2658
      %2704 = vst.msk [vmem:[#allocation2 + $0x50] sm:$0xff] %vm2693, %v2660
      %2705 = vst.msk [vmem:[#allocation2 + $0x58] sm:$0xff] %vm2693, %v2662
      %2706 = vst.msk [vmem:[#allocation2 + $0x60] sm:$0xff] %vm2693, %v2664
      %2707 = vst.msk [vmem:[#allocation2 + $0x68] sm:$0xff] %vm2693, %v2666
      %2708 = vst.msk [vmem:[#allocation2 + $0x70] sm:$0xff] %vm2693, %v2668
      %2709 = vst.msk [vmem:[#allocation2 + $0x78] sm:$0xff] %vm2693, %v2670
      %2710 = vst.msk [vmem:[#allocation2 + $0x80] sm:$0xff] %vm2693, %v2672
      %2711 = vst.msk [vmem:[#allocation2 + $0x88] sm:$0xff] %vm2693, %v2674
      %v2712 = vld [vmem:[#allocation2] sm:$0xff]
      %v2713 = vld [vmem:[#allocation2 + $0x8] sm:$0xff]
      %v2714 = vld [vmem:[#allocation2 + $0x10] sm:$0xff]
      %v2715 = vld [vmem:[#allocation2 + $0x18] sm:$0xff]
      %v2716 = vld [vmem:[#allocation2 + $0x20] sm:$0xff]
      %v2717 = vld [vmem:[#allocation2 + $0x28] sm:$0xff]
      %v2718 = vld [vmem:[#allocation2 + $0x30] sm:$0xff]
      %v2719 = vld [vmem:[#allocation2 + $0x38] sm:$0xff]
      %v2720 = vld [vmem:[#allocation2 + $0x40] sm:$0xff]
      %v2721 = vld [vmem:[#allocation2 + $0x48] sm:$0xff]
      %v2722 = vld [vmem:[#allocation2 + $0x50] sm:$0xff]
      %v2723 = vld [vmem:[#allocation2 + $0x58] sm:$0xff]
      %v2724 = vld [vmem:[#allocation2 + $0x60] sm:$0xff]
      %v2725 = vld [vmem:[#allocation2 + $0x68] sm:$0xff]
      %v2726 = vld [vmem:[#allocation2 + $0x70] sm:$0xff]
      %v2727 = vld [vmem:[#allocation2 + $0x78] sm:$0xff]
      %v2728 = vld [vmem:[#allocation2 + $0x80] sm:$0xff]
      %v2729 = vld [vmem:[#allocation2 + $0x88] sm:$0xff]
      %v2730 = vld [vmem:[%s1] sm:$0xf]
      %v2731 = vld [vmem:[%s1 + $0x4] sm:$0xf]
      %v2732 = vld [vmem:[%s1 + $0x8] sm:$0xf]
      %v2733 = vld [vmem:[%s1 + $0xc] sm:$0xf]
      %v2734 = vld [vmem:[%s1 + $0x10] sm:$0xf]
      %v2735 = vld [vmem:[%s1 + $0x14] sm:$0xf]
      %v2736 = vld [vmem:[%s1 + $0x18] sm:$0xf]
      %v2737 = vld [vmem:[%s1 + $0x1c] sm:$0xf]
      %v2738 = vld [vmem:[%s1 + $0x20] sm:$0xf]
      %v2748 = vunpack.c.l.b16 %v2730
      %v2749 = vunpack.c.l.b16 %v2731
      %v2750 = vunpack.c.l.b16 %v2732
      %v2751 = vunpack.c.l.b16 %v2733
      %v2752 = vunpack.c.l.b16 %v2734
      %v2753 = vunpack.c.l.b16 %v2735
      %v2754 = vunpack.c.l.b16 %v2736
      %v2755 = vunpack.c.l.b16 %v2737
      %v2756 = vunpack.c.l.b16 %v2738
      %v2757 = vpack.c.b16 %v2749, %v2748
      %v2758 = vpack.c.b16 %v2751, %v2750
      %v2759 = vpack.c.b16 %v2753, %v2752
      %v2760 = vpack.c.b16 %v2755, %v2754
      %v2761 = vpack.c.b16 %v2756, %v2756
      %vm2766 = vcmask 588800
      %v2768 = vsel %vm2766, %v2712, 0
      %v2771 = vsel %vm2766, %v2713, 0
      %v2774 = vsel %vm2766, %v2714, 0
      %v2777 = vsel %vm2766, %v2715, 0
      %v2780 = vsel %vm2766, %v2716, 0
      %v2783 = vsel %vm2766, %v2717, 0
      %v2786 = vsel %vm2766, %v2718, 0
      %v2789 = vsel %vm2766, %v2719, 0
      %v2792 = vsel %vm2766, %v2720, 0
      %v2795 = vsel %vm2766, %v2721, 0
      %v2798 = vsel %vm2766, %v2722, 0
      %v2801 = vsel %vm2766, %v2723, 0
      %v2804 = vsel %vm2766, %v2724, 0
      %v2807 = vsel %vm2766, %v2725, 0
      %v2810 = vsel %vm2766, %v2726, 0
      %v2813 = vsel %vm2766, %v2727, 0
      %v2816 = vsel %vm2766, %v2728, 0
      %v2819 = vsel %vm2766, %v2729, 0
      %vm2821 = vcmask 1043456
      %v2823 = vsel %vm2821, %v2761, 0
      %2825 = vmatprep.subr.bf16.mxu0 0
      %2826 = vmatpush1.bf16.msra.mxu0 %v2757
      %2827 = vmatprep.subr.bf16.mxu0 0
      %2828 = vmatpush1.bf16.msra.mxu0 %v2758
      %2829 = vmatprep.subr.bf16.mxu0 0
      %2830 = vmatpush1.bf16.msra.mxu0 %v2759
      %2831 = vmatprep.subr.bf16.mxu0 0
      %2832 = vmatpush1.bf16.msra.mxu0 %v2760
      %2833 = vmatprep.subr.bf16.mxu0 0
      %2834 = vmatpush1.bf16.msra.mxu0 %v2823
      %2835 = vmatprep.subr.bf16.mxu0 0
      %2836 = vmatpush1.bf16.msra.mxu0 0
      %2837 = vmatprep.subr.bf16.mxu0 0
      %2838 = vmatpush1.bf16.msra.mxu0 0
      %2839 = vmatprep.subr.bf16.mxu0 0
      %2840 = vmatpush1.bf16.msra.mxu0 0
      %2841 = vmatprep.subr.bf16.mxu0 0
      %2842 = vmatpush1.bf16.msra.mxu0 0
      %2843 = vmatprep.subr.bf16.mxu0 0
      %2844 = vmatpush1.bf16.msra.mxu0 0
      %2845 = vmatprep.subr.bf16.mxu0 0
      %2846 = vmatpush1.bf16.msra.mxu0 0
      %2847 = vmatprep.subr.bf16.mxu0 0
      %2848 = vmatpush1.bf16.msra.mxu0 0
      %2849 = vmatprep.subr.bf16.mxu0 0
      %2850 = vmatpush1.bf16.msra.mxu0 0
      %2851 = vmatprep.subr.bf16.mxu0 0
      %2852 = vmatpush1.bf16.msra.mxu0 0
      %2853 = vmatprep.subr.bf16.mxu0 0
      %2854 = vmatpush1.bf16.msra.mxu0 0
      %2855 = vmatprep.subr.bf16.mxu0 0
      %2856 = vmatpush1.bf16.msra.mxu0 0
      %2857 = vmatprep.mubr.bf16.mxu0 0
      %2858 = vmatmul.mubr.bf16.gmra.mrb[0].mxu0 %v2768
      %v2859 = vpop.f32.mrb[0].mxu0
      %v2860 = vadd.f32 0.0, %v2859
      %v2861 = vpop.f32.mrb[0].mxu0
      %v2862 = vpop.f32.mrb[0].mxu0
      %v2863 = vadd.f32 0.0, %v2862
      %v2864 = vpop.f32.mrb[0].mxu0
      %2865 = vmatprep.mubr.bf16.mxu0 0
      %2866 = vmatmul.mubr.bf16.gmra.mrb[0].mxu0 %v2771
      %v2867 = vpop.f32.mrb[0].mxu0
      %v2868 = vadd.f32 0.0, %v2867
      %v2869 = vpop.f32.mrb[0].mxu0
      %v2870 = vpop.f32.mrb[0].mxu0
      %v2871 = vadd.f32 0.0, %v2870
      %v2872 = vpop.f32.mrb[0].mxu0
      %2873 = vmatprep.mubr.bf16.mxu0 0
      %2874 = vmatmul.mubr.bf16.gmra.mrb[0].mxu0 %v2774
      %v2875 = vpop.f32.mrb[0].mxu0
      %v2876 = vadd.f32 0.0, %v2875
      %v2877 = vpop.f32.mrb[0].mxu0
      %v2878 = vpop.f32.mrb[0].mxu0
      %v2879 = vadd.f32 0.0, %v2878
      %v2880 = vpop.f32.mrb[0].mxu0
      %2881 = vmatprep.mubr.bf16.mxu0 0
      %2882 = vmatmul.mubr.bf16.gmra.mrb[0].mxu0 %v2777
      %v2883 = vpop.f32.mrb[0].mxu0
      %v2884 = vadd.f32 0.0, %v2883
      %v2885 = vpop.f32.mrb[0].mxu0
      %v2886 = vpop.f32.mrb[0].mxu0
      %v2887 = vadd.f32 0.0, %v2886
      %v2888 = vpop.f32.mrb[0].mxu0
      %2889 = vmatprep.mubr.bf16.mxu0 0
      %2890 = vmatmul.mubr.bf16.gmra.mrb[0].mxu0 %v2780
      %v2891 = vpop.f32.mrb[0].mxu0
      %v2892 = vadd.f32 0.0, %v2891
      %v2893 = vpop.f32.mrb[0].mxu0
      %v2894 = vpop.f32.mrb[0].mxu0
      %v2895 = vadd.f32 0.0, %v2894
      %v2896 = vpop.f32.mrb[0].mxu0
      %2897 = vmatprep.mubr.bf16.mxu0 0
      %2898 = vmatmul.mubr.bf16.gmra.mrb[0].mxu0 %v2783
      %v2899 = vpop.f32.mrb[0].mxu0
      %v2900 = vadd.f32 0.0, %v2899
      %v2901 = vpop.f32.mrb[0].mxu0
      %v2902 = vpop.f32.mrb[0].mxu0
      %v2903 = vadd.f32 0.0, %v2902
      %v2904 = vpop.f32.mrb[0].mxu0
      %2905 = vmatprep.mubr.bf16.mxu0 0
      %2906 = vmatmul.mubr.bf16.gmra.mrb[0].mxu0 %v2786
      %v2907 = vpop.f32.mrb[0].mxu0
      %v2908 = vadd.f32 0.0, %v2907
      %v2909 = vpop.f32.mrb[0].mxu0
      %v2910 = vpop.f32.mrb[0].mxu0
      %v2911 = vadd.f32 0.0, %v2910
      %v2912 = vpop.f32.mrb[0].mxu0
      %2913 = vmatprep.mubr.bf16.mxu0 0
      %2914 = vmatmul.mubr.bf16.gmra.mrb[0].mxu0 %v2789
      %v2915 = vpop.f32.mrb[0].mxu0
      %v2916 = vadd.f32 0.0, %v2915
      %v2917 = vpop.f32.mrb[0].mxu0
      %v2918 = vpop.f32.mrb[0].mxu0
      %v2919 = vadd.f32 0.0, %v2918
      %v2920 = vpop.f32.mrb[0].mxu0
      %2921 = vmatprep.mubr.bf16.mxu0 0
      %2922 = vmatmul.mubr.bf16.gmra.mrb[0].mxu0 %v2792
      %v2923 = vpop.f32.mrb[0].mxu0
      %v2924 = vadd.f32 0.0, %v2923
      %v2925 = vpop.f32.mrb[0].mxu0
      %v2926 = vpop.f32.mrb[0].mxu0
      %v2927 = vadd.f32 0.0, %v2926
      %v2928 = vpop.f32.mrb[0].mxu0
      %2929 = vmatprep.mubr.bf16.mxu0 0
      %2930 = vmatmul.mubr.bf16.gmra.mrb[0].mxu0 %v2795
      %v2931 = vpop.f32.mrb[0].mxu0
      %v2932 = vadd.f32 0.0, %v2931
      %v2933 = vpop.f32.mrb[0].mxu0
      %v2934 = vpop.f32.mrb[0].mxu0
      %v2935 = vadd.f32 0.0, %v2934
      %v2936 = vpop.f32.mrb[0].mxu0
      %2937 = vmatprep.mubr.bf16.mxu0 0
      %2938 = vmatmul.mubr.bf16.gmra.mrb[0].mxu0 %v2798
      %v2939 = vpop.f32.mrb[0].mxu0
      %v2940 = vadd.f32 0.0, %v2939
      %v2941 = vpop.f32.mrb[0].mxu0
      %v2942 = vpop.f32.mrb[0].mxu0
      %v2943 = vadd.f32 0.0, %v2942
      %v2944 = vpop.f32.mrb[0].mxu0
      %2945 = vmatprep.mubr.bf16.mxu0 0
      %2946 = vmatmul.mubr.bf16.gmra.mrb[0].mxu0 %v2801
      %v2947 = vpop.f32.mrb[0].mxu0
      %v2948 = vadd.f32 0.0, %v2947
      %v2949 = vpop.f32.mrb[0].mxu0
      %v2950 = vpop.f32.mrb[0].mxu0
      %v2951 = vadd.f32 0.0, %v2950
      %v2952 = vpop.f32.mrb[0].mxu0
      %2953 = vmatprep.mubr.bf16.mxu0 0
      %2954 = vmatmul.mubr.bf16.gmra.mrb[0].mxu0 %v2804
      %v2955 = vpop.f32.mrb[0].mxu0
      %v2956 = vadd.f32 0.0, %v2955
      %v2957 = vpop.f32.mrb[0].mxu0
      %v2958 = vpop.f32.mrb[0].mxu0
      %v2959 = vadd.f32 0.0, %v2958
      %v2960 = vpop.f32.mrb[0].mxu0
      %2961 = vmatprep.mubr.bf16.mxu0 0
      %2962 = vmatmul.mubr.bf16.gmra.mrb[0].mxu0 %v2807
      %v2963 = vpop.f32.mrb[0].mxu0
      %v2964 = vadd.f32 0.0, %v2963
      %v2965 = vpop.f32.mrb[0].mxu0
      %v2966 = vpop.f32.mrb[0].mxu0
      %v2967 = vadd.f32 0.0, %v2966
      %v2968 = vpop.f32.mrb[0].mxu0
      %2969 = vmatprep.mubr.bf16.mxu0 0
      %2970 = vmatmul.mubr.bf16.gmra.mrb[0].mxu0 %v2810
      %v2971 = vpop.f32.mrb[0].mxu0
      %v2972 = vadd.f32 0.0, %v2971
      %v2973 = vpop.f32.mrb[0].mxu0
      %v2974 = vpop.f32.mrb[0].mxu0
      %v2975 = vadd.f32 0.0, %v2974
      %v2976 = vpop.f32.mrb[0].mxu0
      %2977 = vmatprep.mubr.bf16.mxu0 0
      %2978 = vmatmul.mubr.bf16.gmra.mrb[0].mxu0 %v2813
      %v2979 = vpop.f32.mrb[0].mxu0
      %v2980 = vadd.f32 0.0, %v2979
      %v2981 = vpop.f32.mrb[0].mxu0
      %v2982 = vpop.f32.mrb[0].mxu0
      %v2983 = vadd.f32 0.0, %v2982
      %v2984 = vpop.f32.mrb[0].mxu0
      %2985 = vmatprep.mubr.bf16.mxu0 0
      %2986 = vmatmul.mubr.bf16.gmra.mrb[0].mxu0 %v2816
      %v2987 = vpop.f32.mrb[0].mxu0
      %v2988 = vadd.f32 0.0, %v2987
      %v2989 = vpop.f32.mrb[0].mxu0
      %v2990 = vpop.f32.mrb[0].mxu0
      %v2991 = vadd.f32 0.0, %v2990
      %v2992 = vpop.f32.mrb[0].mxu0
      %2993 = vmatprep.mubr.bf16.mxu0 0
      %2994 = vmatmul.mubr.bf16.gmra.mrb[0].mxu0 %v2819
      %v2995 = vpop.f32.mrb[0].mxu0
      %v2996 = vadd.f32 0.0, %v2995
      %v2997 = vpop.f32.mrb[0].mxu0
      %v2998 = vpop.f32.mrb[0].mxu0
      %v2999 = vadd.f32 0.0, %v2998
      %v3000 = vpop.f32.mrb[0].mxu0
      %3001 = vdwg.mxu0
      %v3002 = vld [vmem:[%s2] sm:$0xff]
      %v3003 = vld [vmem:[%s2 + $0x8] sm:$0xff]
      %v3004 = vld [vmem:[%s2 + $0x10] sm:$0xff]
      %v3005 = vld [vmem:[%s2 + $0x18] sm:$0xff]
      %v3006 = vld [vmem:[%s2 + $0x20] sm:$0xff]
      %v3007 = vld [vmem:[%s2 + $0x28] sm:$0xff]
      %v3008 = vld [vmem:[%s2 + $0x30] sm:$0xff]
      %v3009 = vld [vmem:[%s2 + $0x38] sm:$0xff]
      %v3010 = vld [vmem:[%s2 + $0x40] sm:$0xff]
      %v3011 = vld [vmem:[%s2 + $0x48] sm:$0xff]
      %v3012 = vld [vmem:[%s2 + $0x50] sm:$0xff]
      %v3013 = vld [vmem:[%s2 + $0x58] sm:$0xff]
      %v3014 = vld [vmem:[%s2 + $0x60] sm:$0xff]
      %v3015 = vld [vmem:[%s2 + $0x68] sm:$0xff]
      %v3016 = vld [vmem:[%s2 + $0x70] sm:$0xff]
      %v3017 = vld [vmem:[%s2 + $0x78] sm:$0xff]
      %v3018 = vld [vmem:[%s2 + $0x80] sm:$0xff]
      %v3019 = vld [vmem:[%s2 + $0x88] sm:$0xff]
      %v3020 = vld [vmem:[%s2 + $0x90] sm:$0xff]
      %v3021 = vld [vmem:[%s2 + $0x98] sm:$0xff]
      %v3022 = vld [vmem:[%s2 + $0xa0] sm:$0xff]
      %v3023 = vld [vmem:[%s2 + $0xa8] sm:$0xff]
      %v3024 = vld [vmem:[%s2 + $0xb0] sm:$0xff]
      %v3025 = vld [vmem:[%s2 + $0xb8] sm:$0xff]
      %v3026 = vld [vmem:[%s2 + $0xc0] sm:$0xff]
      %v3027 = vld [vmem:[%s2 + $0xc8] sm:$0xff]
      %v3028 = vld [vmem:[%s2 + $0xd0] sm:$0xff]
      %v3029 = vld [vmem:[%s2 + $0xd8] sm:$0xff]
      %v3030 = vld [vmem:[%s2 + $0xe0] sm:$0xff]
      %v3031 = vld [vmem:[%s2 + $0xe8] sm:$0xff]
      %v3032 = vld [vmem:[%s2 + $0xf0] sm:$0xff]
      %v3033 = vld [vmem:[%s2 + $0xf8] sm:$0xff]
      %v3034 = vld [vmem:[%s2 + $0x100] sm:$0xff]
      %v3035 = vld [vmem:[%s2 + $0x108] sm:$0xff]
      %v3036 = vld [vmem:[%s2 + $0x110] sm:$0xff]
      %v3037 = vld [vmem:[%s2 + $0x118] sm:$0xff]
      %3039 = vset.pattern.permute.xlu0 0
      %3040 = vperm.xlu0 %3039, %v3002
      %v3041 = vpop.permute.xlu0 %3040
      %3044 = vset.pattern.permute.xlu0 0
      %3045 = vperm.xlu0 %3044, %v3003
      %v3046 = vpop.permute.xlu0 %3045
      %3049 = vset.pattern.permute.xlu0 0
      %3050 = vperm.xlu0 %3049, %v3004
      %v3051 = vpop.permute.xlu0 %3050
      %3054 = vset.pattern.permute.xlu0 0
      %3055 = vperm.xlu0 %3054, %v3005
      %v3056 = vpop.permute.xlu0 %3055
      %3059 = vset.pattern.permute.xlu0 0
      %3060 = vperm.xlu0 %3059, %v3006
      %v3061 = vpop.permute.xlu0 %3060
      %3064 = vset.pattern.permute.xlu0 0
      %3065 = vperm.xlu0 %3064, %v3007
      %v3066 = vpop.permute.xlu0 %3065
      %3069 = vset.pattern.permute.xlu0 0
      %3070 = vperm.xlu0 %3069, %v3008
      %v3071 = vpop.permute.xlu0 %3070
      %3074 = vset.pattern.permute.xlu0 0
      %3075 = vperm.xlu0 %3074, %v3009
      %v3076 = vpop.permute.xlu0 %3075
      %3079 = vset.pattern.permute.xlu0 0
      %3080 = vperm.xlu0 %3079, %v3010
      %v3081 = vpop.permute.xlu0 %3080
      %3084 = vset.pattern.permute.xlu0 0
      %3085 = vperm.xlu0 %3084, %v3011
      %v3086 = vpop.permute.xlu0 %3085
      %3089 = vset.pattern.permute.xlu0 0
      %3090 = vperm.xlu0 %3089, %v3012
      %v3091 = vpop.permute.xlu0 %3090
      %3094 = vset.pattern.permute.xlu0 0
      %3095 = vperm.xlu0 %3094, %v3013
      %v3096 = vpop.permute.xlu0 %3095
      %3099 = vset.pattern.permute.xlu0 0
      %3100 = vperm.xlu0 %3099, %v3014
      %v3101 = vpop.permute.xlu0 %3100
      %3104 = vset.pattern.permute.xlu0 0
      %3105 = vperm.xlu0 %3104, %v3015
      %v3106 = vpop.permute.xlu0 %3105
      %3109 = vset.pattern.permute.xlu0 0
      %3110 = vperm.xlu0 %3109, %v3016
      %v3111 = vpop.permute.xlu0 %3110
      %3114 = vset.pattern.permute.xlu0 0
      %3115 = vperm.xlu0 %3114, %v3017
      %v3116 = vpop.permute.xlu0 %3115
      %3119 = vset.pattern.permute.xlu0 0
      %3120 = vperm.xlu0 %3119, %v3018
      %v3121 = vpop.permute.xlu0 %3120
      %3124 = vset.pattern.permute.xlu0 0
      %3125 = vperm.xlu0 %3124, %v3019
      %v3126 = vpop.permute.xlu0 %3125
      %3129 = vset.pattern.permute.xlu0 0
      %3130 = vperm.xlu0 %3129, %v3020
      %v3131 = vpop.permute.xlu0 %3130
      %3134 = vset.pattern.permute.xlu0 0
      %3135 = vperm.xlu0 %3134, %v3021
      %v3136 = vpop.permute.xlu0 %3135
      %3139 = vset.pattern.permute.xlu0 0
      %3140 = vperm.xlu0 %3139, %v3022
      %v3141 = vpop.permute.xlu0 %3140
      %3144 = vset.pattern.permute.xlu0 0
      %3145 = vperm.xlu0 %3144, %v3023
      %v3146 = vpop.permute.xlu0 %3145
      %3149 = vset.pattern.permute.xlu0 0
      %3150 = vperm.xlu0 %3149, %v3024
      %v3151 = vpop.permute.xlu0 %3150
      %3154 = vset.pattern.permute.xlu0 0
      %3155 = vperm.xlu0 %3154, %v3025
      %v3156 = vpop.permute.xlu0 %3155
      %3159 = vset.pattern.permute.xlu0 0
      %3160 = vperm.xlu0 %3159, %v3026
      %v3161 = vpop.permute.xlu0 %3160
      %3164 = vset.pattern.permute.xlu0 0
      %3165 = vperm.xlu0 %3164, %v3027
      %v3166 = vpop.permute.xlu0 %3165
      %3169 = vset.pattern.permute.xlu0 0
      %3170 = vperm.xlu0 %3169, %v3028
      %v3171 = vpop.permute.xlu0 %3170
      %3174 = vset.pattern.permute.xlu0 0
      %3175 = vperm.xlu0 %3174, %v3029
      %v3176 = vpop.permute.xlu0 %3175
      %3179 = vset.pattern.permute.xlu0 0
      %3180 = vperm.xlu0 %3179, %v3030
      %v3181 = vpop.permute.xlu0 %3180
      %3184 = vset.pattern.permute.xlu0 0
      %3185 = vperm.xlu0 %3184, %v3031
      %v3186 = vpop.permute.xlu0 %3185
      %3189 = vset.pattern.permute.xlu0 0
      %3190 = vperm.xlu0 %3189, %v3032
      %v3191 = vpop.permute.xlu0 %3190
      %3194 = vset.pattern.permute.xlu0 0
      %3195 = vperm.xlu0 %3194, %v3033
      %v3196 = vpop.permute.xlu0 %3195
      %3199 = vset.pattern.permute.xlu0 0
      %3200 = vperm.xlu0 %3199, %v3034
      %v3201 = vpop.permute.xlu0 %3200
      %3204 = vset.pattern.permute.xlu0 0
      %3205 = vperm.xlu0 %3204, %v3035
      %v3206 = vpop.permute.xlu0 %3205
      %3209 = vset.pattern.permute.xlu0 0
      %3210 = vperm.xlu0 %3209, %v3036
      %v3211 = vpop.permute.xlu0 %3210
      %3214 = vset.pattern.permute.xlu0 0
      %3215 = vperm.xlu0 %3214, %v3037
      %v3216 = vpop.permute.xlu0 %3215
      %v3218 = vmul.f32 %v2860, %v3041
      %v3219 = vmul.f32 %v2863, %v3046
      %v3220 = vmul.f32 %v2868, %v3051
      %v3221 = vmul.f32 %v2871, %v3056
      %v3222 = vmul.f32 %v2876, %v3061
      %v3223 = vmul.f32 %v2879, %v3066
      %v3224 = vmul.f32 %v2884, %v3071
      %v3225 = vmul.f32 %v2887, %v3076
      %v3226 = vmul.f32 %v2892, %v3081
      %v3227 = vmul.f32 %v2895, %v3086
      %v3228 = vmul.f32 %v2900, %v3091
      %v3229 = vmul.f32 %v2903, %v3096
      %v3230 = vmul.f32 %v2908, %v3101
      %v3231 = vmul.f32 %v2911, %v3106
      %v3232 = vmul.f32 %v2916, %v3111
      %v3233 = vmul.f32 %v2919, %v3116
      %v3234 = vmul.f32 %v2924, %v3121
      %v3235 = vmul.f32 %v2927, %v3126
      %v3236 = vmul.f32 %v2932, %v3131
      %v3237 = vmul.f32 %v2935, %v3136
      %v3238 = vmul.f32 %v2940, %v3141
      %v3239 = vmul.f32 %v2943, %v3146
      %v3240 = vmul.f32 %v2948, %v3151
      %v3241 = vmul.f32 %v2951, %v3156
      %v3242 = vmul.f32 %v2956, %v3161
      %v3243 = vmul.f32 %v2959, %v3166
      %v3244 = vmul.f32 %v2964, %v3171
      %v3245 = vmul.f32 %v2967, %v3176
      %v3246 = vmul.f32 %v2972, %v3181
      %v3247 = vmul.f32 %v2975, %v3186
      %v3248 = vmul.f32 %v2980, %v3191
      %v3249 = vmul.f32 %v2983, %v3196
      %v3250 = vmul.f32 %v2988, %v3201
      %v3251 = vmul.f32 %v2991, %v3206
      %v3252 = vmul.f32 %v2996, %v3211
      %v3253 = vmul.f32 %v2999, %v3216
      %v3254 = vadd.f32 %v3218, %v3219
      %v3255 = vadd.f32 %v3254, %v3220
      %v3256 = vadd.f32 %v3255, %v3221
      %v3257 = vadd.f32 %v3256, %v3222
      %v3258 = vadd.f32 %v3257, %v3223
      %v3259 = vadd.f32 %v3258, %v3224
      %v3260 = vadd.f32 %v3259, %v3225
      %v3261 = vadd.f32 %v3260, %v3226
      %v3262 = vadd.f32 %v3261, %v3227
      %v3263 = vadd.f32 %v3262, %v3228
      %v3264 = vadd.f32 %v3263, %v3229
      %v3265 = vadd.f32 %v3264, %v3230
      %v3266 = vadd.f32 %v3265, %v3231
      %v3267 = vadd.f32 %v3266, %v3232
      %v3268 = vadd.f32 %v3267, %v3233
      %v3269 = vadd.f32 %v3268, %v3234
      %v3270 = vadd.f32 %v3269, %v3235
      %v3271 = vadd.f32 %v3270, %v3236
      %v3272 = vadd.f32 %v3271, %v3237
      %v3273 = vadd.f32 %v3272, %v3238
      %v3274 = vadd.f32 %v3273, %v3239
      %v3275 = vadd.f32 %v3274, %v3240
      %v3276 = vadd.f32 %v3275, %v3241
      %v3277 = vadd.f32 %v3276, %v3242
      %v3278 = vadd.f32 %v3277, %v3243
      %v3279 = vadd.f32 %v3278, %v3244
      %v3280 = vadd.f32 %v3279, %v3245
      %v3281 = vadd.f32 %v3280, %v3246
      %v3282 = vadd.f32 %v3281, %v3247
      %v3283 = vadd.f32 %v3282, %v3248
      %v3284 = vadd.f32 %v3283, %v3249
      %v3285 = vadd.f32 %v3284, %v3250
      %v3286 = vadd.f32 %v3285, %v3251
      %v3287 = vadd.f32 %v3286, %v3252
      %v3288 = vadd.f32 %v3287, %v3253
      %v3289 = vrot.slane %v3288, 4
      %v3290 = vadd.f32 %v3288, %v3289
      %v3291 = vrot.slane %v3290, 2
      %v3292 = vadd.f32 %v3290, %v3291
      %v3293 = vrot.slane %v3292, 1
      %v3294 = vadd.f32 %v3292, %v3293
      %3295 = vst [vmem:[%s241] sm:$0x1] %v3294
      %v3296 = vmul.f32 %v2860, %v3218
      %v3297 = vmul.f32 %v2863, %v3219
      %v3298 = vmul.f32 %v2868, %v3220
      %v3299 = vmul.f32 %v2871, %v3221
      %v3300 = vmul.f32 %v2876, %v3222
      %v3301 = vmul.f32 %v2879, %v3223
      %v3302 = vmul.f32 %v2884, %v3224
      %v3303 = vmul.f32 %v2887, %v3225
      %v3304 = vmul.f32 %v2892, %v3226
      %v3305 = vmul.f32 %v2895, %v3227
      %v3306 = vmul.f32 %v2900, %v3228
      %v3307 = vmul.f32 %v2903, %v3229
      %v3308 = vmul.f32 %v2908, %v3230
      %v3309 = vmul.f32 %v2911, %v3231
      %v3310 = vmul.f32 %v2916, %v3232
      %v3311 = vmul.f32 %v2919, %v3233
      %v3312 = vmul.f32 %v2924, %v3234
      %v3313 = vmul.f32 %v2927, %v3235
      %v3314 = vmul.f32 %v2932, %v3236
      %v3315 = vmul.f32 %v2935, %v3237
      %v3316 = vmul.f32 %v2940, %v3238
      %v3317 = vmul.f32 %v2943, %v3239
      %v3318 = vmul.f32 %v2948, %v3240
      %v3319 = vmul.f32 %v2951, %v3241
      %v3320 = vmul.f32 %v2956, %v3242
      %v3321 = vmul.f32 %v2959, %v3243
      %v3322 = vmul.f32 %v2964, %v3244
      %v3323 = vmul.f32 %v2967, %v3245
      %v3324 = vmul.f32 %v2972, %v3246
      %v3325 = vmul.f32 %v2975, %v3247
      %v3326 = vmul.f32 %v2980, %v3248
      %v3327 = vmul.f32 %v2983, %v3249
      %v3328 = vmul.f32 %v2988, %v3250
      %v3329 = vmul.f32 %v2991, %v3251
      %v3330 = vmul.f32 %v2996, %v3252
      %v3331 = vmul.f32 %v2999, %v3253
      %v3332 = vadd.f32 %v3296, %v3297
      %v3333 = vadd.f32 %v3332, %v3298
      %v3334 = vadd.f32 %v3333, %v3299
      %v3335 = vadd.f32 %v3334, %v3300
      %v3336 = vadd.f32 %v3335, %v3301
      %v3337 = vadd.f32 %v3336, %v3302
      %v3338 = vadd.f32 %v3337, %v3303
      %v3339 = vadd.f32 %v3338, %v3304
      %v3340 = vadd.f32 %v3339, %v3305
      %v3341 = vadd.f32 %v3340, %v3306
      %v3342 = vadd.f32 %v3341, %v3307
      %v3343 = vadd.f32 %v3342, %v3308
      %v3344 = vadd.f32 %v3343, %v3309
      %v3345 = vadd.f32 %v3344, %v3310
      %v3346 = vadd.f32 %v3345, %v3311
      %v3347 = vadd.f32 %v3346, %v3312
      %v3348 = vadd.f32 %v3347, %v3313
      %v3349 = vadd.f32 %v3348, %v3314
      %v3350 = vadd.f32 %v3349, %v3315
      %v3351 = vadd.f32 %v3350, %v3316
      %v3352 = vadd.f32 %v3351, %v3317
      %v3353 = vadd.f32 %v3352, %v3318
      %v3354 = vadd.f32 %v3353, %v3319
      %v3355 = vadd.f32 %v3354, %v3320
      %v3356 = vadd.f32 %v3355, %v3321
      %v3357 = vadd.f32 %v3356, %v3322
      %v3358 = vadd.f32 %v3357, %v3323
      %v3359 = vadd.f32 %v3358, %v3324
      %v3360 = vadd.f32 %v3359, %v3325
      %v3361 = vadd.f32 %v3360, %v3326
      %v3362 = vadd.f32 %v3361, %v3327
      %v3363 = vadd.f32 %v3362, %v3328
      %v3364 = vadd.f32 %v3363, %v3329
      %v3365 = vadd.f32 %v3364, %v3330
      %v3366 = vadd.f32 %v3365, %v3331
      %v3367 = vrot.slane %v3366, 4
      %v3368 = vadd.f32 %v3366, %v3367
      %v3369 = vrot.slane %v3368, 2
      %v3370 = vadd.f32 %v3368, %v3369
      %v3371 = vrot.slane %v3370, 1
      %v3372 = vadd.f32 %v3370, %v3371
      %3373 = vst [vmem:[%s244] sm:$0x1] %v3372
      %v3374 = vpack.c.bf16 %v2863, %v2860
      %v3375 = vpack.c.bf16 %v2871, %v2868
      %v3376 = vpack.c.bf16 %v2879, %v2876
      %v3377 = vpack.c.bf16 %v2887, %v2884
      %v3378 = vpack.c.bf16 %v2895, %v2892
      %v3379 = vpack.c.bf16 %v2903, %v2900
      %v3380 = vpack.c.bf16 %v2911, %v2908
      %v3381 = vpack.c.bf16 %v2919, %v2916
      %v3382 = vpack.c.bf16 %v2927, %v2924
      %v3383 = vpack.c.bf16 %v2935, %v2932
      %v3384 = vpack.c.bf16 %v2943, %v2940
      %v3385 = vpack.c.bf16 %v2951, %v2948
      %v3386 = vpack.c.bf16 %v2959, %v2956
      %v3387 = vpack.c.bf16 %v2967, %v2964
      %v3388 = vpack.c.bf16 %v2975, %v2972
      %v3389 = vpack.c.bf16 %v2983, %v2980
      %v3390 = vpack.c.bf16 %v2991, %v2988
      %v3391 = vpack.c.bf16 %v2999, %v2996
      %v3410 = vunpack.c.l.b16 %v3374
      %v3411 = vunpack.c.h.b16 %v3374
      %v3412 = vunpack.c.l.b16 %v3375
      %v3413 = vunpack.c.h.b16 %v3375
      %v3414 = vunpack.c.l.b16 %v3376
      %v3415 = vunpack.c.h.b16 %v3376
      %v3416 = vunpack.c.l.b16 %v3377
      %v3417 = vunpack.c.h.b16 %v3377
      %v3418 = vunpack.c.l.b16 %v3378
      %v3419 = vunpack.c.h.b16 %v3378
      %v3420 = vunpack.c.l.b16 %v3379
      %v3421 = vunpack.c.h.b16 %v3379
      %v3422 = vunpack.c.l.b16 %v3380
      %v3423 = vunpack.c.h.b16 %v3380
      %v3424 = vunpack.c.l.b16 %v3381
      %v3425 = vunpack.c.h.b16 %v3381
      %v3426 = vunpack.c.l.b16 %v3382
      %v3427 = vunpack.c.h.b16 %v3382
      %v3428 = vunpack.c.l.b16 %v3383
      %v3429 = vunpack.c.h.b16 %v3383
      %v3430 = vunpack.c.l.b16 %v3384
      %v3431 = vunpack.c.h.b16 %v3384
      %v3432 = vunpack.c.l.b16 %v3385
      %v3433 = vunpack.c.h.b16 %v3385
      %v3434 = vunpack.c.l.b16 %v3386
      %v3435 = vunpack.c.h.b16 %v3386
      %v3436 = vunpack.c.l.b16 %v3387
      %v3437 = vunpack.c.h.b16 %v3387
      %v3438 = vunpack.c.l.b16 %v3388
      %v3439 = vunpack.c.h.b16 %v3388
      %v3440 = vunpack.c.l.b16 %v3389
      %v3441 = vunpack.c.h.b16 %v3389
      %v3442 = vunpack.c.l.b16 %v3390
      %v3443 = vunpack.c.h.b16 %v3390
      %v3444 = vunpack.c.l.b16 %v3391
      %v3445 = vunpack.c.h.b16 %v3391
      %v3446 = vpack.c.b16 %v3410, %v3410
      %v3447 = vpack.c.b16 %v3411, %v3411
      %v3448 = vpack.c.b16 %v3412, %v3412
      %v3449 = vpack.c.b16 %v3413, %v3413
      %v3450 = vpack.c.b16 %v3414, %v3414
      %v3451 = vpack.c.b16 %v3415, %v3415
      %v3452 = vpack.c.b16 %v3416, %v3416
      %v3453 = vpack.c.b16 %v3417, %v3417
      %v3454 = vpack.c.b16 %v3418, %v3418
      %v3455 = vpack.c.b16 %v3419, %v3419
      %v3456 = vpack.c.b16 %v3420, %v3420
      %v3457 = vpack.c.b16 %v3421, %v3421
      %v3458 = vpack.c.b16 %v3422, %v3422
      %v3459 = vpack.c.b16 %v3423, %v3423
      %v3460 = vpack.c.b16 %v3424, %v3424
      %v3461 = vpack.c.b16 %v3425, %v3425
      %v3462 = vpack.c.b16 %v3426, %v3426
      %v3463 = vpack.c.b16 %v3427, %v3427
      %v3464 = vpack.c.b16 %v3428, %v3428
      %v3465 = vpack.c.b16 %v3429, %v3429
      %v3466 = vpack.c.b16 %v3430, %v3430
      %v3467 = vpack.c.b16 %v3431, %v3431
      %v3468 = vpack.c.b16 %v3432, %v3432
      %v3469 = vpack.c.b16 %v3433, %v3433
      %v3470 = vpack.c.b16 %v3434, %v3434
      %v3471 = vpack.c.b16 %v3435, %v3435
      %v3472 = vpack.c.b16 %v3436, %v3436
      %v3473 = vpack.c.b16 %v3437, %v3437
      %v3474 = vpack.c.b16 %v3438, %v3438
      %v3475 = vpack.c.b16 %v3439, %v3439
      %v3476 = vpack.c.b16 %v3440, %v3440
      %v3477 = vpack.c.b16 %v3441, %v3441
      %v3478 = vpack.c.b16 %v3442, %v3442
      %v3479 = vpack.c.b16 %v3443, %v3443
      %v3480 = vpack.c.b16 %v3444, %v3444
      %v3481 = vpack.c.b16 %v3445, %v3445
      %vm3518 = vcmask 60416
      %3519 = vst.msk [vmem:[%s237] sm:$0xf] %vm3518, %v3446
      %3520 = vst.msk [vmem:[%s237 + $0x4] sm:$0xf] %vm3518, %v3447
      %3521 = vst.msk [vmem:[%s237 + $0x8] sm:$0xf] %vm3518, %v3448
      %3522 = vst.msk [vmem:[%s237 + $0xc] sm:$0xf] %vm3518, %v3449
      %3523 = vst.msk [vmem:[%s237 + $0x10] sm:$0xf] %vm3518, %v3450
      %3524 = vst.msk [vmem:[%s237 + $0x14] sm:$0xf] %vm3518, %v3451
      %3525 = vst.msk [vmem:[%s237 + $0x18] sm:$0xf] %vm3518, %v3452
      %3526 = vst.msk [vmem:[%s237 + $0x1c] sm:$0xf] %vm3518, %v3453
      %3527 = vst.msk [vmem:[%s237 + $0x20] sm:$0xf] %vm3518, %v3454
      %3528 = vst.msk [vmem:[%s237 + $0x24] sm:$0xf] %vm3518, %v3455
      %3529 = vst.msk [vmem:[%s237 + $0x28] sm:$0xf] %vm3518, %v3456
      %3530 = vst.msk [vmem:[%s237 + $0x2c] sm:$0xf] %vm3518, %v3457
      %3531 = vst.msk [vmem:[%s237 + $0x30] sm:$0xf] %vm3518, %v3458
      %3532 = vst.msk [vmem:[%s237 + $0x34] sm:$0xf] %vm3518, %v3459
      %3533 = vst.msk [vmem:[%s237 + $0x38] sm:$0xf] %vm3518, %v3460
      %3534 = vst.msk [vmem:[%s237 + $0x3c] sm:$0xf] %vm3518, %v3461
      %3535 = vst.msk [vmem:[%s237 + $0x40] sm:$0xf] %vm3518, %v3462
      %3536 = vst.msk [vmem:[%s237 + $0x44] sm:$0xf] %vm3518, %v3463
      %3537 = vst.msk [vmem:[%s237 + $0x48] sm:$0xf] %vm3518, %v3464
      %3538 = vst.msk [vmem:[%s237 + $0x4c] sm:$0xf] %vm3518, %v3465
      %3539 = vst.msk [vmem:[%s237 + $0x50] sm:$0xf] %vm3518, %v3466
      %3540 = vst.msk [vmem:[%s237 + $0x54] sm:$0xf] %vm3518, %v3467
      %3541 = vst.msk [vmem:[%s237 + $0x58] sm:$0xf] %vm3518, %v3468
      %3542 = vst.msk [vmem:[%s237 + $0x5c] sm:$0xf] %vm3518, %v3469
      %3543 = vst.msk [vmem:[%s237 + $0x60] sm:$0xf] %vm3518, %v3470
      %3544 = vst.msk [vmem:[%s237 + $0x64] sm:$0xf] %vm3518, %v3471
      %3545 = vst.msk [vmem:[%s237 + $0x68] sm:$0xf] %vm3518, %v3472
      %3546 = vst.msk [vmem:[%s237 + $0x6c] sm:$0xf] %vm3518, %v3473
      %3547 = vst.msk [vmem:[%s237 + $0x70] sm:$0xf] %vm3518, %v3474
      %3548 = vst.msk [vmem:[%s237 + $0x74] sm:$0xf] %vm3518, %v3475
      %3549 = vst.msk [vmem:[%s237 + $0x78] sm:$0xf] %vm3518, %v3476
      %3550 = vst.msk [vmem:[%s237 + $0x7c] sm:$0xf] %vm3518, %v3477
      %3551 = vst.msk [vmem:[%s237 + $0x80] sm:$0xf] %vm3518, %v3478
      %3552 = vst.msk [vmem:[%s237 + $0x84] sm:$0xf] %vm3518, %v3479
      %3553 = vst.msk [vmem:[%s237 + $0x88] sm:$0xf] %vm3518, %v3480
      %3554 = vst.msk [vmem:[%s237 + $0x8c] sm:$0xf] %vm3518, %v3481
      %s3555 = smul.u32 36, %s17
      %p3556 = scmp.lt.s32.totalorder %s3555, 71
      %s3557 = scalar_select %p3556, %s3555, 71
      %s3558 = smul.addr %s3557, 4
      %s3559 = scalar_lea.vmem %s3, %s3558
      %p3560 = scmp.lt.s32.totalorder %s17, 1
      %s3561 = scalar_select %p3560, %s17, 1
      %s3562 = scalar_lea.vmem %s4, %s3561
      %p3563 = scmp.lt.s32.totalorder %s17, 1
      %s3564 = scalar_select %p3563, %s17, 1
      %s3565 = scalar_lea.vmem %s5, %s3564
      // Predicated region
      $region33: #{conv_block_forward.1} parent=31 // pred_check
        %p3566 = pneg %p103
      $region34: #{conv_block_forward.1} parent=31 // pred_check_branch
        %3568 = sbr.rel (%p3566) target = $region36
      $region35: #{conv_block_forward.1} parent=31 // pred_region
        %s3569 = smul.u32 36, %s17
      $region36: #{conv_block_forward.1} parent=31 // pred_fallthru
        _
      // Predicated region
      $region37: #{conv_block_forward.1} parent=31 // pred_check
        %p3570 = pneg %p129
      $region38: #{conv_block_forward.1} parent=31 // pred_check_branch
        %3572 = sbr.rel (%p3570) target = $region40
      $region39: #{conv_block_forward.1} parent=31 // pred_region
        _
      $region40: #{conv_block_forward.1} parent=31 // pred_fallthru
        _
      // Predicated region
      $region41: #{conv_block_forward.1} parent=31 // pred_check
        %p3573 = pneg %p155
      $region42: #{conv_block_forward.1} parent=31 // pred_check_branch
        %3575 = sbr.rel (%p3573) target = $region44
      $region43: #{conv_block_forward.1} parent=31 // pred_region
        _
      $region44: #{conv_block_forward.1} parent=31 // pred_fallthru
        _
    $region32: #{conv_block_forward.1} parent=5 // pred_fallthru
      _
    %p3576 = scmp.le.s32.totalorder 2, %s12
    // Predicated region
    $region45: #{conv_block_forward.1} parent=5 // pred_check
      %p3577 = pneg %p3576
    $region46: #{conv_block_forward.1} parent=5 // pred_check_branch
      %3579 = sbr.rel (%p3577) target = $region48
    $region47: #{conv_block_forward.1} parent=5 // pred_region
      %s3580 = ssub.s32 %s12, 2
      // Predicated region
      $region49: #{conv_block_forward.1} parent=47 // pred_check
        %p3581 = pneg %p109
      $region50: #{conv_block_forward.1} parent=47 // pred_check_branch
        %3583 = sbr.rel (%p3581) target = $region52
      $region51: #{conv_block_forward.1} parent=47 // pred_region
        %s3584 = smul.u32 36, %s18
        %p3585 = scmp.lt.s32.totalorder %s3584, 71
        %s3586 = scalar_select %p3585, %s3584, 71
        %s3587 = smul.addr %s3586, 4
        %s3588 = scalar_lea.vmem %s3, %s3587
      $region52: #{conv_block_forward.1} parent=47 // pred_fallthru
        _
      // Predicated region
      $region53: #{conv_block_forward.1} parent=47 // pred_check
        %p3589 = pneg %p135
      $region54: #{conv_block_forward.1} parent=47 // pred_check_branch
        %3591 = sbr.rel (%p3589) target = $region56
      $region55: #{conv_block_forward.1} parent=47 // pred_region
        %p3592 = scmp.lt.s32.totalorder %s18, 1
        %s3593 = scalar_select %p3592, %s18, 1
        %s3594 = scalar_lea.vmem %s4, %s3593
      $region56: #{conv_block_forward.1} parent=47 // pred_fallthru
        _
      // Predicated region
      $region57: #{conv_block_forward.1} parent=47 // pred_check
        %p3595 = pneg %p161
      $region58: #{conv_block_forward.1} parent=47 // pred_check_branch
        %3597 = sbr.rel (%p3595) target = $region60
      $region59: #{conv_block_forward.1} parent=47 // pred_region
        %p3598 = scmp.lt.s32.totalorder %s18, 1
        %s3599 = scalar_select %p3598, %s18, 1
        %s3600 = scalar_lea.vmem %s5, %s3599
      $region60: #{conv_block_forward.1} parent=47 // pred_fallthru
        _
    $region48: #{conv_block_forward.1} parent=5 // pred_fallthru
      _
  $region6: #{conv_block_forward.1} parent=0 // loop_footer
    %s16 = sadd.s32 1, %s12
  $region7: #{conv_block_forward.1} parent=0 // loop_footer_branch
    %11 = sbr.rel target = $region3
  $region8: #{conv_block_forward.1} parent=0 // loop_exit
    _

</llo_original>
